<compile_context>
chip_gen: v7x
topology: tpu7x:2x2x1
jax: 0.10.0
libtpu: 0.0.40
codegen_flags: <defaults>
</compile_context>

<pallas_src>
import functools
import math

import jax
import jax.numpy as jnp
from jax.experimental import pallas as pl
from jax.experimental.pallas import tpu as pltpu  # noqa: F401  (TPU backend)

# ---------------- config (small DistilBERT-like) ----------------
VOCAB = 100
MAX_POS = 16
HIDDEN = 64          # model.config.hidden_size (scaled down from 768)
N_HEADS = 2
HEAD_DIM = HIDDEN // N_HEADS
FFN = 128
N_LAYERS = 2
N_CLASSES = 4        # output_size = len(set(labels)) (synthetic)
C_PAD = 128          # lane-dense padded logits width
LN_EPS = 1e-12
GELU_C = 0.7978845608028654  # sqrt(2/pi)
NEG_INF = -1e30


# ---------------- in-kernel helpers (operate on values) ----------------
def _layernorm(x, g, b):
    mu = jnp.mean(x, axis=-1, keepdims=True)
    xc = x - mu
    var = jnp.mean(xc * xc, axis=-1, keepdims=True)
    return xc * jax.lax.rsqrt(var + LN_EPS) * g + b


def _gelu(x):
    # TODO(synk): PyTorch/DistilBERT uses exact erf GELU; tanh approximation here.
    return 0.5 * x * (1.0 + jnp.tanh(GELU_C * (x + 0.044715 * x * x * x)))


# ---------------- the single fused Pallas kernel ----------------
def _fused_model_kernel(
    h_ref, bias_ref, pool_ref,
    emb_g_ref, emb_b_ref,
    wq_ref, bq_ref, wk_ref, bk_ref, wv_ref, bv_ref,
    wo_ref, bo_ref,
    ln1_g_ref, ln1_b_ref,
    w1_ref, b1_ref, w2_ref, b2_ref,
    ln2_g_ref, ln2_b_ref,
    fc_w_ref, fc_b_ref,
    out_ref,
    *, batch, seq,
):
    scale = 1.0 / math.sqrt(HEAD_DIM)

    # embedding LayerNorm
    h = _layernorm(h_ref[...], emb_g_ref[...], emb_b_ref[...])   # (B*S, H)
    bias = bias_ref[...]                                         # (B*S, S) additive mask bias

    for l in range(N_LAYERS):
        # ---- multi-head self-attention: all (batch, head) tiles, no grid ----
        attn_rows = []
        for b in range(batch):
            r0 = b * seq
            h_b = h[r0:r0 + seq, :]                # (S, H)   sublane-aligned slice
            bias_b = bias[r0:r0 + seq, :]          # (S, S)   per-batch additive bias
            out_b = None
            for hd in range(N_HEADS):
                idx = l * N_HEADS + hd
                q = jnp.dot(h_b, wq_ref[idx], preferred_element_type=jnp.float32) + bq_ref[idx]
                k = jnp.dot(h_b, wk_ref[idx], preferred_element_type=jnp.float32) + bk_ref[idx]
                v = jnp.dot(h_b, wv_ref[idx], preferred_element_type=jnp.float32) + bv_ref[idx]
                s = jnp.dot(q, k.T, preferred_element_type=jnp.float32) * scale + bias_b
                s = s - jnp.max(s, axis=-1, keepdims=True)
                p = jnp.exp(s)
                p = p * pl.reciprocal(jnp.sum(p, axis=-1, keepdims=True), approx=True)
                ctx = jnp.dot(p, v, preferred_element_type=jnp.float32)               # (S, dh)
                proj = jnp.dot(ctx, wo_ref[idx], preferred_element_type=jnp.float32)  # (S, H)
                out_b = proj if out_b is None else out_b + proj
            attn_rows.append(out_b)
        attn = jnp.concatenate(attn_rows, axis=0) + bo_ref[l]                 # (B*S, H)
        h = _layernorm(h + attn, ln1_g_ref[l], ln1_b_ref[l])

        # ---- FFN: matmul + GELU + matmul fused in the same kernel ----
        ff = jnp.dot(h, w1_ref[l], preferred_element_type=jnp.float32) + b1_ref[l]
        ff = _gelu(ff)
        ff = jnp.dot(ff, w2_ref[l], preferred_element_type=jnp.float32) + b2_ref[l]
        h = _layernorm(h + ff, ln2_g_ref[l], ln2_b_ref[l])

    # ---- mean pool over seq (all positions, = last_hidden_state.mean(dim=1)) + fc head
    pooled = jnp.dot(pool_ref[...], h, preferred_element_type=jnp.float32)          # (B, H)
    logits = jnp.dot(pooled, fc_w_ref[...], preferred_element_type=jnp.float32) + fc_b_ref[...]
    out_ref[...] = logits.astype(out_ref.dtype)                                     # (B, C_PAD)


# ---------------- weight packing (plain JAX, weight-only, done once) ----------------
def pack_params(params):
    L = len(params["layers"])

    def stack(name):
        return jnp.stack([lyr[name] for lyr in params["layers"]])

    def split_out(w):    # (L, H, H) -> (L*NH, H, DH): per-head split of the output dim
        return (w.reshape(L, HIDDEN, N_HEADS, HEAD_DIM)
                 .transpose(0, 2, 1, 3)
                 .reshape(L * N_HEADS, HIDDEN, HEAD_DIM))

    def split_out_b(b):  # (L, H) -> (L*NH, 1, DH)
        return b.reshape(L * N_HEADS, HEAD_DIM)[:, None, :]

    def split_in(w):     # (L, H, H) -> (L*NH, DH, H): per-head split of the input dim
        return w.reshape(L * N_HEADS, HEAD_DIM, HIDDEN)

    def rows(b):         # (L, D) -> (L, 1, D)
        return b[:, None, :]

    emb_g = params["emb_ln_g"].reshape(1, HIDDEN)
    emb_b = params["emb_ln_b"].reshape(1, HIDDEN)

    wq, bq = split_out(stack("wq")), split_out_b(stack("bq"))
    wk, bk = split_out(stack("wk")), split_out_b(stack("bk"))
    wv, bv = split_out(stack("wv")), split_out_b(stack("bv"))
    wo, bo = split_in(stack("wo")), rows(stack("bo"))
    ln1_g, ln1_b = rows(stack("ln1_g")), rows(stack("ln1_b"))
    w1, b1 = stack("w1"), rows(stack("b1"))
    w2, b2 = stack("w2"), rows(stack("b2"))
    ln2_g, ln2_b = rows(stack("ln2_g")), rows(stack("ln2_b"))

    # lane-dense (zero-padded) classifier head
    fc_w = jnp.zeros((HIDDEN, C_PAD), jnp.float32).at[:, :N_CLASSES].set(params["fc_w"])
    fc_b = jnp.zeros((1, C_PAD), jnp.float32).at[0, :N_CLASSES].set(params["fc_b"])

    return (emb_g, emb_b, wq, bq, wk, bk, wv, bv, wo, bo,
            ln1_g, ln1_b, w1, b1, w2, b2, ln2_g, ln2_b, fc_w, fc_b)


# ---------------- model wrapper (embedding gather + one pallas_call) ----------------
def intent_classifier(params, input_ids, attention_mask):
    """logits = fc(mean_{seq}(DistilBERT(input_ids, attention_mask)))."""
    B, S = input_ids.shape

    # embedding gather + positional add: plain-JAX glue
    we = params["word_emb"][input_ids]                 # (B, S, H)
    pe = params["pos_emb"][:S]                         # (S, H)
    h0 = (we + pe[None, :, :]).reshape(B * S, HIDDEN).astype(jnp.float32)

    # additive attention-mask bias, pre-broadcast to query rows: (B*S, S)
    bias = (1.0 - attention_mask.astype(jnp.float32)) * NEG_INF     # (B, S)
    bias_full = jnp.repeat(bias, S, axis=0)                         # row b*S+i -> bias[b]

    # mean-pool matrix (over ALL positions, matching .mean(dim=1)): (B, B*S)
    pool_mat = jnp.repeat(jnp.eye(B, dtype=jnp.float32), S, axis=1) / S

    packed = pack_params(params)

    flops = N_LAYERS * (
        2 * B * S * HIDDEN * (3 * HIDDEN)            # Q/K/V projections
        + 2 * B * N_HEADS * S * S * HEAD_DIM * 2     # QK^T and PV
        + 2 * B * S * HIDDEN * HIDDEN                # output projection
        + 2 * B * S * HIDDEN * FFN * 2               # FFN
    ) + 2 * B * (B * S) * HIDDEN + 2 * B * HIDDEN * C_PAD
    transcendentals = N_LAYERS * (B * N_HEADS * S * S + B * S * FFN)
    bytes_accessed = 4 * (h0.size + bias_full.size + pool_mat.size
                          + sum(int(a.size) for a in packed) + B * C_PAD)

    kernel = functools.partial(_fused_model_kernel, batch=B, seq=S)
    logits_padded = pl.pallas_call(
        kernel,
        out_shape=jax.ShapeDtypeStruct((B, C_PAD), jnp.float32),
        cost_estimate=pl.CostEstimate(
            flops=flops,
            transcendentals=transcendentals,
            bytes_accessed=bytes_accessed,
        ),
    )(h0, bias_full, pool_mat, *packed)

    return logits_padded[:, :N_CLASSES]


# ---------------- deterministic parameter init ----------------
def init_params(key):
    keys = iter(jax.random.split(key, 4 + N_LAYERS * 6 + 2))

    def dense(fan_in, fan_out):
        return 0.02 * jax.random.normal(next(keys), (fan_in, fan_out), jnp.float32)

    params = {
        "word_emb": 0.02 * jax.random.normal(next(keys), (VOCAB, HIDDEN), jnp.float32),
        "pos_emb": 0.02 * jax.random.normal(next(keys), (MAX_POS, HIDDEN), jnp.float32),
        "emb_ln_g": jnp.ones((HIDDEN,), jnp.float32),
        "emb_ln_b": jnp.zeros((HIDDEN,), jnp.float32),
        "layers": [],
    }
    for _ in range(N_LAYERS):
        params["layers"].append({
            "wq": dense(HIDDEN, HIDDEN), "bq": jnp.zeros((HIDDEN,), jnp.float32),
            "wk": dense(HIDDEN, HIDDEN), "bk": jnp.zeros((HIDDEN,), jnp.float32),
            "wv": dense(HIDDEN, HIDDEN), "bv": jnp.zeros((HIDDEN,), jnp.float32),
            "wo": dense(HIDDEN, HIDDEN), "bo": jnp.zeros((HIDDEN,), jnp.float32),
            "ln1_g": jnp.ones((HIDDEN,), jnp.float32),
            "ln1_b": jnp.zeros((HIDDEN,), jnp.float32),
            "w1": dense(HIDDEN, FFN), "b1": jnp.zeros((FFN,), jnp.float32),
            "w2": dense(FFN, HIDDEN), "b2": jnp.zeros((HIDDEN,), jnp.float32),
            "ln2_g": jnp.ones((HIDDEN,), jnp.float32),
            "ln2_b": jnp.zeros((HIDDEN,), jnp.float32),
        })
    # nn.Linear(input_size, output_size): stored here already transposed (in, out)
    params["fc_w"] = dense(HIDDEN, N_CLASSES)
    params["fc_b"] = jnp.zeros((N_CLASSES,), jnp.float32)
    return params


if __name__ == "__main__":
    key = jax.random.PRNGKey(0)
    pkey, ikey = jax.random.split(key)
    params = init_params(pkey)

    B, S = 2, 8
    input_ids = jax.random.randint(ikey, (B, S), 0, VOCAB, dtype=jnp.int32)
    attention_mask = jnp.ones((B, S), jnp.int32).at[1, 6:].set(0)  # pad tail of seq 1

    logits = jax.jit(intent_classifier)(params, input_ids, attention_mask)
    logits = jax.block_until_ready(logits)
    assert logits.shape == (B, N_CLASSES)
    assert bool(jnp.all(jnp.isfinite(logits)))
    print("KERNEL_OK")
</pallas_src>

<mosaic_0001>
module attributes {stable_mosaic.version = 11 : i64} {
  func.func @_fused_model_kernel(%arg0: memref<16x64xf32, #tpu.memory_space<vmem>>, %arg1: memref<16x8xf32, #tpu.memory_space<vmem>>, %arg2: memref<2x16xf32, #tpu.memory_space<vmem>>, %arg3: memref<1x64xf32, #tpu.memory_space<vmem>>, %arg4: memref<1x64xf32, #tpu.memory_space<vmem>>, %arg5: memref<4x64x32xf32, #tpu.memory_space<vmem>>, %arg6: memref<4x1x32xf32, #tpu.memory_space<vmem>>, %arg7: memref<4x64x32xf32, #tpu.memory_space<vmem>>, %arg8: memref<4x1x32xf32, #tpu.memory_space<vmem>>, %arg9: memref<4x64x32xf32, #tpu.memory_space<vmem>>, %arg10: memref<4x1x32xf32, #tpu.memory_space<vmem>>, %arg11: memref<4x32x64xf32, #tpu.memory_space<vmem>>, %arg12: memref<2x1x64xf32, #tpu.memory_space<vmem>>, %arg13: memref<2x1x64xf32, #tpu.memory_space<vmem>>, %arg14: memref<2x1x64xf32, #tpu.memory_space<vmem>>, %arg15: memref<2x64x128xf32, #tpu.memory_space<vmem>>, %arg16: memref<2x1x128xf32, #tpu.memory_space<vmem>>, %arg17: memref<2x128x64xf32, #tpu.memory_space<vmem>>, %arg18: memref<2x1x64xf32, #tpu.memory_space<vmem>>, %arg19: memref<2x1x64xf32, #tpu.memory_space<vmem>>, %arg20: memref<2x1x64xf32, #tpu.memory_space<vmem>>, %arg21: memref<64x128xf32, #tpu.memory_space<vmem>>, %arg22: memref<1x128xf32, #tpu.memory_space<vmem>>, %arg23: memref<2x128xf32, #tpu.memory_space<vmem>>) attributes {dimension_semantics = [], scalar_prefetch = 0 : i64, scratch_operands = 0 : i64, tpu.core_type = #tpu.core_type<tc>} {
    %c0 = arith.constant 0 : index
    %c0_0 = arith.constant 0 : index
    %0 = vector.load %arg0[%c0, %c0_0] : memref<16x64xf32, #tpu.memory_space<vmem>>, vector<16x64xf32>
    %c0_1 = arith.constant 0 : index
    %c0_2 = arith.constant 0 : index
    %1 = vector.load %arg3[%c0_1, %c0_2] : memref<1x64xf32, #tpu.memory_space<vmem>>, vector<1x64xf32>
    %c0_3 = arith.constant 0 : index
    %c0_4 = arith.constant 0 : index
    %2 = vector.load %arg4[%c0_3, %c0_4] : memref<1x64xf32, #tpu.memory_space<vmem>>, vector<1x64xf32>
    %cst = arith.constant dense<0.000000e+00> : vector<16xf32>
    %3 = vector.multi_reduction <add>, %0, %cst [1] : vector<16x64xf32> to vector<16xf32>
    %4 = vector.shape_cast %3 : vector<16xf32> to vector<16x1xf32>
    %cst_5 = arith.constant 6.400000e+01 : f32
    %5 = vector.broadcast %cst_5 : f32 to vector<16x1xf32>
    %6 = arith.divf %4, %5 : vector<16x1xf32>
    %7 = vector.broadcast %6 : vector<16x1xf32> to vector<16x64xf32>
    %8 = arith.subf %0, %7 : vector<16x64xf32>
    %9 = arith.mulf %8, %8 : vector<16x64xf32>
    %cst_6 = arith.constant dense<0.000000e+00> : vector<16xf32>
    %10 = vector.multi_reduction <add>, %9, %cst_6 [1] : vector<16x64xf32> to vector<16xf32>
    %11 = vector.shape_cast %10 : vector<16xf32> to vector<16x1xf32>
    %cst_7 = arith.constant 6.400000e+01 : f32
    %12 = vector.broadcast %cst_7 : f32 to vector<16x1xf32>
    %13 = arith.divf %11, %12 : vector<16x1xf32>
    %cst_8 = arith.constant 9.99999996E-13 : f32
    %14 = vector.broadcast %cst_8 : f32 to vector<16x1xf32>
    %15 = arith.addf %13, %14 : vector<16x1xf32>
    %16 = math.rsqrt %15 : vector<16x1xf32>
    %17 = vector.broadcast %16 : vector<16x1xf32> to vector<16x64xf32>
    %18 = arith.mulf %8, %17 : vector<16x64xf32>
    %19 = vector.broadcast %1 : vector<1x64xf32> to vector<16x64xf32>
    %20 = arith.mulf %18, %19 : vector<16x64xf32>
    %21 = vector.broadcast %2 : vector<1x64xf32> to vector<16x64xf32>
    %22 = arith.addf %20, %21 : vector<16x64xf32>
    %c0_9 = arith.constant 0 : index
    %c0_10 = arith.constant 0 : index
    %23 = vector.load %arg1[%c0_9, %c0_10] : memref<16x8xf32, #tpu.memory_space<vmem>>, vector<16x8xf32>
    %24 = vector.extract_strided_slice %22 {offsets = [0, 0], sizes = [8, 64], strides = [1, 1]} : vector<16x64xf32> to vector<8x64xf32>
    %25 = vector.extract_strided_slice %23 {offsets = [0, 0], sizes = [8, 8], strides = [1, 1]} : vector<16x8xf32> to vector<8x8xf32>
    %c0_11 = arith.constant 0 : index
    %c0_12 = arith.constant 0 : index
    %c0_13 = arith.constant 0 : index
    %26 = vector.load %arg5[%c0_11, %c0_12, %c0_13] : memref<4x64x32xf32, #tpu.memory_space<vmem>>, vector<1x64x32xf32>
    %27 = vector.shape_cast %26 : vector<1x64x32xf32> to vector<64x32xf32>
    %cst_14 = arith.constant dense<0.000000e+00> : vector<8x32xf32>
    %28 = tpu.matmul %24, %27, %cst_14 {dimension_numbers = #tpu.dot_dimension_numbers<[1], [0], [0], [1], [0, 0, 1, 1], [], []>} : vector<8x64xf32>, vector<64x32xf32>, vector<8x32xf32> -> vector<8x32xf32>
    %c0_15 = arith.constant 0 : index
    %c0_16 = arith.constant 0 : index
    %c0_17 = arith.constant 0 : index
    %29 = vector.load %arg6[%c0_15, %c0_16, %c0_17] : memref<4x1x32xf32, #tpu.memory_space<vmem>>, vector<1x1x32xf32>
    %30 = vector.shape_cast %29 : vector<1x1x32xf32> to vector<1x32xf32>
    %31 = vector.broadcast %30 : vector<1x32xf32> to vector<8x32xf32>
    %32 = arith.addf %28, %31 : vector<8x32xf32>
    %c0_18 = arith.constant 0 : index
    %c0_19 = arith.constant 0 : index
    %c0_20 = arith.constant 0 : index
    %33 = vector.load %arg7[%c0_18, %c0_19, %c0_20] : memref<4x64x32xf32, #tpu.memory_space<vmem>>, vector<1x64x32xf32>
    %34 = vector.shape_cast %33 : vector<1x64x32xf32> to vector<64x32xf32>
    %cst_21 = arith.constant dense<0.000000e+00> : vector<8x32xf32>
    %35 = tpu.matmul %24, %34, %cst_21 {dimension_numbers = #tpu.dot_dimension_numbers<[1], [0], [0], [1], [0, 0, 1, 1], [], []>} : vector<8x64xf32>, vector<64x32xf32>, vector<8x32xf32> -> vector<8x32xf32>
    %c0_22 = arith.constant 0 : index
    %c0_23 = arith.constant 0 : index
    %c0_24 = arith.constant 0 : index
    %36 = vector.load %arg8[%c0_22, %c0_23, %c0_24] : memref<4x1x32xf32, #tpu.memory_space<vmem>>, vector<1x1x32xf32>
    %37 = vector.shape_cast %36 : vector<1x1x32xf32> to vector<1x32xf32>
    %38 = vector.broadcast %37 : vector<1x32xf32> to vector<8x32xf32>
    %39 = arith.addf %35, %38 : vector<8x32xf32>
    %c0_25 = arith.constant 0 : index
    %c0_26 = arith.constant 0 : index
    %c0_27 = arith.constant 0 : index
    %40 = vector.load %arg9[%c0_25, %c0_26, %c0_27] : memref<4x64x32xf32, #tpu.memory_space<vmem>>, vector<1x64x32xf32>
    %41 = vector.shape_cast %40 : vector<1x64x32xf32> to vector<64x32xf32>
    %cst_28 = arith.constant dense<0.000000e+00> : vector<8x32xf32>
    %42 = tpu.matmul %24, %41, %cst_28 {dimension_numbers = #tpu.dot_dimension_numbers<[1], [0], [0], [1], [0, 0, 1, 1], [], []>} : vector<8x64xf32>, vector<64x32xf32>, vector<8x32xf32> -> vector<8x32xf32>
    %c0_29 = arith.constant 0 : index
    %c0_30 = arith.constant 0 : index
    %c0_31 = arith.constant 0 : index
    %43 = vector.load %arg10[%c0_29, %c0_30, %c0_31] : memref<4x1x32xf32, #tpu.memory_space<vmem>>, vector<1x1x32xf32>
    %44 = vector.shape_cast %43 : vector<1x1x32xf32> to vector<1x32xf32>
    %45 = vector.broadcast %44 : vector<1x32xf32> to vector<8x32xf32>
    %46 = arith.addf %42, %45 : vector<8x32xf32>
    %47 = tpu.transpose %39, [1, 0] : vector<8x32xf32> -> vector<32x8xf32>
    %cst_32 = arith.constant dense<0.000000e+00> : vector<8x8xf32>
    %48 = tpu.matmul %32, %47, %cst_32 {dimension_numbers = #tpu.dot_dimension_numbers<[1], [0], [0], [1], [0, 0, 1, 1], [], []>} : vector<8x32xf32>, vector<32x8xf32>, vector<8x8xf32> -> vector<8x8xf32>
    %cst_33 = arith.constant 0.176776692 : f32
    %49 = vector.broadcast %cst_33 : f32 to vector<8x8xf32>
    %50 = arith.mulf %48, %49 : vector<8x8xf32>
    %51 = arith.addf %50, %25 : vector<8x8xf32>
    %cst_34 = arith.constant dense<0xFF800000> : vector<8xf32>
    %52 = vector.multi_reduction <maximumf>, %51, %cst_34 [1] : vector<8x8xf32> to vector<8xf32>
    %53 = vector.shape_cast %52 : vector<8xf32> to vector<8x1xf32>
    %54 = vector.broadcast %53 : vector<8x1xf32> to vector<8x8xf32>
    %55 = arith.subf %51, %54 : vector<8x8xf32>
    %56 = math.exp %55 : vector<8x8xf32>
    %cst_35 = arith.constant dense<0.000000e+00> : vector<8xf32>
    %57 = vector.multi_reduction <add>, %56, %cst_35 [1] : vector<8x8xf32> to vector<8xf32>
    %58 = vector.shape_cast %57 : vector<8xf32> to vector<8x1xf32>
    %59 = tpu.reciprocal %58 {approx = true} : vector<8x1xf32> -> vector<8x1xf32>
    %60 = vector.broadcast %59 : vector<8x1xf32> to vector<8x8xf32>
    %61 = arith.mulf %56, %60 : vector<8x8xf32>
    %cst_36 = arith.constant dense<0.000000e+00> : vector<8x32xf32>
    %62 = tpu.matmul %61, %46, %cst_36 {dimension_numbers = #tpu.dot_dimension_numbers<[1], [0], [0], [1], [0, 0, 1, 1], [], []>} : vector<8x8xf32>, vector<8x32xf32>, vector<8x32xf32> -> vector<8x32xf32>
    %c0_37 = arith.constant 0 : index
    %c0_38 = arith.constant 0 : index
    %c0_39 = arith.constant 0 : index
    %63 = vector.load %arg11[%c0_37, %c0_38, %c0_39] : memref<4x32x64xf32, #tpu.memory_space<vmem>>, vector<1x32x64xf32>
    %64 = vector.shape_cast %63 : vector<1x32x64xf32> to vector<32x64xf32>
    %cst_40 = arith.constant dense<0.000000e+00> : vector<8x64xf32>
    %65 = tpu.matmul %62, %64, %cst_40 {dimension_numbers = #tpu.dot_dimension_numbers<[1], [0], [0], [1], [0, 0, 1, 1], [], []>} : vector<8x32xf32>, vector<32x64xf32>, vector<8x64xf32> -> vector<8x64xf32>
    %c1 = arith.constant 1 : index
    %c0_41 = arith.constant 0 : index
    %c0_42 = arith.constant 0 : index
    %66 = vector.load %arg5[%c1, %c0_41, %c0_42] : memref<4x64x32xf32, #tpu.memory_space<vmem>>, vector<1x64x32xf32>
    %67 = vector.shape_cast %66 : vector<1x64x32xf32> to vector<64x32xf32>
    %cst_43 = arith.constant dense<0.000000e+00> : vector<8x32xf32>
    %68 = tpu.matmul %24, %67, %cst_43 {dimension_numbers = #tpu.dot_dimension_numbers<[1], [0], [0], [1], [0, 0, 1, 1], [], []>} : vector<8x64xf32>, vector<64x32xf32>, vector<8x32xf32> -> vector<8x32xf32>
    %c1_44 = arith.constant 1 : index
    %c0_45 = arith.constant 0 : index
    %c0_46 = arith.constant 0 : index
    %69 = vector.load %arg6[%c1_44, %c0_45, %c0_46] : memref<4x1x32xf32, #tpu.memory_space<vmem>>, vector<1x1x32xf32>
    %70 = vector.shape_cast %69 : vector<1x1x32xf32> to vector<1x32xf32>
    %71 = vector.broadcast %70 : vector<1x32xf32> to vector<8x32xf32>
    %72 = arith.addf %68, %71 : vector<8x32xf32>
    %c1_47 = arith.constant 1 : index
    %c0_48 = arith.constant 0 : index
    %c0_49 = arith.constant 0 : index
    %73 = vector.load %arg7[%c1_47, %c0_48, %c0_49] : memref<4x64x32xf32, #tpu.memory_space<vmem>>, vector<1x64x32xf32>
    %74 = vector.shape_cast %73 : vector<1x64x32xf32> to vector<64x32xf32>
    %cst_50 = arith.constant dense<0.000000e+00> : vector<8x32xf32>
    %75 = tpu.matmul %24, %74, %cst_50 {dimension_numbers = #tpu.dot_dimension_numbers<[1], [0], [0], [1], [0, 0, 1, 1], [], []>} : vector<8x64xf32>, vector<64x32xf32>, vector<8x32xf32> -> vector<8x32xf32>
    %c1_51 = arith.constant 1 : index
    %c0_52 = arith.constant 0 : index
    %c0_53 = arith.constant 0 : index
    %76 = vector.load %arg8[%c1_51, %c0_52, %c0_53] : memref<4x1x32xf32, #tpu.memory_space<vmem>>, vector<1x1x32xf32>
    %77 = vector.shape_cast %76 : vector<1x1x32xf32> to vector<1x32xf32>
    %78 = vector.broadcast %77 : vector<1x32xf32> to vector<8x32xf32>
    %79 = arith.addf %75, %78 : vector<8x32xf32>
    %c1_54 = arith.constant 1 : index
    %c0_55 = arith.constant 0 : index
    %c0_56 = arith.constant 0 : index
    %80 = vector.load %arg9[%c1_54, %c0_55, %c0_56] : memref<4x64x32xf32, #tpu.memory_space<vmem>>, vector<1x64x32xf32>
    %81 = vector.shape_cast %80 : vector<1x64x32xf32> to vector<64x32xf32>
    %cst_57 = arith.constant dense<0.000000e+00> : vector<8x32xf32>
    %82 = tpu.matmul %24, %81, %cst_57 {dimension_numbers = #tpu.dot_dimension_numbers<[1], [0], [0], [1], [0, 0, 1, 1], [], []>} : vector<8x64xf32>, vector<64x32xf32>, vector<8x32xf32> -> vector<8x32xf32>
    %c1_58 = arith.constant 1 : index
    %c0_59 = arith.constant 0 : index
    %c0_60 = arith.constant 0 : index
    %83 = vector.load %arg10[%c1_58, %c0_59, %c0_60] : memref<4x1x32xf32, #tpu.memory_space<vmem>>, vector<1x1x32xf32>
    %84 = vector.shape_cast %83 : vector<1x1x32xf32> to vector<1x32xf32>
    %85 = vector.broadcast %84 : vector<1x32xf32> to vector<8x32xf32>
    %86 = arith.addf %82, %85 : vector<8x32xf32>
    %87 = tpu.transpose %79, [1, 0] : vector<8x32xf32> -> vector<32x8xf32>
    %cst_61 = arith.constant dense<0.000000e+00> : vector<8x8xf32>
    %88 = tpu.matmul %72, %87, %cst_61 {dimension_numbers = #tpu.dot_dimension_numbers<[1], [0], [0], [1], [0, 0, 1, 1], [], []>} : vector<8x32xf32>, vector<32x8xf32>, vector<8x8xf32> -> vector<8x8xf32>
    %cst_62 = arith.constant 0.176776692 : f32
    %89 = vector.broadcast %cst_62 : f32 to vector<8x8xf32>
    %90 = arith.mulf %88, %89 : vector<8x8xf32>
    %91 = arith.addf %90, %25 : vector<8x8xf32>
    %cst_63 = arith.constant dense<0xFF800000> : vector<8xf32>
    %92 = vector.multi_reduction <maximumf>, %91, %cst_63 [1] : vector<8x8xf32> to vector<8xf32>
    %93 = vector.shape_cast %92 : vector<8xf32> to vector<8x1xf32>
    %94 = vector.broadcast %93 : vector<8x1xf32> to vector<8x8xf32>
    %95 = arith.subf %91, %94 : vector<8x8xf32>
    %96 = math.exp %95 : vector<8x8xf32>
    %cst_64 = arith.constant dense<0.000000e+00> : vector<8xf32>
    %97 = vector.multi_reduction <add>, %96, %cst_64 [1] : vector<8x8xf32> to vector<8xf32>
    %98 = vector.shape_cast %97 : vector<8xf32> to vector<8x1xf32>
    %99 = tpu.reciprocal %98 {approx = true} : vector<8x1xf32> -> vector<8x1xf32>
    %100 = vector.broadcast %99 : vector<8x1xf32> to vector<8x8xf32>
    %101 = arith.mulf %96, %100 : vector<8x8xf32>
    %cst_65 = arith.constant dense<0.000000e+00> : vector<8x32xf32>
    %102 = tpu.matmul %101, %86, %cst_65 {dimension_numbers = #tpu.dot_dimension_numbers<[1], [0], [0], [1], [0, 0, 1, 1], [], []>} : vector<8x8xf32>, vector<8x32xf32>, vector<8x32xf32> -> vector<8x32xf32>
    %c1_66 = arith.constant 1 : index
    %c0_67 = arith.constant 0 : index
    %c0_68 = arith.constant 0 : index
    %103 = vector.load %arg11[%c1_66, %c0_67, %c0_68] : memref<4x32x64xf32, #tpu.memory_space<vmem>>, vector<1x32x64xf32>
    %104 = vector.shape_cast %103 : vector<1x32x64xf32> to vector<32x64xf32>
    %cst_69 = arith.constant dense<0.000000e+00> : vector<8x64xf32>
    %105 = tpu.matmul %102, %104, %cst_69 {dimension_numbers = #tpu.dot_dimension_numbers<[1], [0], [0], [1], [0, 0, 1, 1], [], []>} : vector<8x32xf32>, vector<32x64xf32>, vector<8x64xf32> -> vector<8x64xf32>
    %106 = arith.addf %65, %105 : vector<8x64xf32>
    %107 = vector.extract_strided_slice %22 {offsets = [8, 0], sizes = [8, 64], strides = [1, 1]} : vector<16x64xf32> to vector<8x64xf32>
    %108 = vector.extract_strided_slice %23 {offsets = [8, 0], sizes = [8, 8], strides = [1, 1]} : vector<16x8xf32> to vector<8x8xf32>
    %c0_70 = arith.constant 0 : index
    %c0_71 = arith.constant 0 : index
    %c0_72 = arith.constant 0 : index
    %109 = vector.load %arg5[%c0_70, %c0_71, %c0_72] : memref<4x64x32xf32, #tpu.memory_space<vmem>>, vector<1x64x32xf32>
    %110 = vector.shape_cast %109 : vector<1x64x32xf32> to vector<64x32xf32>
    %cst_73 = arith.constant dense<0.000000e+00> : vector<8x32xf32>
    %111 = tpu.matmul %107, %110, %cst_73 {dimension_numbers = #tpu.dot_dimension_numbers<[1], [0], [0], [1], [0, 0, 1, 1], [], []>} : vector<8x64xf32>, vector<64x32xf32>, vector<8x32xf32> -> vector<8x32xf32>
    %c0_74 = arith.constant 0 : index
    %c0_75 = arith.constant 0 : index
    %c0_76 = arith.constant 0 : index
    %112 = vector.load %arg6[%c0_74, %c0_75, %c0_76] : memref<4x1x32xf32, #tpu.memory_space<vmem>>, vector<1x1x32xf32>
    %113 = vector.shape_cast %112 : vector<1x1x32xf32> to vector<1x32xf32>
    %114 = vector.broadcast %113 : vector<1x32xf32> to vector<8x32xf32>
    %115 = arith.addf %111, %114 : vector<8x32xf32>
    %c0_77 = arith.constant 0 : index
    %c0_78 = arith.constant 0 : index
    %c0_79 = arith.constant 0 : index
    %116 = vector.load %arg7[%c0_77, %c0_78, %c0_79] : memref<4x64x32xf32, #tpu.memory_space<vmem>>, vector<1x64x32xf32>
    %117 = vector.shape_cast %116 : vector<1x64x32xf32> to vector<64x32xf32>
    %cst_80 = arith.constant dense<0.000000e+00> : vector<8x32xf32>
    %118 = tpu.matmul %107, %117, %cst_80 {dimension_numbers = #tpu.dot_dimension_numbers<[1], [0], [0], [1], [0, 0, 1, 1], [], []>} : vector<8x64xf32>, vector<64x32xf32>, vector<8x32xf32> -> vector<8x32xf32>
    %c0_81 = arith.constant 0 : index
    %c0_82 = arith.constant 0 : index
    %c0_83 = arith.constant 0 : index
    %119 = vector.load %arg8[%c0_81, %c0_82, %c0_83] : memref<4x1x32xf32, #tpu.memory_space<vmem>>, vector<1x1x32xf32>
    %120 = vector.shape_cast %119 : vector<1x1x32xf32> to vector<1x32xf32>
    %121 = vector.broadcast %120 : vector<1x32xf32> to vector<8x32xf32>
    %122 = arith.addf %118, %121 : vector<8x32xf32>
    %c0_84 = arith.constant 0 : index
    %c0_85 = arith.constant 0 : index
    %c0_86 = arith.constant 0 : index
    %123 = vector.load %arg9[%c0_84, %c0_85, %c0_86] : memref<4x64x32xf32, #tpu.memory_space<vmem>>, vector<1x64x32xf32>
    %124 = vector.shape_cast %123 : vector<1x64x32xf32> to vector<64x32xf32>
    %cst_87 = arith.constant dense<0.000000e+00> : vector<8x32xf32>
    %125 = tpu.matmul %107, %124, %cst_87 {dimension_numbers = #tpu.dot_dimension_numbers<[1], [0], [0], [1], [0, 0, 1, 1], [], []>} : vector<8x64xf32>, vector<64x32xf32>, vector<8x32xf32> -> vector<8x32xf32>
    %c0_88 = arith.constant 0 : index
    %c0_89 = arith.constant 0 : index
    %c0_90 = arith.constant 0 : index
    %126 = vector.load %arg10[%c0_88, %c0_89, %c0_90] : memref<4x1x32xf32, #tpu.memory_space<vmem>>, vector<1x1x32xf32>
    %127 = vector.shape_cast %126 : vector<1x1x32xf32> to vector<1x32xf32>
    %128 = vector.broadcast %127 : vector<1x32xf32> to vector<8x32xf32>
    %129 = arith.addf %125, %128 : vector<8x32xf32>
    %130 = tpu.transpose %122, [1, 0] : vector<8x32xf32> -> vector<32x8xf32>
    %cst_91 = arith.constant dense<0.000000e+00> : vector<8x8xf32>
    %131 = tpu.matmul %115, %130, %cst_91 {dimension_numbers = #tpu.dot_dimension_numbers<[1], [0], [0], [1], [0, 0, 1, 1], [], []>} : vector<8x32xf32>, vector<32x8xf32>, vector<8x8xf32> -> vector<8x8xf32>
    %cst_92 = arith.constant 0.176776692 : f32
    %132 = vector.broadcast %cst_92 : f32 to vector<8x8xf32>
    %133 = arith.mulf %131, %132 : vector<8x8xf32>
    %134 = arith.addf %133, %108 : vector<8x8xf32>
    %cst_93 = arith.constant dense<0xFF800000> : vector<8xf32>
    %135 = vector.multi_reduction <maximumf>, %134, %cst_93 [1] : vector<8x8xf32> to vector<8xf32>
    %136 = vector.shape_cast %135 : vector<8xf32> to vector<8x1xf32>
    %137 = vector.broadcast %136 : vector<8x1xf32> to vector<8x8xf32>
    %138 = arith.subf %134, %137 : vector<8x8xf32>
    %139 = math.exp %138 : vector<8x8xf32>
    %cst_94 = arith.constant dense<0.000000e+00> : vector<8xf32>
    %140 = vector.multi_reduction <add>, %139, %cst_94 [1] : vector<8x8xf32> to vector<8xf32>
    %141 = vector.shape_cast %140 : vector<8xf32> to vector<8x1xf32>
    %142 = tpu.reciprocal %141 {approx = true} : vector<8x1xf32> -> vector<8x1xf32>
    %143 = vector.broadcast %142 : vector<8x1xf32> to vector<8x8xf32>
    %144 = arith.mulf %139, %143 : vector<8x8xf32>
    %cst_95 = arith.constant dense<0.000000e+00> : vector<8x32xf32>
    %145 = tpu.matmul %144, %129, %cst_95 {dimension_numbers = #tpu.dot_dimension_numbers<[1], [0], [0], [1], [0, 0, 1, 1], [], []>} : vector<8x8xf32>, vector<8x32xf32>, vector<8x32xf32> -> vector<8x32xf32>
    %c0_96 = arith.constant 0 : index
    %c0_97 = arith.constant 0 : index
    %c0_98 = arith.constant 0 : index
    %146 = vector.load %arg11[%c0_96, %c0_97, %c0_98] : memref<4x32x64xf32, #tpu.memory_space<vmem>>, vector<1x32x64xf32>
    %147 = vector.shape_cast %146 : vector<1x32x64xf32> to vector<32x64xf32>
    %cst_99 = arith.constant dense<0.000000e+00> : vector<8x64xf32>
    %148 = tpu.matmul %145, %147, %cst_99 {dimension_numbers = #tpu.dot_dimension_numbers<[1], [0], [0], [1], [0, 0, 1, 1], [], []>} : vector<8x32xf32>, vector<32x64xf32>, vector<8x64xf32> -> vector<8x64xf32>
    %c1_100 = arith.constant 1 : index
    %c0_101 = arith.constant 0 : index
    %c0_102 = arith.constant 0 : index
    %149 = vector.load %arg5[%c1_100, %c0_101, %c0_102] : memref<4x64x32xf32, #tpu.memory_space<vmem>>, vector<1x64x32xf32>
    %150 = vector.shape_cast %149 : vector<1x64x32xf32> to vector<64x32xf32>
    %cst_103 = arith.constant dense<0.000000e+00> : vector<8x32xf32>
    %151 = tpu.matmul %107, %150, %cst_103 {dimension_numbers = #tpu.dot_dimension_numbers<[1], [0], [0], [1], [0, 0, 1, 1], [], []>} : vector<8x64xf32>, vector<64x32xf32>, vector<8x32xf32> -> vector<8x32xf32>
    %c1_104 = arith.constant 1 : index
    %c0_105 = arith.constant 0 : index
    %c0_106 = arith.constant 0 : index
    %152 = vector.load %arg6[%c1_104, %c0_105, %c0_106] : memref<4x1x32xf32, #tpu.memory_space<vmem>>, vector<1x1x32xf32>
    %153 = vector.shape_cast %152 : vector<1x1x32xf32> to vector<1x32xf32>
    %154 = vector.broadcast %153 : vector<1x32xf32> to vector<8x32xf32>
    %155 = arith.addf %151, %154 : vector<8x32xf32>
    %c1_107 = arith.constant 1 : index
    %c0_108 = arith.constant 0 : index
    %c0_109 = arith.constant 0 : index
    %156 = vector.load %arg7[%c1_107, %c0_108, %c0_109] : memref<4x64x32xf32, #tpu.memory_space<vmem>>, vector<1x64x32xf32>
    %157 = vector.shape_cast %156 : vector<1x64x32xf32> to vector<64x32xf32>
    %cst_110 = arith.constant dense<0.000000e+00> : vector<8x32xf32>
    %158 = tpu.matmul %107, %157, %cst_110 {dimension_numbers = #tpu.dot_dimension_numbers<[1], [0], [0], [1], [0, 0, 1, 1], [], []>} : vector<8x64xf32>, vector<64x32xf32>, vector<8x32xf32> -> vector<8x32xf32>
    %c1_111 = arith.constant 1 : index
    %c0_112 = arith.constant 0 : index
    %c0_113 = arith.constant 0 : index
    %159 = vector.load %arg8[%c1_111, %c0_112, %c0_113] : memref<4x1x32xf32, #tpu.memory_space<vmem>>, vector<1x1x32xf32>
    %160 = vector.shape_cast %159 : vector<1x1x32xf32> to vector<1x32xf32>
    %161 = vector.broadcast %160 : vector<1x32xf32> to vector<8x32xf32>
    %162 = arith.addf %158, %161 : vector<8x32xf32>
    %c1_114 = arith.constant 1 : index
    %c0_115 = arith.constant 0 : index
    %c0_116 = arith.constant 0 : index
    %163 = vector.load %arg9[%c1_114, %c0_115, %c0_116] : memref<4x64x32xf32, #tpu.memory_space<vmem>>, vector<1x64x32xf32>
    %164 = vector.shape_cast %163 : vector<1x64x32xf32> to vector<64x32xf32>
    %cst_117 = arith.constant dense<0.000000e+00> : vector<8x32xf32>
    %165 = tpu.matmul %107, %164, %cst_117 {dimension_numbers = #tpu.dot_dimension_numbers<[1], [0], [0], [1], [0, 0, 1, 1], [], []>} : vector<8x64xf32>, vector<64x32xf32>, vector<8x32xf32> -> vector<8x32xf32>
    %c1_118 = arith.constant 1 : index
    %c0_119 = arith.constant 0 : index
    %c0_120 = arith.constant 0 : index
    %166 = vector.load %arg10[%c1_118, %c0_119, %c0_120] : memref<4x1x32xf32, #tpu.memory_space<vmem>>, vector<1x1x32xf32>
    %167 = vector.shape_cast %166 : vector<1x1x32xf32> to vector<1x32xf32>
    %168 = vector.broadcast %167 : vector<1x32xf32> to vector<8x32xf32>
    %169 = arith.addf %165, %168 : vector<8x32xf32>
    %170 = tpu.transpose %162, [1, 0] : vector<8x32xf32> -> vector<32x8xf32>
    %cst_121 = arith.constant dense<0.000000e+00> : vector<8x8xf32>
    %171 = tpu.matmul %155, %170, %cst_121 {dimension_numbers = #tpu.dot_dimension_numbers<[1], [0], [0], [1], [0, 0, 1, 1], [], []>} : vector<8x32xf32>, vector<32x8xf32>, vector<8x8xf32> -> vector<8x8xf32>
    %cst_122 = arith.constant 0.176776692 : f32
    %172 = vector.broadcast %cst_122 : f32 to vector<8x8xf32>
    %173 = arith.mulf %171, %172 : vector<8x8xf32>
    %174 = arith.addf %173, %108 : vector<8x8xf32>
    %cst_123 = arith.constant dense<0xFF800000> : vector<8xf32>
    %175 = vector.multi_reduction <maximumf>, %174, %cst_123 [1] : vector<8x8xf32> to vector<8xf32>
    %176 = vector.shape_cast %175 : vector<8xf32> to vector<8x1xf32>
    %177 = vector.broadcast %176 : vector<8x1xf32> to vector<8x8xf32>
    %178 = arith.subf %174, %177 : vector<8x8xf32>
    %179 = math.exp %178 : vector<8x8xf32>
    %cst_124 = arith.constant dense<0.000000e+00> : vector<8xf32>
    %180 = vector.multi_reduction <add>, %179, %cst_124 [1] : vector<8x8xf32> to vector<8xf32>
    %181 = vector.shape_cast %180 : vector<8xf32> to vector<8x1xf32>
    %182 = tpu.reciprocal %181 {approx = true} : vector<8x1xf32> -> vector<8x1xf32>
    %183 = vector.broadcast %182 : vector<8x1xf32> to vector<8x8xf32>
    %184 = arith.mulf %179, %183 : vector<8x8xf32>
    %cst_125 = arith.constant dense<0.000000e+00> : vector<8x32xf32>
    %185 = tpu.matmul %184, %169, %cst_125 {dimension_numbers = #tpu.dot_dimension_numbers<[1], [0], [0], [1], [0, 0, 1, 1], [], []>} : vector<8x8xf32>, vector<8x32xf32>, vector<8x32xf32> -> vector<8x32xf32>
    %c1_126 = arith.constant 1 : index
    %c0_127 = arith.constant 0 : index
    %c0_128 = arith.constant 0 : index
    %186 = vector.load %arg11[%c1_126, %c0_127, %c0_128] : memref<4x32x64xf32, #tpu.memory_space<vmem>>, vector<1x32x64xf32>
    %187 = vector.shape_cast %186 : vector<1x32x64xf32> to vector<32x64xf32>
    %cst_129 = arith.constant dense<0.000000e+00> : vector<8x64xf32>
    %188 = tpu.matmul %185, %187, %cst_129 {dimension_numbers = #tpu.dot_dimension_numbers<[1], [0], [0], [1], [0, 0, 1, 1], [], []>} : vector<8x32xf32>, vector<32x64xf32>, vector<8x64xf32> -> vector<8x64xf32>
    %189 = arith.addf %148, %188 : vector<8x64xf32>
    %190 = tpu.concatenate %106, %189 in 0 : vector<8x64xf32>, vector<8x64xf32> -> vector<16x64xf32>
    %c0_130 = arith.constant 0 : index
    %c0_131 = arith.constant 0 : index
    %c0_132 = arith.constant 0 : index
    %191 = vector.load %arg12[%c0_130, %c0_131, %c0_132] : memref<2x1x64xf32, #tpu.memory_space<vmem>>, vector<1x1x64xf32>
    %192 = vector.shape_cast %191 : vector<1x1x64xf32> to vector<1x64xf32>
    %193 = vector.broadcast %192 : vector<1x64xf32> to vector<16x64xf32>
    %194 = arith.addf %190, %193 : vector<16x64xf32>
    %195 = arith.addf %22, %194 : vector<16x64xf32>
    %c0_133 = arith.constant 0 : index
    %c0_134 = arith.constant 0 : index
    %c0_135 = arith.constant 0 : index
    %196 = vector.load %arg13[%c0_133, %c0_134, %c0_135] : memref<2x1x64xf32, #tpu.memory_space<vmem>>, vector<1x1x64xf32>
    %197 = vector.shape_cast %196 : vector<1x1x64xf32> to vector<1x64xf32>
    %c0_136 = arith.constant 0 : index
    %c0_137 = arith.constant 0 : index
    %c0_138 = arith.constant 0 : index
    %198 = vector.load %arg14[%c0_136, %c0_137, %c0_138] : memref<2x1x64xf32, #tpu.memory_space<vmem>>, vector<1x1x64xf32>
    %199 = vector.shape_cast %198 : vector<1x1x64xf32> to vector<1x64xf32>
    %cst_139 = arith.constant dense<0.000000e+00> : vector<16xf32>
    %200 = vector.multi_reduction <add>, %195, %cst_139 [1] : vector<16x64xf32> to vector<16xf32>
    %201 = vector.shape_cast %200 : vector<16xf32> to vector<16x1xf32>
    %cst_140 = arith.constant 6.400000e+01 : f32
    %202 = vector.broadcast %cst_140 : f32 to vector<16x1xf32>
    %203 = arith.divf %201, %202 : vector<16x1xf32>
    %204 = vector.broadcast %203 : vector<16x1xf32> to vector<16x64xf32>
    %205 = arith.subf %195, %204 : vector<16x64xf32>
    %206 = arith.mulf %205, %205 : vector<16x64xf32>
    %cst_141 = arith.constant dense<0.000000e+00> : vector<16xf32>
    %207 = vector.multi_reduction <add>, %206, %cst_141 [1] : vector<16x64xf32> to vector<16xf32>
    %208 = vector.shape_cast %207 : vector<16xf32> to vector<16x1xf32>
    %cst_142 = arith.constant 6.400000e+01 : f32
    %209 = vector.broadcast %cst_142 : f32 to vector<16x1xf32>
    %210 = arith.divf %208, %209 : vector<16x1xf32>
    %cst_143 = arith.constant 9.99999996E-13 : f32
    %211 = vector.broadcast %cst_143 : f32 to vector<16x1xf32>
    %212 = arith.addf %210, %211 : vector<16x1xf32>
    %213 = math.rsqrt %212 : vector<16x1xf32>
    %214 = vector.broadcast %213 : vector<16x1xf32> to vector<16x64xf32>
    %215 = arith.mulf %205, %214 : vector<16x64xf32>
    %216 = vector.broadcast %197 : vector<1x64xf32> to vector<16x64xf32>
    %217 = arith.mulf %215, %216 : vector<16x64xf32>
    %218 = vector.broadcast %199 : vector<1x64xf32> to vector<16x64xf32>
    %219 = arith.addf %217, %218 : vector<16x64xf32>
    %c0_144 = arith.constant 0 : index
    %c0_145 = arith.constant 0 : index
    %c0_146 = arith.constant 0 : index
    %220 = vector.load %arg15[%c0_144, %c0_145, %c0_146] : memref<2x64x128xf32, #tpu.memory_space<vmem>>, vector<1x64x128xf32>
    %221 = vector.shape_cast %220 : vector<1x64x128xf32> to vector<64x128xf32>
    %cst_147 = arith.constant dense<0.000000e+00> : vector<16x128xf32>
    %222 = tpu.matmul %219, %221, %cst_147 {dimension_numbers = #tpu.dot_dimension_numbers<[1], [0], [0], [1], [0, 0, 1, 1], [], []>} : vector<16x64xf32>, vector<64x128xf32>, vector<16x128xf32> -> vector<16x128xf32>
    %c0_148 = arith.constant 0 : index
    %c0_149 = arith.constant 0 : index
    %c0_150 = arith.constant 0 : index
    %223 = vector.load %arg16[%c0_148, %c0_149, %c0_150] : memref<2x1x128xf32, #tpu.memory_space<vmem>>, vector<1x1x128xf32>
    %224 = vector.shape_cast %223 : vector<1x1x128xf32> to vector<1x128xf32>
    %225 = vector.broadcast %224 : vector<1x128xf32> to vector<16x128xf32>
    %226 = arith.addf %222, %225 : vector<16x128xf32>
    %cst_151 = arith.constant 5.000000e-01 : f32
    %227 = vector.broadcast %cst_151 : f32 to vector<16x128xf32>
    %228 = arith.mulf %227, %226 : vector<16x128xf32>
    %cst_152 = arith.constant 4.471500e-02 : f32
    %229 = vector.broadcast %cst_152 : f32 to vector<16x128xf32>
    %230 = arith.mulf %229, %226 : vector<16x128xf32>
    %231 = arith.mulf %230, %226 : vector<16x128xf32>
    %232 = arith.mulf %231, %226 : vector<16x128xf32>
    %233 = arith.addf %226, %232 : vector<16x128xf32>
    %cst_153 = arith.constant 0.797884583 : f32
    %234 = vector.broadcast %cst_153 : f32 to vector<16x128xf32>
    %235 = arith.mulf %234, %233 : vector<16x128xf32>
    %236 = math.tanh %235 : vector<16x128xf32>
    %cst_154 = arith.constant 1.000000e+00 : f32
    %237 = vector.broadcast %cst_154 : f32 to vector<16x128xf32>
    %238 = arith.addf %237, %236 : vector<16x128xf32>
    %239 = arith.mulf %228, %238 : vector<16x128xf32>
    %c0_155 = arith.constant 0 : index
    %c0_156 = arith.constant 0 : index
    %c0_157 = arith.constant 0 : index
    %240 = vector.load %arg17[%c0_155, %c0_156, %c0_157] : memref<2x128x64xf32, #tpu.memory_space<vmem>>, vector<1x128x64xf32>
    %241 = vector.shape_cast %240 : vector<1x128x64xf32> to vector<128x64xf32>
    %cst_158 = arith.constant dense<0.000000e+00> : vector<16x64xf32>
    %242 = tpu.matmul %239, %241, %cst_158 {dimension_numbers = #tpu.dot_dimension_numbers<[1], [0], [0], [1], [0, 0, 1, 1], [], []>} : vector<16x128xf32>, vector<128x64xf32>, vector<16x64xf32> -> vector<16x64xf32>
    %c0_159 = arith.constant 0 : index
    %c0_160 = arith.constant 0 : index
    %c0_161 = arith.constant 0 : index
    %243 = vector.load %arg18[%c0_159, %c0_160, %c0_161] : memref<2x1x64xf32, #tpu.memory_space<vmem>>, vector<1x1x64xf32>
    %244 = vector.shape_cast %243 : vector<1x1x64xf32> to vector<1x64xf32>
    %245 = vector.broadcast %244 : vector<1x64xf32> to vector<16x64xf32>
    %246 = arith.addf %242, %245 : vector<16x64xf32>
    %247 = arith.addf %219, %246 : vector<16x64xf32>
    %c0_162 = arith.constant 0 : index
    %c0_163 = arith.constant 0 : index
    %c0_164 = arith.constant 0 : index
    %248 = vector.load %arg19[%c0_162, %c0_163, %c0_164] : memref<2x1x64xf32, #tpu.memory_space<vmem>>, vector<1x1x64xf32>
    %249 = vector.shape_cast %248 : vector<1x1x64xf32> to vector<1x64xf32>
    %c0_165 = arith.constant 0 : index
    %c0_166 = arith.constant 0 : index
    %c0_167 = arith.constant 0 : index
    %250 = vector.load %arg20[%c0_165, %c0_166, %c0_167] : memref<2x1x64xf32, #tpu.memory_space<vmem>>, vector<1x1x64xf32>
    %251 = vector.shape_cast %250 : vector<1x1x64xf32> to vector<1x64xf32>
    %cst_168 = arith.constant dense<0.000000e+00> : vector<16xf32>
    %252 = vector.multi_reduction <add>, %247, %cst_168 [1] : vector<16x64xf32> to vector<16xf32>
    %253 = vector.shape_cast %252 : vector<16xf32> to vector<16x1xf32>
    %cst_169 = arith.constant 6.400000e+01 : f32
    %254 = vector.broadcast %cst_169 : f32 to vector<16x1xf32>
    %255 = arith.divf %253, %254 : vector<16x1xf32>
    %256 = vector.broadcast %255 : vector<16x1xf32> to vector<16x64xf32>
    %257 = arith.subf %247, %256 : vector<16x64xf32>
    %258 = arith.mulf %257, %257 : vector<16x64xf32>
    %cst_170 = arith.constant dense<0.000000e+00> : vector<16xf32>
    %259 = vector.multi_reduction <add>, %258, %cst_170 [1] : vector<16x64xf32> to vector<16xf32>
    %260 = vector.shape_cast %259 : vector<16xf32> to vector<16x1xf32>
    %cst_171 = arith.constant 6.400000e+01 : f32
    %261 = vector.broadcast %cst_171 : f32 to vector<16x1xf32>
    %262 = arith.divf %260, %261 : vector<16x1xf32>
    %cst_172 = arith.constant 9.99999996E-13 : f32
    %263 = vector.broadcast %cst_172 : f32 to vector<16x1xf32>
    %264 = arith.addf %262, %263 : vector<16x1xf32>
    %265 = math.rsqrt %264 : vector<16x1xf32>
    %266 = vector.broadcast %265 : vector<16x1xf32> to vector<16x64xf32>
    %267 = arith.mulf %257, %266 : vector<16x64xf32>
    %268 = vector.broadcast %249 : vector<1x64xf32> to vector<16x64xf32>
    %269 = arith.mulf %267, %268 : vector<16x64xf32>
    %270 = vector.broadcast %251 : vector<1x64xf32> to vector<16x64xf32>
    %271 = arith.addf %269, %270 : vector<16x64xf32>
    %272 = vector.extract_strided_slice %271 {offsets = [0, 0], sizes = [8, 64], strides = [1, 1]} : vector<16x64xf32> to vector<8x64xf32>
    %273 = vector.extract_strided_slice %23 {offsets = [0, 0], sizes = [8, 8], strides = [1, 1]} : vector<16x8xf32> to vector<8x8xf32>
    %c2 = arith.constant 2 : index
    %c0_173 = arith.constant 0 : index
    %c0_174 = arith.constant 0 : index
    %274 = vector.load %arg5[%c2, %c0_173, %c0_174] : memref<4x64x32xf32, #tpu.memory_space<vmem>>, vector<1x64x32xf32>
    %275 = vector.shape_cast %274 : vector<1x64x32xf32> to vector<64x32xf32>
    %cst_175 = arith.constant dense<0.000000e+00> : vector<8x32xf32>
    %276 = tpu.matmul %272, %275, %cst_175 {dimension_numbers = #tpu.dot_dimension_numbers<[1], [0], [0], [1], [0, 0, 1, 1], [], []>} : vector<8x64xf32>, vector<64x32xf32>, vector<8x32xf32> -> vector<8x32xf32>
    %c2_176 = arith.constant 2 : index
    %c0_177 = arith.constant 0 : index
    %c0_178 = arith.constant 0 : index
    %277 = vector.load %arg6[%c2_176, %c0_177, %c0_178] : memref<4x1x32xf32, #tpu.memory_space<vmem>>, vector<1x1x32xf32>
    %278 = vector.shape_cast %277 : vector<1x1x32xf32> to vector<1x32xf32>
    %279 = vector.broadcast %278 : vector<1x32xf32> to vector<8x32xf32>
    %280 = arith.addf %276, %279 : vector<8x32xf32>
    %c2_179 = arith.constant 2 : index
    %c0_180 = arith.constant 0 : index
    %c0_181 = arith.constant 0 : index
    %281 = vector.load %arg7[%c2_179, %c0_180, %c0_181] : memref<4x64x32xf32, #tpu.memory_space<vmem>>, vector<1x64x32xf32>
    %282 = vector.shape_cast %281 : vector<1x64x32xf32> to vector<64x32xf32>
    %cst_182 = arith.constant dense<0.000000e+00> : vector<8x32xf32>
    %283 = tpu.matmul %272, %282, %cst_182 {dimension_numbers = #tpu.dot_dimension_numbers<[1], [0], [0], [1], [0, 0, 1, 1], [], []>} : vector<8x64xf32>, vector<64x32xf32>, vector<8x32xf32> -> vector<8x32xf32>
    %c2_183 = arith.constant 2 : index
    %c0_184 = arith.constant 0 : index
    %c0_185 = arith.constant 0 : index
    %284 = vector.load %arg8[%c2_183, %c0_184, %c0_185] : memref<4x1x32xf32, #tpu.memory_space<vmem>>, vector<1x1x32xf32>
    %285 = vector.shape_cast %284 : vector<1x1x32xf32> to vector<1x32xf32>
    %286 = vector.broadcast %285 : vector<1x32xf32> to vector<8x32xf32>
    %287 = arith.addf %283, %286 : vector<8x32xf32>
    %c2_186 = arith.constant 2 : index
    %c0_187 = arith.constant 0 : index
    %c0_188 = arith.constant 0 : index
    %288 = vector.load %arg9[%c2_186, %c0_187, %c0_188] : memref<4x64x32xf32, #tpu.memory_space<vmem>>, vector<1x64x32xf32>
    %289 = vector.shape_cast %288 : vector<1x64x32xf32> to vector<64x32xf32>
    %cst_189 = arith.constant dense<0.000000e+00> : vector<8x32xf32>
    %290 = tpu.matmul %272, %289, %cst_189 {dimension_numbers = #tpu.dot_dimension_numbers<[1], [0], [0], [1], [0, 0, 1, 1], [], []>} : vector<8x64xf32>, vector<64x32xf32>, vector<8x32xf32> -> vector<8x32xf32>
    %c2_190 = arith.constant 2 : index
    %c0_191 = arith.constant 0 : index
    %c0_192 = arith.constant 0 : index
    %291 = vector.load %arg10[%c2_190, %c0_191, %c0_192] : memref<4x1x32xf32, #tpu.memory_space<vmem>>, vector<1x1x32xf32>
    %292 = vector.shape_cast %291 : vector<1x1x32xf32> to vector<1x32xf32>
    %293 = vector.broadcast %292 : vector<1x32xf32> to vector<8x32xf32>
    %294 = arith.addf %290, %293 : vector<8x32xf32>
    %295 = tpu.transpose %287, [1, 0] : vector<8x32xf32> -> vector<32x8xf32>
    %cst_193 = arith.constant dense<0.000000e+00> : vector<8x8xf32>
    %296 = tpu.matmul %280, %295, %cst_193 {dimension_numbers = #tpu.dot_dimension_numbers<[1], [0], [0], [1], [0, 0, 1, 1], [], []>} : vector<8x32xf32>, vector<32x8xf32>, vector<8x8xf32> -> vector<8x8xf32>
    %cst_194 = arith.constant 0.176776692 : f32
    %297 = vector.broadcast %cst_194 : f32 to vector<8x8xf32>
    %298 = arith.mulf %296, %297 : vector<8x8xf32>
    %299 = arith.addf %298, %273 : vector<8x8xf32>
    %cst_195 = arith.constant dense<0xFF800000> : vector<8xf32>
    %300 = vector.multi_reduction <maximumf>, %299, %cst_195 [1] : vector<8x8xf32> to vector<8xf32>
    %301 = vector.shape_cast %300 : vector<8xf32> to vector<8x1xf32>
    %302 = vector.broadcast %301 : vector<8x1xf32> to vector<8x8xf32>
    %303 = arith.subf %299, %302 : vector<8x8xf32>
    %304 = math.exp %303 : vector<8x8xf32>
    %cst_196 = arith.constant dense<0.000000e+00> : vector<8xf32>
    %305 = vector.multi_reduction <add>, %304, %cst_196 [1] : vector<8x8xf32> to vector<8xf32>
    %306 = vector.shape_cast %305 : vector<8xf32> to vector<8x1xf32>
    %307 = tpu.reciprocal %306 {approx = true} : vector<8x1xf32> -> vector<8x1xf32>
    %308 = vector.broadcast %307 : vector<8x1xf32> to vector<8x8xf32>
    %309 = arith.mulf %304, %308 : vector<8x8xf32>
    %cst_197 = arith.constant dense<0.000000e+00> : vector<8x32xf32>
    %310 = tpu.matmul %309, %294, %cst_197 {dimension_numbers = #tpu.dot_dimension_numbers<[1], [0], [0], [1], [0, 0, 1, 1], [], []>} : vector<8x8xf32>, vector<8x32xf32>, vector<8x32xf32> -> vector<8x32xf32>
    %c2_198 = arith.constant 2 : index
    %c0_199 = arith.constant 0 : index
    %c0_200 = arith.constant 0 : index
    %311 = vector.load %arg11[%c2_198, %c0_199, %c0_200] : memref<4x32x64xf32, #tpu.memory_space<vmem>>, vector<1x32x64xf32>
    %312 = vector.shape_cast %311 : vector<1x32x64xf32> to vector<32x64xf32>
    %cst_201 = arith.constant dense<0.000000e+00> : vector<8x64xf32>
    %313 = tpu.matmul %310, %312, %cst_201 {dimension_numbers = #tpu.dot_dimension_numbers<[1], [0], [0], [1], [0, 0, 1, 1], [], []>} : vector<8x32xf32>, vector<32x64xf32>, vector<8x64xf32> -> vector<8x64xf32>
    %c3 = arith.constant 3 : index
    %c0_202 = arith.constant 0 : index
    %c0_203 = arith.constant 0 : index
    %314 = vector.load %arg5[%c3, %c0_202, %c0_203] : memref<4x64x32xf32, #tpu.memory_space<vmem>>, vector<1x64x32xf32>
    %315 = vector.shape_cast %314 : vector<1x64x32xf32> to vector<64x32xf32>
    %cst_204 = arith.constant dense<0.000000e+00> : vector<8x32xf32>
    %316 = tpu.matmul %272, %315, %cst_204 {dimension_numbers = #tpu.dot_dimension_numbers<[1], [0], [0], [1], [0, 0, 1, 1], [], []>} : vector<8x64xf32>, vector<64x32xf32>, vector<8x32xf32> -> vector<8x32xf32>
    %c3_205 = arith.constant 3 : index
    %c0_206 = arith.constant 0 : index
    %c0_207 = arith.constant 0 : index
    %317 = vector.load %arg6[%c3_205, %c0_206, %c0_207] : memref<4x1x32xf32, #tpu.memory_space<vmem>>, vector<1x1x32xf32>
    %318 = vector.shape_cast %317 : vector<1x1x32xf32> to vector<1x32xf32>
    %319 = vector.broadcast %318 : vector<1x32xf32> to vector<8x32xf32>
    %320 = arith.addf %316, %319 : vector<8x32xf32>
    %c3_208 = arith.constant 3 : index
    %c0_209 = arith.constant 0 : index
    %c0_210 = arith.constant 0 : index
    %321 = vector.load %arg7[%c3_208, %c0_209, %c0_210] : memref<4x64x32xf32, #tpu.memory_space<vmem>>, vector<1x64x32xf32>
    %322 = vector.shape_cast %321 : vector<1x64x32xf32> to vector<64x32xf32>
    %cst_211 = arith.constant dense<0.000000e+00> : vector<8x32xf32>
    %323 = tpu.matmul %272, %322, %cst_211 {dimension_numbers = #tpu.dot_dimension_numbers<[1], [0], [0], [1], [0, 0, 1, 1], [], []>} : vector<8x64xf32>, vector<64x32xf32>, vector<8x32xf32> -> vector<8x32xf32>
    %c3_212 = arith.constant 3 : index
    %c0_213 = arith.constant 0 : index
    %c0_214 = arith.constant 0 : index
    %324 = vector.load %arg8[%c3_212, %c0_213, %c0_214] : memref<4x1x32xf32, #tpu.memory_space<vmem>>, vector<1x1x32xf32>
    %325 = vector.shape_cast %324 : vector<1x1x32xf32> to vector<1x32xf32>
    %326 = vector.broadcast %325 : vector<1x32xf32> to vector<8x32xf32>
    %327 = arith.addf %323, %326 : vector<8x32xf32>
    %c3_215 = arith.constant 3 : index
    %c0_216 = arith.constant 0 : index
    %c0_217 = arith.constant 0 : index
    %328 = vector.load %arg9[%c3_215, %c0_216, %c0_217] : memref<4x64x32xf32, #tpu.memory_space<vmem>>, vector<1x64x32xf32>
    %329 = vector.shape_cast %328 : vector<1x64x32xf32> to vector<64x32xf32>
    %cst_218 = arith.constant dense<0.000000e+00> : vector<8x32xf32>
    %330 = tpu.matmul %272, %329, %cst_218 {dimension_numbers = #tpu.dot_dimension_numbers<[1], [0], [0], [1], [0, 0, 1, 1], [], []>} : vector<8x64xf32>, vector<64x32xf32>, vector<8x32xf32> -> vector<8x32xf32>
    %c3_219 = arith.constant 3 : index
    %c0_220 = arith.constant 0 : index
    %c0_221 = arith.constant 0 : index
    %331 = vector.load %arg10[%c3_219, %c0_220, %c0_221] : memref<4x1x32xf32, #tpu.memory_space<vmem>>, vector<1x1x32xf32>
    %332 = vector.shape_cast %331 : vector<1x1x32xf32> to vector<1x32xf32>
    %333 = vector.broadcast %332 : vector<1x32xf32> to vector<8x32xf32>
    %334 = arith.addf %330, %333 : vector<8x32xf32>
    %335 = tpu.transpose %327, [1, 0] : vector<8x32xf32> -> vector<32x8xf32>
    %cst_222 = arith.constant dense<0.000000e+00> : vector<8x8xf32>
    %336 = tpu.matmul %320, %335, %cst_222 {dimension_numbers = #tpu.dot_dimension_numbers<[1], [0], [0], [1], [0, 0, 1, 1], [], []>} : vector<8x32xf32>, vector<32x8xf32>, vector<8x8xf32> -> vector<8x8xf32>
    %cst_223 = arith.constant 0.176776692 : f32
    %337 = vector.broadcast %cst_223 : f32 to vector<8x8xf32>
    %338 = arith.mulf %336, %337 : vector<8x8xf32>
    %339 = arith.addf %338, %273 : vector<8x8xf32>
    %cst_224 = arith.constant dense<0xFF800000> : vector<8xf32>
    %340 = vector.multi_reduction <maximumf>, %339, %cst_224 [1] : vector<8x8xf32> to vector<8xf32>
    %341 = vector.shape_cast %340 : vector<8xf32> to vector<8x1xf32>
    %342 = vector.broadcast %341 : vector<8x1xf32> to vector<8x8xf32>
    %343 = arith.subf %339, %342 : vector<8x8xf32>
    %344 = math.exp %343 : vector<8x8xf32>
    %cst_225 = arith.constant dense<0.000000e+00> : vector<8xf32>
    %345 = vector.multi_reduction <add>, %344, %cst_225 [1] : vector<8x8xf32> to vector<8xf32>
    %346 = vector.shape_cast %345 : vector<8xf32> to vector<8x1xf32>
    %347 = tpu.reciprocal %346 {approx = true} : vector<8x1xf32> -> vector<8x1xf32>
    %348 = vector.broadcast %347 : vector<8x1xf32> to vector<8x8xf32>
    %349 = arith.mulf %344, %348 : vector<8x8xf32>
    %cst_226 = arith.constant dense<0.000000e+00> : vector<8x32xf32>
    %350 = tpu.matmul %349, %334, %cst_226 {dimension_numbers = #tpu.dot_dimension_numbers<[1], [0], [0], [1], [0, 0, 1, 1], [], []>} : vector<8x8xf32>, vector<8x32xf32>, vector<8x32xf32> -> vector<8x32xf32>
    %c3_227 = arith.constant 3 : index
    %c0_228 = arith.constant 0 : index
    %c0_229 = arith.constant 0 : index
    %351 = vector.load %arg11[%c3_227, %c0_228, %c0_229] : memref<4x32x64xf32, #tpu.memory_space<vmem>>, vector<1x32x64xf32>
    %352 = vector.shape_cast %351 : vector<1x32x64xf32> to vector<32x64xf32>
    %cst_230 = arith.constant dense<0.000000e+00> : vector<8x64xf32>
    %353 = tpu.matmul %350, %352, %cst_230 {dimension_numbers = #tpu.dot_dimension_numbers<[1], [0], [0], [1], [0, 0, 1, 1], [], []>} : vector<8x32xf32>, vector<32x64xf32>, vector<8x64xf32> -> vector<8x64xf32>
    %354 = arith.addf %313, %353 : vector<8x64xf32>
    %355 = vector.extract_strided_slice %271 {offsets = [8, 0], sizes = [8, 64], strides = [1, 1]} : vector<16x64xf32> to vector<8x64xf32>
    %356 = vector.extract_strided_slice %23 {offsets = [8, 0], sizes = [8, 8], strides = [1, 1]} : vector<16x8xf32> to vector<8x8xf32>
    %c2_231 = arith.constant 2 : index
    %c0_232 = arith.constant 0 : index
    %c0_233 = arith.constant 0 : index
    %357 = vector.load %arg5[%c2_231, %c0_232, %c0_233] : memref<4x64x32xf32, #tpu.memory_space<vmem>>, vector<1x64x32xf32>
    %358 = vector.shape_cast %357 : vector<1x64x32xf32> to vector<64x32xf32>
    %cst_234 = arith.constant dense<0.000000e+00> : vector<8x32xf32>
    %359 = tpu.matmul %355, %358, %cst_234 {dimension_numbers = #tpu.dot_dimension_numbers<[1], [0], [0], [1], [0, 0, 1, 1], [], []>} : vector<8x64xf32>, vector<64x32xf32>, vector<8x32xf32> -> vector<8x32xf32>
    %c2_235 = arith.constant 2 : index
    %c0_236 = arith.constant 0 : index
    %c0_237 = arith.constant 0 : index
    %360 = vector.load %arg6[%c2_235, %c0_236, %c0_237] : memref<4x1x32xf32, #tpu.memory_space<vmem>>, vector<1x1x32xf32>
    %361 = vector.shape_cast %360 : vector<1x1x32xf32> to vector<1x32xf32>
    %362 = vector.broadcast %361 : vector<1x32xf32> to vector<8x32xf32>
    %363 = arith.addf %359, %362 : vector<8x32xf32>
    %c2_238 = arith.constant 2 : index
    %c0_239 = arith.constant 0 : index
    %c0_240 = arith.constant 0 : index
    %364 = vector.load %arg7[%c2_238, %c0_239, %c0_240] : memref<4x64x32xf32, #tpu.memory_space<vmem>>, vector<1x64x32xf32>
    %365 = vector.shape_cast %364 : vector<1x64x32xf32> to vector<64x32xf32>
    %cst_241 = arith.constant dense<0.000000e+00> : vector<8x32xf32>
    %366 = tpu.matmul %355, %365, %cst_241 {dimension_numbers = #tpu.dot_dimension_numbers<[1], [0], [0], [1], [0, 0, 1, 1], [], []>} : vector<8x64xf32>, vector<64x32xf32>, vector<8x32xf32> -> vector<8x32xf32>
    %c2_242 = arith.constant 2 : index
    %c0_243 = arith.constant 0 : index
    %c0_244 = arith.constant 0 : index
    %367 = vector.load %arg8[%c2_242, %c0_243, %c0_244] : memref<4x1x32xf32, #tpu.memory_space<vmem>>, vector<1x1x32xf32>
    %368 = vector.shape_cast %367 : vector<1x1x32xf32> to vector<1x32xf32>
    %369 = vector.broadcast %368 : vector<1x32xf32> to vector<8x32xf32>
    %370 = arith.addf %366, %369 : vector<8x32xf32>
    %c2_245 = arith.constant 2 : index
    %c0_246 = arith.constant 0 : index
    %c0_247 = arith.constant 0 : index
    %371 = vector.load %arg9[%c2_245, %c0_246, %c0_247] : memref<4x64x32xf32, #tpu.memory_space<vmem>>, vector<1x64x32xf32>
    %372 = vector.shape_cast %371 : vector<1x64x32xf32> to vector<64x32xf32>
    %cst_248 = arith.constant dense<0.000000e+00> : vector<8x32xf32>
    %373 = tpu.matmul %355, %372, %cst_248 {dimension_numbers = #tpu.dot_dimension_numbers<[1], [0], [0], [1], [0, 0, 1, 1], [], []>} : vector<8x64xf32>, vector<64x32xf32>, vector<8x32xf32> -> vector<8x32xf32>
    %c2_249 = arith.constant 2 : index
    %c0_250 = arith.constant 0 : index
    %c0_251 = arith.constant 0 : index
    %374 = vector.load %arg10[%c2_249, %c0_250, %c0_251] : memref<4x1x32xf32, #tpu.memory_space<vmem>>, vector<1x1x32xf32>
    %375 = vector.shape_cast %374 : vector<1x1x32xf32> to vector<1x32xf32>
    %376 = vector.broadcast %375 : vector<1x32xf32> to vector<8x32xf32>
    %377 = arith.addf %373, %376 : vector<8x32xf32>
    %378 = tpu.transpose %370, [1, 0] : vector<8x32xf32> -> vector<32x8xf32>
    %cst_252 = arith.constant dense<0.000000e+00> : vector<8x8xf32>
    %379 = tpu.matmul %363, %378, %cst_252 {dimension_numbers = #tpu.dot_dimension_numbers<[1], [0], [0], [1], [0, 0, 1, 1], [], []>} : vector<8x32xf32>, vector<32x8xf32>, vector<8x8xf32> -> vector<8x8xf32>
    %cst_253 = arith.constant 0.176776692 : f32
    %380 = vector.broadcast %cst_253 : f32 to vector<8x8xf32>
    %381 = arith.mulf %379, %380 : vector<8x8xf32>
    %382 = arith.addf %381, %356 : vector<8x8xf32>
    %cst_254 = arith.constant dense<0xFF800000> : vector<8xf32>
    %383 = vector.multi_reduction <maximumf>, %382, %cst_254 [1] : vector<8x8xf32> to vector<8xf32>
    %384 = vector.shape_cast %383 : vector<8xf32> to vector<8x1xf32>
    %385 = vector.broadcast %384 : vector<8x1xf32> to vector<8x8xf32>
    %386 = arith.subf %382, %385 : vector<8x8xf32>
    %387 = math.exp %386 : vector<8x8xf32>
    %cst_255 = arith.constant dense<0.000000e+00> : vector<8xf32>
    %388 = vector.multi_reduction <add>, %387, %cst_255 [1] : vector<8x8xf32> to vector<8xf32>
    %389 = vector.shape_cast %388 : vector<8xf32> to vector<8x1xf32>
    %390 = tpu.reciprocal %389 {approx = true} : vector<8x1xf32> -> vector<8x1xf32>
    %391 = vector.broadcast %390 : vector<8x1xf32> to vector<8x8xf32>
    %392 = arith.mulf %387, %391 : vector<8x8xf32>
    %cst_256 = arith.constant dense<0.000000e+00> : vector<8x32xf32>
    %393 = tpu.matmul %392, %377, %cst_256 {dimension_numbers = #tpu.dot_dimension_numbers<[1], [0], [0], [1], [0, 0, 1, 1], [], []>} : vector<8x8xf32>, vector<8x32xf32>, vector<8x32xf32> -> vector<8x32xf32>
    %c2_257 = arith.constant 2 : index
    %c0_258 = arith.constant 0 : index
    %c0_259 = arith.constant 0 : index
    %394 = vector.load %arg11[%c2_257, %c0_258, %c0_259] : memref<4x32x64xf32, #tpu.memory_space<vmem>>, vector<1x32x64xf32>
    %395 = vector.shape_cast %394 : vector<1x32x64xf32> to vector<32x64xf32>
    %cst_260 = arith.constant dense<0.000000e+00> : vector<8x64xf32>
    %396 = tpu.matmul %393, %395, %cst_260 {dimension_numbers = #tpu.dot_dimension_numbers<[1], [0], [0], [1], [0, 0, 1, 1], [], []>} : vector<8x32xf32>, vector<32x64xf32>, vector<8x64xf32> -> vector<8x64xf32>
    %c3_261 = arith.constant 3 : index
    %c0_262 = arith.constant 0 : index
    %c0_263 = arith.constant 0 : index
    %397 = vector.load %arg5[%c3_261, %c0_262, %c0_263] : memref<4x64x32xf32, #tpu.memory_space<vmem>>, vector<1x64x32xf32>
    %398 = vector.shape_cast %397 : vector<1x64x32xf32> to vector<64x32xf32>
    %cst_264 = arith.constant dense<0.000000e+00> : vector<8x32xf32>
    %399 = tpu.matmul %355, %398, %cst_264 {dimension_numbers = #tpu.dot_dimension_numbers<[1], [0], [0], [1], [0, 0, 1, 1], [], []>} : vector<8x64xf32>, vector<64x32xf32>, vector<8x32xf32> -> vector<8x32xf32>
    %c3_265 = arith.constant 3 : index
    %c0_266 = arith.constant 0 : index
    %c0_267 = arith.constant 0 : index
    %400 = vector.load %arg6[%c3_265, %c0_266, %c0_267] : memref<4x1x32xf32, #tpu.memory_space<vmem>>, vector<1x1x32xf32>
    %401 = vector.shape_cast %400 : vector<1x1x32xf32> to vector<1x32xf32>
    %402 = vector.broadcast %401 : vector<1x32xf32> to vector<8x32xf32>
    %403 = arith.addf %399, %402 : vector<8x32xf32>
    %c3_268 = arith.constant 3 : index
    %c0_269 = arith.constant 0 : index
    %c0_270 = arith.constant 0 : index
    %404 = vector.load %arg7[%c3_268, %c0_269, %c0_270] : memref<4x64x32xf32, #tpu.memory_space<vmem>>, vector<1x64x32xf32>
    %405 = vector.shape_cast %404 : vector<1x64x32xf32> to vector<64x32xf32>
    %cst_271 = arith.constant dense<0.000000e+00> : vector<8x32xf32>
    %406 = tpu.matmul %355, %405, %cst_271 {dimension_numbers = #tpu.dot_dimension_numbers<[1], [0], [0], [1], [0, 0, 1, 1], [], []>} : vector<8x64xf32>, vector<64x32xf32>, vector<8x32xf32> -> vector<8x32xf32>
    %c3_272 = arith.constant 3 : index
    %c0_273 = arith.constant 0 : index
    %c0_274 = arith.constant 0 : index
    %407 = vector.load %arg8[%c3_272, %c0_273, %c0_274] : memref<4x1x32xf32, #tpu.memory_space<vmem>>, vector<1x1x32xf32>
    %408 = vector.shape_cast %407 : vector<1x1x32xf32> to vector<1x32xf32>
    %409 = vector.broadcast %408 : vector<1x32xf32> to vector<8x32xf32>
    %410 = arith.addf %406, %409 : vector<8x32xf32>
    %c3_275 = arith.constant 3 : index
    %c0_276 = arith.constant 0 : index
    %c0_277 = arith.constant 0 : index
    %411 = vector.load %arg9[%c3_275, %c0_276, %c0_277] : memref<4x64x32xf32, #tpu.memory_space<vmem>>, vector<1x64x32xf32>
    %412 = vector.shape_cast %411 : vector<1x64x32xf32> to vector<64x32xf32>
    %cst_278 = arith.constant dense<0.000000e+00> : vector<8x32xf32>
    %413 = tpu.matmul %355, %412, %cst_278 {dimension_numbers = #tpu.dot_dimension_numbers<[1], [0], [0], [1], [0, 0, 1, 1], [], []>} : vector<8x64xf32>, vector<64x32xf32>, vector<8x32xf32> -> vector<8x32xf32>
    %c3_279 = arith.constant 3 : index
    %c0_280 = arith.constant 0 : index
    %c0_281 = arith.constant 0 : index
    %414 = vector.load %arg10[%c3_279, %c0_280, %c0_281] : memref<4x1x32xf32, #tpu.memory_space<vmem>>, vector<1x1x32xf32>
    %415 = vector.shape_cast %414 : vector<1x1x32xf32> to vector<1x32xf32>
    %416 = vector.broadcast %415 : vector<1x32xf32> to vector<8x32xf32>
    %417 = arith.addf %413, %416 : vector<8x32xf32>
    %418 = tpu.transpose %410, [1, 0] : vector<8x32xf32> -> vector<32x8xf32>
    %cst_282 = arith.constant dense<0.000000e+00> : vector<8x8xf32>
    %419 = tpu.matmul %403, %418, %cst_282 {dimension_numbers = #tpu.dot_dimension_numbers<[1], [0], [0], [1], [0, 0, 1, 1], [], []>} : vector<8x32xf32>, vector<32x8xf32>, vector<8x8xf32> -> vector<8x8xf32>
    %cst_283 = arith.constant 0.176776692 : f32
    %420 = vector.broadcast %cst_283 : f32 to vector<8x8xf32>
    %421 = arith.mulf %419, %420 : vector<8x8xf32>
    %422 = arith.addf %421, %356 : vector<8x8xf32>
    %cst_284 = arith.constant dense<0xFF800000> : vector<8xf32>
    %423 = vector.multi_reduction <maximumf>, %422, %cst_284 [1] : vector<8x8xf32> to vector<8xf32>
    %424 = vector.shape_cast %423 : vector<8xf32> to vector<8x1xf32>
    %425 = vector.broadcast %424 : vector<8x1xf32> to vector<8x8xf32>
    %426 = arith.subf %422, %425 : vector<8x8xf32>
    %427 = math.exp %426 : vector<8x8xf32>
    %cst_285 = arith.constant dense<0.000000e+00> : vector<8xf32>
    %428 = vector.multi_reduction <add>, %427, %cst_285 [1] : vector<8x8xf32> to vector<8xf32>
    %429 = vector.shape_cast %428 : vector<8xf32> to vector<8x1xf32>
    %430 = tpu.reciprocal %429 {approx = true} : vector<8x1xf32> -> vector<8x1xf32>
    %431 = vector.broadcast %430 : vector<8x1xf32> to vector<8x8xf32>
    %432 = arith.mulf %427, %431 : vector<8x8xf32>
    %cst_286 = arith.constant dense<0.000000e+00> : vector<8x32xf32>
    %433 = tpu.matmul %432, %417, %cst_286 {dimension_numbers = #tpu.dot_dimension_numbers<[1], [0], [0], [1], [0, 0, 1, 1], [], []>} : vector<8x8xf32>, vector<8x32xf32>, vector<8x32xf32> -> vector<8x32xf32>
    %c3_287 = arith.constant 3 : index
    %c0_288 = arith.constant 0 : index
    %c0_289 = arith.constant 0 : index
    %434 = vector.load %arg11[%c3_287, %c0_288, %c0_289] : memref<4x32x64xf32, #tpu.memory_space<vmem>>, vector<1x32x64xf32>
    %435 = vector.shape_cast %434 : vector<1x32x64xf32> to vector<32x64xf32>
    %cst_290 = arith.constant dense<0.000000e+00> : vector<8x64xf32>
    %436 = tpu.matmul %433, %435, %cst_290 {dimension_numbers = #tpu.dot_dimension_numbers<[1], [0], [0], [1], [0, 0, 1, 1], [], []>} : vector<8x32xf32>, vector<32x64xf32>, vector<8x64xf32> -> vector<8x64xf32>
    %437 = arith.addf %396, %436 : vector<8x64xf32>
    %438 = tpu.concatenate %354, %437 in 0 : vector<8x64xf32>, vector<8x64xf32> -> vector<16x64xf32>
    %c1_291 = arith.constant 1 : index
    %c0_292 = arith.constant 0 : index
    %c0_293 = arith.constant 0 : index
    %439 = vector.load %arg12[%c1_291, %c0_292, %c0_293] : memref<2x1x64xf32, #tpu.memory_space<vmem>>, vector<1x1x64xf32>
    %440 = vector.shape_cast %439 : vector<1x1x64xf32> to vector<1x64xf32>
    %441 = vector.broadcast %440 : vector<1x64xf32> to vector<16x64xf32>
    %442 = arith.addf %438, %441 : vector<16x64xf32>
    %443 = arith.addf %271, %442 : vector<16x64xf32>
    %c1_294 = arith.constant 1 : index
    %c0_295 = arith.constant 0 : index
    %c0_296 = arith.constant 0 : index
    %444 = vector.load %arg13[%c1_294, %c0_295, %c0_296] : memref<2x1x64xf32, #tpu.memory_space<vmem>>, vector<1x1x64xf32>
    %445 = vector.shape_cast %444 : vector<1x1x64xf32> to vector<1x64xf32>
    %c1_297 = arith.constant 1 : index
    %c0_298 = arith.constant 0 : index
    %c0_299 = arith.constant 0 : index
    %446 = vector.load %arg14[%c1_297, %c0_298, %c0_299] : memref<2x1x64xf32, #tpu.memory_space<vmem>>, vector<1x1x64xf32>
    %447 = vector.shape_cast %446 : vector<1x1x64xf32> to vector<1x64xf32>
    %cst_300 = arith.constant dense<0.000000e+00> : vector<16xf32>
    %448 = vector.multi_reduction <add>, %443, %cst_300 [1] : vector<16x64xf32> to vector<16xf32>
    %449 = vector.shape_cast %448 : vector<16xf32> to vector<16x1xf32>
    %cst_301 = arith.constant 6.400000e+01 : f32
    %450 = vector.broadcast %cst_301 : f32 to vector<16x1xf32>
    %451 = arith.divf %449, %450 : vector<16x1xf32>
    %452 = vector.broadcast %451 : vector<16x1xf32> to vector<16x64xf32>
    %453 = arith.subf %443, %452 : vector<16x64xf32>
    %454 = arith.mulf %453, %453 : vector<16x64xf32>
    %cst_302 = arith.constant dense<0.000000e+00> : vector<16xf32>
    %455 = vector.multi_reduction <add>, %454, %cst_302 [1] : vector<16x64xf32> to vector<16xf32>
    %456 = vector.shape_cast %455 : vector<16xf32> to vector<16x1xf32>
    %cst_303 = arith.constant 6.400000e+01 : f32
    %457 = vector.broadcast %cst_303 : f32 to vector<16x1xf32>
    %458 = arith.divf %456, %457 : vector<16x1xf32>
    %cst_304 = arith.constant 9.99999996E-13 : f32
    %459 = vector.broadcast %cst_304 : f32 to vector<16x1xf32>
    %460 = arith.addf %458, %459 : vector<16x1xf32>
    %461 = math.rsqrt %460 : vector<16x1xf32>
    %462 = vector.broadcast %461 : vector<16x1xf32> to vector<16x64xf32>
    %463 = arith.mulf %453, %462 : vector<16x64xf32>
    %464 = vector.broadcast %445 : vector<1x64xf32> to vector<16x64xf32>
    %465 = arith.mulf %463, %464 : vector<16x64xf32>
    %466 = vector.broadcast %447 : vector<1x64xf32> to vector<16x64xf32>
    %467 = arith.addf %465, %466 : vector<16x64xf32>
    %c1_305 = arith.constant 1 : index
    %c0_306 = arith.constant 0 : index
    %c0_307 = arith.constant 0 : index
    %468 = vector.load %arg15[%c1_305, %c0_306, %c0_307] : memref<2x64x128xf32, #tpu.memory_space<vmem>>, vector<1x64x128xf32>
    %469 = vector.shape_cast %468 : vector<1x64x128xf32> to vector<64x128xf32>
    %cst_308 = arith.constant dense<0.000000e+00> : vector<16x128xf32>
    %470 = tpu.matmul %467, %469, %cst_308 {dimension_numbers = #tpu.dot_dimension_numbers<[1], [0], [0], [1], [0, 0, 1, 1], [], []>} : vector<16x64xf32>, vector<64x128xf32>, vector<16x128xf32> -> vector<16x128xf32>
    %c1_309 = arith.constant 1 : index
    %c0_310 = arith.constant 0 : index
    %c0_311 = arith.constant 0 : index
    %471 = vector.load %arg16[%c1_309, %c0_310, %c0_311] : memref<2x1x128xf32, #tpu.memory_space<vmem>>, vector<1x1x128xf32>
    %472 = vector.shape_cast %471 : vector<1x1x128xf32> to vector<1x128xf32>
    %473 = vector.broadcast %472 : vector<1x128xf32> to vector<16x128xf32>
    %474 = arith.addf %470, %473 : vector<16x128xf32>
    %cst_312 = arith.constant 5.000000e-01 : f32
    %475 = vector.broadcast %cst_312 : f32 to vector<16x128xf32>
    %476 = arith.mulf %475, %474 : vector<16x128xf32>
    %cst_313 = arith.constant 4.471500e-02 : f32
    %477 = vector.broadcast %cst_313 : f32 to vector<16x128xf32>
    %478 = arith.mulf %477, %474 : vector<16x128xf32>
    %479 = arith.mulf %478, %474 : vector<16x128xf32>
    %480 = arith.mulf %479, %474 : vector<16x128xf32>
    %481 = arith.addf %474, %480 : vector<16x128xf32>
    %cst_314 = arith.constant 0.797884583 : f32
    %482 = vector.broadcast %cst_314 : f32 to vector<16x128xf32>
    %483 = arith.mulf %482, %481 : vector<16x128xf32>
    %484 = math.tanh %483 : vector<16x128xf32>
    %cst_315 = arith.constant 1.000000e+00 : f32
    %485 = vector.broadcast %cst_315 : f32 to vector<16x128xf32>
    %486 = arith.addf %485, %484 : vector<16x128xf32>
    %487 = arith.mulf %476, %486 : vector<16x128xf32>
    %c1_316 = arith.constant 1 : index
    %c0_317 = arith.constant 0 : index
    %c0_318 = arith.constant 0 : index
    %488 = vector.load %arg17[%c1_316, %c0_317, %c0_318] : memref<2x128x64xf32, #tpu.memory_space<vmem>>, vector<1x128x64xf32>
    %489 = vector.shape_cast %488 : vector<1x128x64xf32> to vector<128x64xf32>
    %cst_319 = arith.constant dense<0.000000e+00> : vector<16x64xf32>
    %490 = tpu.matmul %487, %489, %cst_319 {dimension_numbers = #tpu.dot_dimension_numbers<[1], [0], [0], [1], [0, 0, 1, 1], [], []>} : vector<16x128xf32>, vector<128x64xf32>, vector<16x64xf32> -> vector<16x64xf32>
    %c1_320 = arith.constant 1 : index
    %c0_321 = arith.constant 0 : index
    %c0_322 = arith.constant 0 : index
    %491 = vector.load %arg18[%c1_320, %c0_321, %c0_322] : memref<2x1x64xf32, #tpu.memory_space<vmem>>, vector<1x1x64xf32>
    %492 = vector.shape_cast %491 : vector<1x1x64xf32> to vector<1x64xf32>
    %493 = vector.broadcast %492 : vector<1x64xf32> to vector<16x64xf32>
    %494 = arith.addf %490, %493 : vector<16x64xf32>
    %495 = arith.addf %467, %494 : vector<16x64xf32>
    %c1_323 = arith.constant 1 : index
    %c0_324 = arith.constant 0 : index
    %c0_325 = arith.constant 0 : index
    %496 = vector.load %arg19[%c1_323, %c0_324, %c0_325] : memref<2x1x64xf32, #tpu.memory_space<vmem>>, vector<1x1x64xf32>
    %497 = vector.shape_cast %496 : vector<1x1x64xf32> to vector<1x64xf32>
    %c1_326 = arith.constant 1 : index
    %c0_327 = arith.constant 0 : index
    %c0_328 = arith.constant 0 : index
    %498 = vector.load %arg20[%c1_326, %c0_327, %c0_328] : memref<2x1x64xf32, #tpu.memory_space<vmem>>, vector<1x1x64xf32>
    %499 = vector.shape_cast %498 : vector<1x1x64xf32> to vector<1x64xf32>
    %cst_329 = arith.constant dense<0.000000e+00> : vector<16xf32>
    %500 = vector.multi_reduction <add>, %495, %cst_329 [1] : vector<16x64xf32> to vector<16xf32>
    %501 = vector.shape_cast %500 : vector<16xf32> to vector<16x1xf32>
    %cst_330 = arith.constant 6.400000e+01 : f32
    %502 = vector.broadcast %cst_330 : f32 to vector<16x1xf32>
    %503 = arith.divf %501, %502 : vector<16x1xf32>
    %504 = vector.broadcast %503 : vector<16x1xf32> to vector<16x64xf32>
    %505 = arith.subf %495, %504 : vector<16x64xf32>
    %506 = arith.mulf %505, %505 : vector<16x64xf32>
    %cst_331 = arith.constant dense<0.000000e+00> : vector<16xf32>
    %507 = vector.multi_reduction <add>, %506, %cst_331 [1] : vector<16x64xf32> to vector<16xf32>
    %508 = vector.shape_cast %507 : vector<16xf32> to vector<16x1xf32>
    %cst_332 = arith.constant 6.400000e+01 : f32
    %509 = vector.broadcast %cst_332 : f32 to vector<16x1xf32>
    %510 = arith.divf %508, %509 : vector<16x1xf32>
    %cst_333 = arith.constant 9.99999996E-13 : f32
    %511 = vector.broadcast %cst_333 : f32 to vector<16x1xf32>
    %512 = arith.addf %510, %511 : vector<16x1xf32>
    %513 = math.rsqrt %512 : vector<16x1xf32>
    %514 = vector.broadcast %513 : vector<16x1xf32> to vector<16x64xf32>
    %515 = arith.mulf %505, %514 : vector<16x64xf32>
    %516 = vector.broadcast %497 : vector<1x64xf32> to vector<16x64xf32>
    %517 = arith.mulf %515, %516 : vector<16x64xf32>
    %518 = vector.broadcast %499 : vector<1x64xf32> to vector<16x64xf32>
    %519 = arith.addf %517, %518 : vector<16x64xf32>
    %c0_334 = arith.constant 0 : index
    %c0_335 = arith.constant 0 : index
    %520 = vector.load %arg2[%c0_334, %c0_335] : memref<2x16xf32, #tpu.memory_space<vmem>>, vector<2x16xf32>
    %cst_336 = arith.constant dense<0.000000e+00> : vector<2x64xf32>
    %521 = tpu.matmul %520, %519, %cst_336 {dimension_numbers = #tpu.dot_dimension_numbers<[1], [0], [0], [1], [0, 0, 1, 1], [], []>} : vector<2x16xf32>, vector<16x64xf32>, vector<2x64xf32> -> vector<2x64xf32>
    %c0_337 = arith.constant 0 : index
    %c0_338 = arith.constant 0 : index
    %522 = vector.load %arg21[%c0_337, %c0_338] : memref<64x128xf32, #tpu.memory_space<vmem>>, vector<64x128xf32>
    %cst_339 = arith.constant dense<0.000000e+00> : vector<2x128xf32>
    %523 = tpu.matmul %521, %522, %cst_339 {dimension_numbers = #tpu.dot_dimension_numbers<[1], [0], [0], [1], [0, 0, 1, 1], [], []>} : vector<2x64xf32>, vector<64x128xf32>, vector<2x128xf32> -> vector<2x128xf32>
    %c0_340 = arith.constant 0 : index
    %c0_341 = arith.constant 0 : index
    %524 = vector.load %arg22[%c0_340, %c0_341] : memref<1x128xf32, #tpu.memory_space<vmem>>, vector<1x128xf32>
    %525 = vector.broadcast %524 : vector<1x128xf32> to vector<2x128xf32>
    %526 = arith.addf %523, %525 : vector<2x128xf32>
    %c0_342 = arith.constant 0 : index
    %c0_343 = arith.constant 0 : index
    %527 = vector.load %arg23[%c0_342, %c0_343] : memref<2x128xf32, #tpu.memory_space<vmem>>, vector<2x128xf32>
    tpu.vector_store %arg23[%c0_342, %c0_343], %526 {strides = array<i32>} : memref<2x128xf32, #tpu.memory_space<vmem>>, vector<2x128xf32>,
    return
  }
}

</mosaic_0001>

<llo_original>
// kernel: intent_classifier.1
$region0: #{intent_classifier.1}
  #allocation0 [shape = 'u32[]', space=smem, size = 0x4, offset = 0x4, fixed_abs, tag = 'smem constant byte address 0x4 - core index']
  #allocation1 [shape = 'u32[144,128]{1,0:T(1,128)}', space=vmem, size = 0x12000, scoped, tag = 'internal scratch']
  %s0 = inlined_call_operand.vmem [shape: f32[16,64], index: 0, kind: input, shape index: {}]
  %s1 = inlined_call_operand.vmem [shape: f32[16,8], index: 1, kind: input, shape index: {}]
  %s2 = inlined_call_operand.vmem [shape: f32[2,16], index: 2, kind: input, shape index: {}]
  %s3 = inlined_call_operand.vmem [shape: f32[1,64], index: 3, kind: input, shape index: {}]
  %s4 = inlined_call_operand.vmem [shape: f32[1,64], index: 4, kind: input, shape index: {}]
  %s5 = inlined_call_operand.vmem [shape: f32[4,64,32], index: 5, kind: input, shape index: {}]
  %s6 = inlined_call_operand.vmem [shape: f32[4,1,32], index: 6, kind: input, shape index: {}]
  %s7 = inlined_call_operand.vmem [shape: f32[4,64,32], index: 7, kind: input, shape index: {}]
  %s8 = inlined_call_operand.vmem [shape: f32[4,1,32], index: 8, kind: input, shape index: {}]
  %s9 = inlined_call_operand.vmem [shape: f32[4,64,32], index: 9, kind: input, shape index: {}]
  %s10 = inlined_call_operand.vmem [shape: f32[4,1,32], index: 10, kind: input, shape index: {}]
  %s11 = inlined_call_operand.vmem [shape: f32[4,32,64], index: 11, kind: input, shape index: {}]
  %s12 = inlined_call_operand.vmem [shape: f32[2,1,64], index: 12, kind: input, shape index: {}]
  %s13 = inlined_call_operand.vmem [shape: f32[2,1,64], index: 13, kind: input, shape index: {}]
  %s14 = inlined_call_operand.vmem [shape: f32[2,1,64], index: 14, kind: input, shape index: {}]
  %s15 = inlined_call_operand.vmem [shape: f32[2,64,128], index: 15, kind: input, shape index: {}]
  %s16 = inlined_call_operand.vmem [shape: f32[2,1,128], index: 16, kind: input, shape index: {}]
  %s17 = inlined_call_operand.vmem [shape: f32[2,128,64], index: 17, kind: input, shape index: {}]
  %s18 = inlined_call_operand.vmem [shape: f32[2,1,64], index: 18, kind: input, shape index: {}]
  %s19 = inlined_call_operand.vmem [shape: f32[2,1,64], index: 19, kind: input, shape index: {}]
  %s20 = inlined_call_operand.vmem [shape: f32[2,1,64], index: 20, kind: input, shape index: {}]
  %s21 = inlined_call_operand.vmem [shape: f32[64,128], index: 21, kind: input, shape index: {}]
  %s22 = inlined_call_operand.vmem [shape: f32[1,128], index: 22, kind: input, shape index: {}]
  %s23 = inlined_call_operand.hbm [shape: f32[2,128], index: 23, kind: output, shape index: {}]
  %s24 = sld [smem:[#allocation0]]
  $region102: #{intent_classifier.1} parent=0
    _
  %s26 = ssub.s32 1, %s24
  %s27 = scalar_select 0, %s26, %s24
  $region1: #{intent_classifier.1} parent=0
    #allocation2 [shape = 'u8[1024]{0}', space=vmem, size = 0x400, scoped, tag = 'output window, operand 0, single buffered']
    #allocation3 [shape = 's32[1]{0}', space=sflag, size = 0x4, scoped, tag = 'scoped memory for intent_classifier.1']
    %28 = vsyncpa [#allocation3], 0
    // Predicated region
    $region2: #{intent_classifier.1} parent=1 // pred_check
      _
    $region3: #{intent_classifier.1} parent=1 // pred_check_branch
      %30 = sbr.rel (0) target = $region5
    $region4: #{intent_classifier.1} parent=1 // pred_region
      _
    $region5: #{intent_classifier.1} parent=1 // pred_fallthru
      _
    // Predicated region
    $region6: #{intent_classifier.1} parent=1 // pred_check
      _
    $region7: #{intent_classifier.1} parent=1 // pred_check_branch
      %32 = sbr.rel (0) target = $region9
    $region8: #{intent_classifier.1} parent=1 // pred_region
      _
    $region9: #{intent_classifier.1} parent=1 // pred_fallthru
      _
    // Predicated region
    $region10: #{intent_classifier.1} parent=1 // pred_check
      _
    $region11: #{intent_classifier.1} parent=1 // pred_check_branch
      %34 = sbr.rel (0) target = $region13
    $region12: #{intent_classifier.1} parent=1 // pred_region
      _
    $region13: #{intent_classifier.1} parent=1 // pred_fallthru
      _
    // Predicated region
    $region14: #{intent_classifier.1} parent=1 // pred_check
      _
    $region15: #{intent_classifier.1} parent=1 // pred_check_branch
      %36 = sbr.rel (0) target = $region17
    $region16: #{intent_classifier.1} parent=1 // pred_region
      _
    $region17: #{intent_classifier.1} parent=1 // pred_fallthru
      _
    // Predicated region
    $region18: #{intent_classifier.1} parent=1 // pred_check
      _
    $region19: #{intent_classifier.1} parent=1 // pred_check_branch
      %38 = sbr.rel (0) target = $region21
    $region20: #{intent_classifier.1} parent=1 // pred_region
      _
    $region21: #{intent_classifier.1} parent=1 // pred_fallthru
      _
    // Predicated region
    $region22: #{intent_classifier.1} parent=1 // pred_check
      _
    $region23: #{intent_classifier.1} parent=1 // pred_check_branch
      %40 = sbr.rel (0) target = $region25
    $region24: #{intent_classifier.1} parent=1 // pred_region
      _
    $region25: #{intent_classifier.1} parent=1 // pred_fallthru
      _
    // Predicated region
    $region26: #{intent_classifier.1} parent=1 // pred_check
      _
    $region27: #{intent_classifier.1} parent=1 // pred_check_branch
      %42 = sbr.rel (0) target = $region29
    $region28: #{intent_classifier.1} parent=1 // pred_region
      _
    $region29: #{intent_classifier.1} parent=1 // pred_fallthru
      _
    // Predicated region
    $region30: #{intent_classifier.1} parent=1 // pred_check
      _
    $region31: #{intent_classifier.1} parent=1 // pred_check_branch
      %44 = sbr.rel (0) target = $region33
    $region32: #{intent_classifier.1} parent=1 // pred_region
      _
    $region33: #{intent_classifier.1} parent=1 // pred_fallthru
      _
    // Predicated region
    $region34: #{intent_classifier.1} parent=1 // pred_check
      _
    $region35: #{intent_classifier.1} parent=1 // pred_check_branch
      %46 = sbr.rel (0) target = $region37
    $region36: #{intent_classifier.1} parent=1 // pred_region
      _
    $region37: #{intent_classifier.1} parent=1 // pred_fallthru
      _
    // Predicated region
    $region38: #{intent_classifier.1} parent=1 // pred_check
      _
    $region39: #{intent_classifier.1} parent=1 // pred_check_branch
      %48 = sbr.rel (0) target = $region41
    $region40: #{intent_classifier.1} parent=1 // pred_region
      _
    $region41: #{intent_classifier.1} parent=1 // pred_fallthru
      _
    // Predicated region
    $region42: #{intent_classifier.1} parent=1 // pred_check
      _
    $region43: #{intent_classifier.1} parent=1 // pred_check_branch
      %50 = sbr.rel (0) target = $region45
    $region44: #{intent_classifier.1} parent=1 // pred_region
      _
    $region45: #{intent_classifier.1} parent=1 // pred_fallthru
      _
    // Predicated region
    $region46: #{intent_classifier.1} parent=1 // pred_check
      _
    $region47: #{intent_classifier.1} parent=1 // pred_check_branch
      %52 = sbr.rel (0) target = $region49
    $region48: #{intent_classifier.1} parent=1 // pred_region
      _
    $region49: #{intent_classifier.1} parent=1 // pred_fallthru
      _
    // Predicated region
    $region50: #{intent_classifier.1} parent=1 // pred_check
      _
    $region51: #{intent_classifier.1} parent=1 // pred_check_branch
      %54 = sbr.rel (0) target = $region53
    $region52: #{intent_classifier.1} parent=1 // pred_region
      _
    $region53: #{intent_classifier.1} parent=1 // pred_fallthru
      _
    // Predicated region
    $region54: #{intent_classifier.1} parent=1 // pred_check
      _
    $region55: #{intent_classifier.1} parent=1 // pred_check_branch
      %56 = sbr.rel (0) target = $region57
    $region56: #{intent_classifier.1} parent=1 // pred_region
      _
    $region57: #{intent_classifier.1} parent=1 // pred_fallthru
      _
    // Predicated region
    $region58: #{intent_classifier.1} parent=1 // pred_check
      _
    $region59: #{intent_classifier.1} parent=1 // pred_check_branch
      %58 = sbr.rel (0) target = $region61
    $region60: #{intent_classifier.1} parent=1 // pred_region
      _
    $region61: #{intent_classifier.1} parent=1 // pred_fallthru
      _
    // Predicated region
    $region62: #{intent_classifier.1} parent=1 // pred_check
      _
    $region63: #{intent_classifier.1} parent=1 // pred_check_branch
      %60 = sbr.rel (0) target = $region65
    $region64: #{intent_classifier.1} parent=1 // pred_region
      _
    $region65: #{intent_classifier.1} parent=1 // pred_fallthru
      _
    // Predicated region
    $region66: #{intent_classifier.1} parent=1 // pred_check
      _
    $region67: #{intent_classifier.1} parent=1 // pred_check_branch
      %62 = sbr.rel (0) target = $region69
    $region68: #{intent_classifier.1} parent=1 // pred_region
      _
    $region69: #{intent_classifier.1} parent=1 // pred_fallthru
      _
    // Predicated region
    $region70: #{intent_classifier.1} parent=1 // pred_check
      _
    $region71: #{intent_classifier.1} parent=1 // pred_check_branch
      %64 = sbr.rel (0) target = $region73
    $region72: #{intent_classifier.1} parent=1 // pred_region
      _
    $region73: #{intent_classifier.1} parent=1 // pred_fallthru
      _
    // Predicated region
    $region74: #{intent_classifier.1} parent=1 // pred_check
      _
    $region75: #{intent_classifier.1} parent=1 // pred_check_branch
      %66 = sbr.rel (0) target = $region77
    $region76: #{intent_classifier.1} parent=1 // pred_region
      _
    $region77: #{intent_classifier.1} parent=1 // pred_fallthru
      _
    // Predicated region
    $region78: #{intent_classifier.1} parent=1 // pred_check
      _
    $region79: #{intent_classifier.1} parent=1 // pred_check_branch
      %68 = sbr.rel (0) target = $region81
    $region80: #{intent_classifier.1} parent=1 // pred_region
      _
    $region81: #{intent_classifier.1} parent=1 // pred_fallthru
      _
    // Predicated region
    $region82: #{intent_classifier.1} parent=1 // pred_check
      _
    $region83: #{intent_classifier.1} parent=1 // pred_check_branch
      %70 = sbr.rel (0) target = $region85
    $region84: #{intent_classifier.1} parent=1 // pred_region
      _
    $region85: #{intent_classifier.1} parent=1 // pred_fallthru
      _
    // Predicated region
    $region86: #{intent_classifier.1} parent=1 // pred_check
      _
    $region87: #{intent_classifier.1} parent=1 // pred_check_branch
      %72 = sbr.rel (0) target = $region89
    $region88: #{intent_classifier.1} parent=1 // pred_region
      _
    $region89: #{intent_classifier.1} parent=1 // pred_fallthru
      _
    // Predicated region
    $region90: #{intent_classifier.1} parent=1 // pred_check
      _
    $region91: #{intent_classifier.1} parent=1 // pred_check_branch
      %74 = sbr.rel (0) target = $region93
    $region92: #{intent_classifier.1} parent=1 // pred_region
      _
    $region93: #{intent_classifier.1} parent=1 // pred_fallthru
      _
    %v75 = vld [vmem:[%s0] sm:$0xff]
    %v76 = vld [vmem:[%s0 + $0x8] sm:$0xff]
    %v77 = vld [vmem:[%s3] sm:$0x1]
    %v78 = vld [vmem:[%s4] sm:$0x1]
    %vm79 = vcmask 523264
    %v80 = vsel %vm79, %v75, 0.0
    %81 = vadd.xlane.f32.xlu0 %v80
    %v82 = vpop.xlane.xlu0 %81
    %v83 = vsel %vm79, %v76, 0.0
    %84 = vadd.xlane.f32.xlu0 %v83
    %v85 = vpop.xlane.xlu0 %84
    %v86 = vrcp.pop 64.0
    %v87 = vmul.f32 %v82, %v86
    %v88 = vmul.f32 %v85, %v86
    %v89 = vsub.f32 %v75, %v87
    %v90 = vsub.f32 %v76, %v88
    %v91 = vmul.f32 %v89, %v89
    %v92 = vmul.f32 %v90, %v90
    %v93 = vsel %vm79, %v91, 0.0
    %94 = vadd.xlane.f32.xlu0 %v93
    %v95 = vpop.xlane.xlu0 %94
    %v96 = vsel %vm79, %v92, 0.0
    %97 = vadd.xlane.f32.xlu0 %v96
    %v98 = vpop.xlane.xlu0 %97
    %v99 = vmul.f32 %v95, %v86
    %v100 = vmul.f32 %v98, %v86
    %v101 = vadd.f32 %v99, 1e-12
    %v102 = vadd.f32 %v100, 1e-12
    %v103 = vrsqrt.pop %v101
    %v104 = vrsqrt.pop %v102
    %v105 = vmul.f32 %v89, %v103
    %v106 = vmul.f32 %v90, %v104
    %v108 = vlaneseq
    %v109 = vshrl.u32 %v108, 7
    %v110 = vsub.s32 0, %v109
    %v111 = vrot.slane %v77, %v110
    %v113 = vmul.f32 %v105, %v111
    %v114 = vmul.f32 %v106, %v111
    %v116 = vlaneseq
    %v117 = vshrl.u32 %v116, 7
    %v118 = vsub.s32 0, %v117
    %v119 = vrot.slane %v78, %v118
    %v121 = vadd.f32 %v113, %v119
    %v122 = vadd.f32 %v114, %v119
    %v123 = vld [vmem:[%s1] sm:$0xff]
    %v124 = vld [vmem:[%s1 + $0x8] sm:$0xff]
    %v125 = vld [vmem:[%s5] sm:$0xff]
    %v126 = vld [vmem:[%s5 + $0x8] sm:$0xff]
    %v127 = vld [vmem:[%s5 + $0x10] sm:$0xff]
    %v128 = vld [vmem:[%s5 + $0x18] sm:$0xff]
    %v129 = vld [vmem:[%s5 + $0x20] sm:$0xff]
    %v130 = vld [vmem:[%s5 + $0x28] sm:$0xff]
    %v131 = vld [vmem:[%s5 + $0x30] sm:$0xff]
    %v132 = vld [vmem:[%s5 + $0x38] sm:$0xff]
    %v133 = vld [vmem:[%s6] sm:$0x1]
    %v135 = vlaneseq
    %v136 = vshrl.u32 %v135, 7
    %v137 = vsub.s32 0, %v136
    %v138 = vrot.slane %v133, %v137
    %v141 = vsel %vm79, %v121, 0
    %143 = vmatprep.subr.mxu0 0.0
    %144 = vmatpush1.msra.mxu0 %v125
    %145 = vmatprep.subr.mxu0 0.0
    %146 = vmatpush1.msra.mxu0 %v126
    %147 = vmatprep.subr.mxu0 0.0
    %148 = vmatpush1.msra.mxu0 %v127
    %149 = vmatprep.subr.mxu0 0.0
    %150 = vmatpush1.msra.mxu0 %v128
    %151 = vmatprep.subr.mxu0 0.0
    %152 = vmatpush1.msra.mxu0 %v129
    %153 = vmatprep.subr.mxu0 0.0
    %154 = vmatpush1.msra.mxu0 %v130
    %155 = vmatprep.subr.mxu0 0.0
    %156 = vmatpush1.msra.mxu0 %v131
    %157 = vmatprep.subr.mxu0 0.0
    %158 = vmatpush1.msra.mxu0 %v132
    %159 = vmatprep.subr.mxu0 0.0
    %160 = vmatpush1.msra.mxu0 0.0
    %161 = vmatprep.subr.mxu0 0.0
    %162 = vmatpush1.msra.mxu0 0.0
    %163 = vmatprep.subr.mxu0 0.0
    %164 = vmatpush1.msra.mxu0 0.0
    %165 = vmatprep.subr.mxu0 0.0
    %166 = vmatpush1.msra.mxu0 0.0
    %167 = vmatprep.subr.mxu0 0.0
    %168 = vmatpush1.msra.mxu0 0.0
    %169 = vmatprep.subr.mxu0 0.0
    %170 = vmatpush1.msra.mxu0 0.0
    %171 = vmatprep.subr.mxu0 0.0
    %172 = vmatpush1.msra.mxu0 0.0
    %173 = vmatprep.subr.mxu0 0.0
    %174 = vmatpush1.msra.mxu0 0.0
    %175 = vmatprep.subr.mxu0 0.0
    %176 = vmatpush1.msra.mxu0 0.0
    %177 = vmatprep.subr.mxu0 0.0
    %178 = vmatpush1.msra.mxu0 0.0
    %179 = vmatprep.subr.mxu0 0.0
    %180 = vmatpush1.msra.mxu0 0.0
    %181 = vmatprep.subr.mxu0 0.0
    %182 = vmatpush1.msra.mxu0 0.0
    %183 = vmatprep.subr.mxu0 0.0
    %184 = vmatpush1.msra.mxu0 0.0
    %185 = vmatprep.subr.mxu0 0.0
    %186 = vmatpush1.msra.mxu0 0.0
    %187 = vmatprep.subr.mxu0 0.0
    %188 = vmatpush1.msra.mxu0 0.0
    %189 = vmatprep.subr.mxu0 0.0
    %190 = vmatpush1.msra.mxu0 0.0
    %191 = vmatprep.subr.mxu0 0.0
    %192 = vmatpush1.msra.mxu0 0.0
    %193 = vmatprep.subr.mxu0 0.0
    %194 = vmatpush1.msra.mxu0 0.0
    %195 = vmatprep.subr.mxu0 0.0
    %196 = vmatpush1.msra.mxu0 0.0
    %197 = vmatprep.subr.mxu0 0.0
    %198 = vmatpush1.msra.mxu0 0.0
    %199 = vmatprep.subr.mxu0 0.0
    %200 = vmatpush1.msra.mxu0 0.0
    %201 = vmatprep.subr.mxu0 0.0
    %202 = vmatpush1.msra.mxu0 0.0
    %203 = vmatprep.subr.mxu0 0.0
    %204 = vmatpush1.msra.mxu0 0.0
    %205 = vmatprep.subr.mxu0 0.0
    %206 = vmatpush1.msra.mxu0 0.0
    %207 = vmatprep.mubr.f32.mxu0 0.0
    %208 = vmatmul.mubr.f32.gmra.mrb[0].mxu0 %v141
    %v209 = vpop.f32.mrb[0].mxu0
    %v210 = vadd.f32 %v138, %v209
    %v211 = vpop.f32.mrb[0].mxu0
    %212 = vdwg.mxu0
    %v213 = vld [vmem:[%s7] sm:$0xff]
    %v214 = vld [vmem:[%s7 + $0x8] sm:$0xff]
    %v215 = vld [vmem:[%s7 + $0x10] sm:$0xff]
    %v216 = vld [vmem:[%s7 + $0x18] sm:$0xff]
    %v217 = vld [vmem:[%s7 + $0x20] sm:$0xff]
    %v218 = vld [vmem:[%s7 + $0x28] sm:$0xff]
    %v219 = vld [vmem:[%s7 + $0x30] sm:$0xff]
    %v220 = vld [vmem:[%s7 + $0x38] sm:$0xff]
    %v221 = vld [vmem:[%s8] sm:$0x1]
    %v223 = vlaneseq
    %v224 = vshrl.u32 %v223, 7
    %v225 = vsub.s32 0, %v224
    %v226 = vrot.slane %v221, %v225
    %228 = vmatprep.subr.mxu0 0.0
    %229 = vmatpush1.msra.mxu0 %v213
    %230 = vmatprep.subr.mxu0 0.0
    %231 = vmatpush1.msra.mxu0 %v214
    %232 = vmatprep.subr.mxu0 0.0
    %233 = vmatpush1.msra.mxu0 %v215
    %234 = vmatprep.subr.mxu0 0.0
    %235 = vmatpush1.msra.mxu0 %v216
    %236 = vmatprep.subr.mxu0 0.0
    %237 = vmatpush1.msra.mxu0 %v217
    %238 = vmatprep.subr.mxu0 0.0
    %239 = vmatpush1.msra.mxu0 %v218
    %240 = vmatprep.subr.mxu0 0.0
    %241 = vmatpush1.msra.mxu0 %v219
    %242 = vmatprep.subr.mxu0 0.0
    %243 = vmatpush1.msra.mxu0 %v220
    %244 = vmatprep.subr.mxu0 0.0
    %245 = vmatpush1.msra.mxu0 0.0
    %246 = vmatprep.subr.mxu0 0.0
    %247 = vmatpush1.msra.mxu0 0.0
    %248 = vmatprep.subr.mxu0 0.0
    %249 = vmatpush1.msra.mxu0 0.0
    %250 = vmatprep.subr.mxu0 0.0
    %251 = vmatpush1.msra.mxu0 0.0
    %252 = vmatprep.subr.mxu0 0.0
    %253 = vmatpush1.msra.mxu0 0.0
    %254 = vmatprep.subr.mxu0 0.0
    %255 = vmatpush1.msra.mxu0 0.0
    %256 = vmatprep.subr.mxu0 0.0
    %257 = vmatpush1.msra.mxu0 0.0
    %258 = vmatprep.subr.mxu0 0.0
    %259 = vmatpush1.msra.mxu0 0.0
    %260 = vmatprep.subr.mxu0 0.0
    %261 = vmatpush1.msra.mxu0 0.0
    %262 = vmatprep.subr.mxu0 0.0
    %263 = vmatpush1.msra.mxu0 0.0
    %264 = vmatprep.subr.mxu0 0.0
    %265 = vmatpush1.msra.mxu0 0.0
    %266 = vmatprep.subr.mxu0 0.0
    %267 = vmatpush1.msra.mxu0 0.0
    %268 = vmatprep.subr.mxu0 0.0
    %269 = vmatpush1.msra.mxu0 0.0
    %270 = vmatprep.subr.mxu0 0.0
    %271 = vmatpush1.msra.mxu0 0.0
    %272 = vmatprep.subr.mxu0 0.0
    %273 = vmatpush1.msra.mxu0 0.0
    %274 = vmatprep.subr.mxu0 0.0
    %275 = vmatpush1.msra.mxu0 0.0
    %276 = vmatprep.subr.mxu0 0.0
    %277 = vmatpush1.msra.mxu0 0.0
    %278 = vmatprep.subr.mxu0 0.0
    %279 = vmatpush1.msra.mxu0 0.0
    %280 = vmatprep.subr.mxu0 0.0
    %281 = vmatpush1.msra.mxu0 0.0
    %282 = vmatprep.subr.mxu0 0.0
    %283 = vmatpush1.msra.mxu0 0.0
    %284 = vmatprep.subr.mxu0 0.0
    %285 = vmatpush1.msra.mxu0 0.0
    %286 = vmatprep.subr.mxu0 0.0
    %287 = vmatpush1.msra.mxu0 0.0
    %288 = vmatprep.subr.mxu0 0.0
    %289 = vmatpush1.msra.mxu0 0.0
    %290 = vmatprep.subr.mxu0 0.0
    %291 = vmatpush1.msra.mxu0 0.0
    %292 = vmatprep.mubr.f32.mxu0 0.0
    %293 = vmatmul.mubr.f32.gmra.mrb[0].mxu0 %v141
    %v294 = vpop.f32.mrb[0].mxu0
    %v295 = vadd.f32 %v226, %v294
    %v296 = vpop.f32.mrb[0].mxu0
    %297 = vdwg.mxu0
    %v298 = vld [vmem:[%s9] sm:$0xff]
    %v299 = vld [vmem:[%s9 + $0x8] sm:$0xff]
    %v300 = vld [vmem:[%s9 + $0x10] sm:$0xff]
    %v301 = vld [vmem:[%s9 + $0x18] sm:$0xff]
    %v302 = vld [vmem:[%s9 + $0x20] sm:$0xff]
    %v303 = vld [vmem:[%s9 + $0x28] sm:$0xff]
    %v304 = vld [vmem:[%s9 + $0x30] sm:$0xff]
    %v305 = vld [vmem:[%s9 + $0x38] sm:$0xff]
    %v306 = vld [vmem:[%s10] sm:$0x1]
    %v308 = vlaneseq
    %v309 = vshrl.u32 %v308, 7
    %v310 = vsub.s32 0, %v309
    %v311 = vrot.slane %v306, %v310
    %313 = vmatprep.subr.mxu0 0.0
    %314 = vmatpush1.msra.mxu0 %v298
    %315 = vmatprep.subr.mxu0 0.0
    %316 = vmatpush1.msra.mxu0 %v299
    %317 = vmatprep.subr.mxu0 0.0
    %318 = vmatpush1.msra.mxu0 %v300
    %319 = vmatprep.subr.mxu0 0.0
    %320 = vmatpush1.msra.mxu0 %v301
    %321 = vmatprep.subr.mxu0 0.0
    %322 = vmatpush1.msra.mxu0 %v302
    %323 = vmatprep.subr.mxu0 0.0
    %324 = vmatpush1.msra.mxu0 %v303
    %325 = vmatprep.subr.mxu0 0.0
    %326 = vmatpush1.msra.mxu0 %v304
    %327 = vmatprep.subr.mxu0 0.0
    %328 = vmatpush1.msra.mxu0 %v305
    %329 = vmatprep.subr.mxu0 0.0
    %330 = vmatpush1.msra.mxu0 0.0
    %331 = vmatprep.subr.mxu0 0.0
    %332 = vmatpush1.msra.mxu0 0.0
    %333 = vmatprep.subr.mxu0 0.0
    %334 = vmatpush1.msra.mxu0 0.0
    %335 = vmatprep.subr.mxu0 0.0
    %336 = vmatpush1.msra.mxu0 0.0
    %337 = vmatprep.subr.mxu0 0.0
    %338 = vmatpush1.msra.mxu0 0.0
    %339 = vmatprep.subr.mxu0 0.0
    %340 = vmatpush1.msra.mxu0 0.0
    %341 = vmatprep.subr.mxu0 0.0
    %342 = vmatpush1.msra.mxu0 0.0
    %343 = vmatprep.subr.mxu0 0.0
    %344 = vmatpush1.msra.mxu0 0.0
    %345 = vmatprep.subr.mxu0 0.0
    %346 = vmatpush1.msra.mxu0 0.0
    %347 = vmatprep.subr.mxu0 0.0
    %348 = vmatpush1.msra.mxu0 0.0
    %349 = vmatprep.subr.mxu0 0.0
    %350 = vmatpush1.msra.mxu0 0.0
    %351 = vmatprep.subr.mxu0 0.0
    %352 = vmatpush1.msra.mxu0 0.0
    %353 = vmatprep.subr.mxu0 0.0
    %354 = vmatpush1.msra.mxu0 0.0
    %355 = vmatprep.subr.mxu0 0.0
    %356 = vmatpush1.msra.mxu0 0.0
    %357 = vmatprep.subr.mxu0 0.0
    %358 = vmatpush1.msra.mxu0 0.0
    %359 = vmatprep.subr.mxu0 0.0
    %360 = vmatpush1.msra.mxu0 0.0
    %361 = vmatprep.subr.mxu0 0.0
    %362 = vmatpush1.msra.mxu0 0.0
    %363 = vmatprep.subr.mxu0 0.0
    %364 = vmatpush1.msra.mxu0 0.0
    %365 = vmatprep.subr.mxu0 0.0
    %366 = vmatpush1.msra.mxu0 0.0
    %367 = vmatprep.subr.mxu0 0.0
    %368 = vmatpush1.msra.mxu0 0.0
    %369 = vmatprep.subr.mxu0 0.0
    %370 = vmatpush1.msra.mxu0 0.0
    %371 = vmatprep.subr.mxu0 0.0
    %372 = vmatpush1.msra.mxu0 0.0
    %373 = vmatprep.subr.mxu0 0.0
    %374 = vmatpush1.msra.mxu0 0.0
    %375 = vmatprep.subr.mxu0 0.0
    %376 = vmatpush1.msra.mxu0 0.0
    %377 = vmatprep.mubr.f32.mxu0 0.0
    %378 = vmatmul.mubr.f32.gmra.mrb[0].mxu0 %v141
    %v379 = vpop.f32.mrb[0].mxu0
    %v380 = vadd.f32 %v311, %v379
    %v381 = vpop.f32.mrb[0].mxu0
    %382 = vdwg.mxu0
    %vm383 = vcmask 261120
    %v385 = vsel %vm383, %v210, 0
    %v388 = vsel %vm383, %v295, 0
    %390 = vmatprep.subr.mxu0 0.0
    %391 = vmatpush1.xpose.msra.mxu0 %v388
    %392 = vmatprep.subr.mxu0 0.0
    %393 = vmatpush1.xpose.msra.mxu0 0.0
    %394 = vmatprep.subr.mxu0 0.0
    %395 = vmatpush1.xpose.msra.mxu0 0.0
    %396 = vmatprep.subr.mxu0 0.0
    %397 = vmatpush1.xpose.msra.mxu0 0.0
    %398 = vmatprep.subr.mxu0 0.0
    %399 = vmatpush1.xpose.msra.mxu0 0.0
    %400 = vmatprep.subr.mxu0 0.0
    %401 = vmatpush1.xpose.msra.mxu0 0.0
    %402 = vmatprep.subr.mxu0 0.0
    %403 = vmatpush1.xpose.msra.mxu0 0.0
    %404 = vmatprep.subr.mxu0 0.0
    %405 = vmatpush1.xpose.msra.mxu0 0.0
    %406 = vmatprep.subr.mxu0 0.0
    %407 = vmatpush1.xpose.msra.mxu0 0.0
    %408 = vmatprep.subr.mxu0 0.0
    %409 = vmatpush1.xpose.msra.mxu0 0.0
    %410 = vmatprep.subr.mxu0 0.0
    %411 = vmatpush1.xpose.msra.mxu0 0.0
    %412 = vmatprep.subr.mxu0 0.0
    %413 = vmatpush1.xpose.msra.mxu0 0.0
    %414 = vmatprep.subr.mxu0 0.0
    %415 = vmatpush1.xpose.msra.mxu0 0.0
    %416 = vmatprep.subr.mxu0 0.0
    %417 = vmatpush1.xpose.msra.mxu0 0.0
    %418 = vmatprep.subr.mxu0 0.0
    %419 = vmatpush1.xpose.msra.mxu0 0.0
    %420 = vmatprep.subr.mxu0 0.0
    %421 = vmatpush1.xpose.msra.mxu0 0.0
    %422 = vmatprep.subr.mxu0 0.0
    %423 = vmatpush1.xpose.msra.mxu0 0.0
    %424 = vmatprep.subr.mxu0 0.0
    %425 = vmatpush1.xpose.msra.mxu0 0.0
    %426 = vmatprep.subr.mxu0 0.0
    %427 = vmatpush1.xpose.msra.mxu0 0.0
    %428 = vmatprep.subr.mxu0 0.0
    %429 = vmatpush1.xpose.msra.mxu0 0.0
    %430 = vmatprep.subr.mxu0 0.0
    %431 = vmatpush1.xpose.msra.mxu0 0.0
    %432 = vmatprep.subr.mxu0 0.0
    %433 = vmatpush1.xpose.msra.mxu0 0.0
    %434 = vmatprep.subr.mxu0 0.0
    %435 = vmatpush1.xpose.msra.mxu0 0.0
    %436 = vmatprep.subr.mxu0 0.0
    %437 = vmatpush1.xpose.msra.mxu0 0.0
    %438 = vmatprep.subr.mxu0 0.0
    %439 = vmatpush1.xpose.msra.mxu0 0.0
    %440 = vmatprep.subr.mxu0 0.0
    %441 = vmatpush1.xpose.msra.mxu0 0.0
    %442 = vmatprep.subr.mxu0 0.0
    %443 = vmatpush1.xpose.msra.mxu0 0.0
    %444 = vmatprep.subr.mxu0 0.0
    %445 = vmatpush1.xpose.msra.mxu0 0.0
    %446 = vmatprep.subr.mxu0 0.0
    %447 = vmatpush1.xpose.msra.mxu0 0.0
    %448 = vmatprep.subr.mxu0 0.0
    %449 = vmatpush1.xpose.msra.mxu0 0.0
    %450 = vmatprep.subr.mxu0 0.0
    %451 = vmatpush1.xpose.msra.mxu0 0.0
    %452 = vmatprep.subr.mxu0 0.0
    %453 = vmatpush1.xpose.msra.mxu0 0.0
    %454 = vmatprep.mubr.f32.mxu0 0.0
    %455 = vmatmul.mubr.f32.gmra.mrb[0].mxu0 %v385
    %v456 = vpop.f32.mrb[0].mxu0
    %v457 = vadd.f32 0.0, %v456
    %v458 = vpop.f32.mrb[0].mxu0
    %459 = vdwg.mxu0
    %v460 = vmul.f32 %v457, 0.17677669
    %v461 = vadd.f32 %v460, %v123
    %vm462 = vcmask 64512
    %v463 = vsel %vm462, %v461, -inf
    %464 = vmax.xlane.f32.xlu0 %v463
    %v465 = vpop.xlane.xlu0 %464
    %v466 = vsub.f32 %v461, %v465
    %v467 = vmul.f32 %v466, 1.442695
    %v468 = vpow.pop %v467
    %v469 = vsel %vm462, %v468, 0.0
    %470 = vadd.xlane.f32.xlu0 %v469
    %v471 = vpop.xlane.xlu0 %470
    %v472 = vrcp.pop %v471
    %v473 = vmul.f32 %v468, %v472
    %v475 = vsel %vm462, %v473, 0
    %477 = vmatprep.subr.mxu0 0.0
    %478 = vmatpush1.msra.mxu0 %v380
    %479 = vmatprep.subr.mxu0 0.0
    %480 = vmatpush1.msra.mxu0 0.0
    %481 = vmatprep.subr.mxu0 0.0
    %482 = vmatpush1.msra.mxu0 0.0
    %483 = vmatprep.subr.mxu0 0.0
    %484 = vmatpush1.msra.mxu0 0.0
    %485 = vmatprep.subr.mxu0 0.0
    %486 = vmatpush1.msra.mxu0 0.0
    %487 = vmatprep.subr.mxu0 0.0
    %488 = vmatpush1.msra.mxu0 0.0
    %489 = vmatprep.subr.mxu0 0.0
    %490 = vmatpush1.msra.mxu0 0.0
    %491 = vmatprep.subr.mxu0 0.0
    %492 = vmatpush1.msra.mxu0 0.0
    %493 = vmatprep.subr.mxu0 0.0
    %494 = vmatpush1.msra.mxu0 0.0
    %495 = vmatprep.subr.mxu0 0.0
    %496 = vmatpush1.msra.mxu0 0.0
    %497 = vmatprep.subr.mxu0 0.0
    %498 = vmatpush1.msra.mxu0 0.0
    %499 = vmatprep.subr.mxu0 0.0
    %500 = vmatpush1.msra.mxu0 0.0
    %501 = vmatprep.subr.mxu0 0.0
    %502 = vmatpush1.msra.mxu0 0.0
    %503 = vmatprep.subr.mxu0 0.0
    %504 = vmatpush1.msra.mxu0 0.0
    %505 = vmatprep.subr.mxu0 0.0
    %506 = vmatpush1.msra.mxu0 0.0
    %507 = vmatprep.subr.mxu0 0.0
    %508 = vmatpush1.msra.mxu0 0.0
    %509 = vmatprep.subr.mxu0 0.0
    %510 = vmatpush1.msra.mxu0 0.0
    %511 = vmatprep.subr.mxu0 0.0
    %512 = vmatpush1.msra.mxu0 0.0
    %513 = vmatprep.subr.mxu0 0.0
    %514 = vmatpush1.msra.mxu0 0.0
    %515 = vmatprep.subr.mxu0 0.0
    %516 = vmatpush1.msra.mxu0 0.0
    %517 = vmatprep.subr.mxu0 0.0
    %518 = vmatpush1.msra.mxu0 0.0
    %519 = vmatprep.subr.mxu0 0.0
    %520 = vmatpush1.msra.mxu0 0.0
    %521 = vmatprep.subr.mxu0 0.0
    %522 = vmatpush1.msra.mxu0 0.0
    %523 = vmatprep.subr.mxu0 0.0
    %524 = vmatpush1.msra.mxu0 0.0
    %525 = vmatprep.subr.mxu0 0.0
    %526 = vmatpush1.msra.mxu0 0.0
    %527 = vmatprep.subr.mxu0 0.0
    %528 = vmatpush1.msra.mxu0 0.0
    %529 = vmatprep.subr.mxu0 0.0
    %530 = vmatpush1.msra.mxu0 0.0
    %531 = vmatprep.subr.mxu0 0.0
    %532 = vmatpush1.msra.mxu0 0.0
    %533 = vmatprep.subr.mxu0 0.0
    %534 = vmatpush1.msra.mxu0 0.0
    %535 = vmatprep.subr.mxu0 0.0
    %536 = vmatpush1.msra.mxu0 0.0
    %537 = vmatprep.subr.mxu0 0.0
    %538 = vmatpush1.msra.mxu0 0.0
    %539 = vmatprep.subr.mxu0 0.0
    %540 = vmatpush1.msra.mxu0 0.0
    %541 = vmatprep.mubr.f32.mxu0 0.0
    %542 = vmatmul.mubr.f32.gmra.mrb[0].mxu0 %v475
    %v543 = vpop.f32.mrb[0].mxu0
    %v544 = vadd.f32 0.0, %v543
    %v545 = vpop.f32.mrb[0].mxu0
    %546 = vdwg.mxu0
    %v547 = vld [vmem:[%s11] sm:$0xff]
    %v548 = vld [vmem:[%s11 + $0x8] sm:$0xff]
    %v549 = vld [vmem:[%s11 + $0x10] sm:$0xff]
    %v550 = vld [vmem:[%s11 + $0x18] sm:$0xff]
    %s551 = scalar_lea.vmem %s5, 64
    %v552 = vld [vmem:[%s551] sm:$0xff]
    %v553 = vld [vmem:[%s551 + $0x8] sm:$0xff]
    %v554 = vld [vmem:[%s551 + $0x10] sm:$0xff]
    %v555 = vld [vmem:[%s551 + $0x18] sm:$0xff]
    %v556 = vld [vmem:[%s551 + $0x20] sm:$0xff]
    %v557 = vld [vmem:[%s551 + $0x28] sm:$0xff]
    %v558 = vld [vmem:[%s551 + $0x30] sm:$0xff]
    %v559 = vld [vmem:[%s551 + $0x38] sm:$0xff]
    %s560 = scalar_lea.vmem %s6, 1
    %v561 = vld [vmem:[%s560] sm:$0x1]
    %v563 = vlaneseq
    %v564 = vshrl.u32 %v563, 7
    %v565 = vsub.s32 0, %v564
    %v566 = vrot.slane %v561, %v565
    %568 = vmatprep.subr.mxu0 0.0
    %569 = vmatpush1.msra.mxu0 %v552
    %570 = vmatprep.subr.mxu0 0.0
    %571 = vmatpush1.msra.mxu0 %v553
    %572 = vmatprep.subr.mxu0 0.0
    %573 = vmatpush1.msra.mxu0 %v554
    %574 = vmatprep.subr.mxu0 0.0
    %575 = vmatpush1.msra.mxu0 %v555
    %576 = vmatprep.subr.mxu0 0.0
    %577 = vmatpush1.msra.mxu0 %v556
    %578 = vmatprep.subr.mxu0 0.0
    %579 = vmatpush1.msra.mxu0 %v557
    %580 = vmatprep.subr.mxu0 0.0
    %581 = vmatpush1.msra.mxu0 %v558
    %582 = vmatprep.subr.mxu0 0.0
    %583 = vmatpush1.msra.mxu0 %v559
    %584 = vmatprep.subr.mxu0 0.0
    %585 = vmatpush1.msra.mxu0 0.0
    %586 = vmatprep.subr.mxu0 0.0
    %587 = vmatpush1.msra.mxu0 0.0
    %588 = vmatprep.subr.mxu0 0.0
    %589 = vmatpush1.msra.mxu0 0.0
    %590 = vmatprep.subr.mxu0 0.0
    %591 = vmatpush1.msra.mxu0 0.0
    %592 = vmatprep.subr.mxu0 0.0
    %593 = vmatpush1.msra.mxu0 0.0
    %594 = vmatprep.subr.mxu0 0.0
    %595 = vmatpush1.msra.mxu0 0.0
    %596 = vmatprep.subr.mxu0 0.0
    %597 = vmatpush1.msra.mxu0 0.0
    %598 = vmatprep.subr.mxu0 0.0
    %599 = vmatpush1.msra.mxu0 0.0
    %600 = vmatprep.subr.mxu0 0.0
    %601 = vmatpush1.msra.mxu0 0.0
    %602 = vmatprep.subr.mxu0 0.0
    %603 = vmatpush1.msra.mxu0 0.0
    %604 = vmatprep.subr.mxu0 0.0
    %605 = vmatpush1.msra.mxu0 0.0
    %606 = vmatprep.subr.mxu0 0.0
    %607 = vmatpush1.msra.mxu0 0.0
    %608 = vmatprep.subr.mxu0 0.0
    %609 = vmatpush1.msra.mxu0 0.0
    %610 = vmatprep.subr.mxu0 0.0
    %611 = vmatpush1.msra.mxu0 0.0
    %612 = vmatprep.subr.mxu0 0.0
    %613 = vmatpush1.msra.mxu0 0.0
    %614 = vmatprep.subr.mxu0 0.0
    %615 = vmatpush1.msra.mxu0 0.0
    %616 = vmatprep.subr.mxu0 0.0
    %617 = vmatpush1.msra.mxu0 0.0
    %618 = vmatprep.subr.mxu0 0.0
    %619 = vmatpush1.msra.mxu0 0.0
    %620 = vmatprep.subr.mxu0 0.0
    %621 = vmatpush1.msra.mxu0 0.0
    %622 = vmatprep.subr.mxu0 0.0
    %623 = vmatpush1.msra.mxu0 0.0
    %624 = vmatprep.subr.mxu0 0.0
    %625 = vmatpush1.msra.mxu0 0.0
    %626 = vmatprep.subr.mxu0 0.0
    %627 = vmatpush1.msra.mxu0 0.0
    %628 = vmatprep.subr.mxu0 0.0
    %629 = vmatpush1.msra.mxu0 0.0
    %630 = vmatprep.subr.mxu0 0.0
    %631 = vmatpush1.msra.mxu0 0.0
    %632 = vmatprep.mubr.f32.mxu0 0.0
    %633 = vmatmul.mubr.f32.gmra.mrb[0].mxu0 %v141
    %v634 = vpop.f32.mrb[0].mxu0
    %v635 = vadd.f32 %v566, %v634
    %v636 = vpop.f32.mrb[0].mxu0
    %637 = vdwg.mxu0
    %s638 = scalar_lea.vmem %s7, 64
    %v639 = vld [vmem:[%s638] sm:$0xff]
    %v640 = vld [vmem:[%s638 + $0x8] sm:$0xff]
    %v641 = vld [vmem:[%s638 + $0x10] sm:$0xff]
    %v642 = vld [vmem:[%s638 + $0x18] sm:$0xff]
    %v643 = vld [vmem:[%s638 + $0x20] sm:$0xff]
    %v644 = vld [vmem:[%s638 + $0x28] sm:$0xff]
    %v645 = vld [vmem:[%s638 + $0x30] sm:$0xff]
    %v646 = vld [vmem:[%s638 + $0x38] sm:$0xff]
    %s647 = scalar_lea.vmem %s8, 1
    %v648 = vld [vmem:[%s647] sm:$0x1]
    %v650 = vlaneseq
    %v651 = vshrl.u32 %v650, 7
    %v652 = vsub.s32 0, %v651
    %v653 = vrot.slane %v648, %v652
    %655 = vmatprep.subr.mxu0 0.0
    %656 = vmatpush1.msra.mxu0 %v639
    %657 = vmatprep.subr.mxu0 0.0
    %658 = vmatpush1.msra.mxu0 %v640
    %659 = vmatprep.subr.mxu0 0.0
    %660 = vmatpush1.msra.mxu0 %v641
    %661 = vmatprep.subr.mxu0 0.0
    %662 = vmatpush1.msra.mxu0 %v642
    %663 = vmatprep.subr.mxu0 0.0
    %664 = vmatpush1.msra.mxu0 %v643
    %665 = vmatprep.subr.mxu0 0.0
    %666 = vmatpush1.msra.mxu0 %v644
    %667 = vmatprep.subr.mxu0 0.0
    %668 = vmatpush1.msra.mxu0 %v645
    %669 = vmatprep.subr.mxu0 0.0
    %670 = vmatpush1.msra.mxu0 %v646
    %671 = vmatprep.subr.mxu0 0.0
    %672 = vmatpush1.msra.mxu0 0.0
    %673 = vmatprep.subr.mxu0 0.0
    %674 = vmatpush1.msra.mxu0 0.0
    %675 = vmatprep.subr.mxu0 0.0
    %676 = vmatpush1.msra.mxu0 0.0
    %677 = vmatprep.subr.mxu0 0.0
    %678 = vmatpush1.msra.mxu0 0.0
    %679 = vmatprep.subr.mxu0 0.0
    %680 = vmatpush1.msra.mxu0 0.0
    %681 = vmatprep.subr.mxu0 0.0
    %682 = vmatpush1.msra.mxu0 0.0
    %683 = vmatprep.subr.mxu0 0.0
    %684 = vmatpush1.msra.mxu0 0.0
    %685 = vmatprep.subr.mxu0 0.0
    %686 = vmatpush1.msra.mxu0 0.0
    %687 = vmatprep.subr.mxu0 0.0
    %688 = vmatpush1.msra.mxu0 0.0
    %689 = vmatprep.subr.mxu0 0.0
    %690 = vmatpush1.msra.mxu0 0.0
    %691 = vmatprep.subr.mxu0 0.0
    %692 = vmatpush1.msra.mxu0 0.0
    %693 = vmatprep.subr.mxu0 0.0
    %694 = vmatpush1.msra.mxu0 0.0
    %695 = vmatprep.subr.mxu0 0.0
    %696 = vmatpush1.msra.mxu0 0.0
    %697 = vmatprep.subr.mxu0 0.0
    %698 = vmatpush1.msra.mxu0 0.0
    %699 = vmatprep.subr.mxu0 0.0
    %700 = vmatpush1.msra.mxu0 0.0
    %701 = vmatprep.subr.mxu0 0.0
    %702 = vmatpush1.msra.mxu0 0.0
    %703 = vmatprep.subr.mxu0 0.0
    %704 = vmatpush1.msra.mxu0 0.0
    %705 = vmatprep.subr.mxu0 0.0
    %706 = vmatpush1.msra.mxu0 0.0
    %707 = vmatprep.subr.mxu0 0.0
    %708 = vmatpush1.msra.mxu0 0.0
    %709 = vmatprep.subr.mxu0 0.0
    %710 = vmatpush1.msra.mxu0 0.0
    %711 = vmatprep.subr.mxu0 0.0
    %712 = vmatpush1.msra.mxu0 0.0
    %713 = vmatprep.subr.mxu0 0.0
    %714 = vmatpush1.msra.mxu0 0.0
    %715 = vmatprep.subr.mxu0 0.0
    %716 = vmatpush1.msra.mxu0 0.0
    %717 = vmatprep.subr.mxu0 0.0
    %718 = vmatpush1.msra.mxu0 0.0
    %719 = vmatprep.mubr.f32.mxu0 0.0
    %720 = vmatmul.mubr.f32.gmra.mrb[0].mxu0 %v141
    %v721 = vpop.f32.mrb[0].mxu0
    %v722 = vadd.f32 %v653, %v721
    %v723 = vpop.f32.mrb[0].mxu0
    %724 = vdwg.mxu0
    %s725 = scalar_lea.vmem %s9, 64
    %v726 = vld [vmem:[%s725] sm:$0xff]
    %v727 = vld [vmem:[%s725 + $0x8] sm:$0xff]
    %v728 = vld [vmem:[%s725 + $0x10] sm:$0xff]
    %v729 = vld [vmem:[%s725 + $0x18] sm:$0xff]
    %v730 = vld [vmem:[%s725 + $0x20] sm:$0xff]
    %v731 = vld [vmem:[%s725 + $0x28] sm:$0xff]
    %v732 = vld [vmem:[%s725 + $0x30] sm:$0xff]
    %v733 = vld [vmem:[%s725 + $0x38] sm:$0xff]
    %s734 = scalar_lea.vmem %s10, 1
    %v735 = vld [vmem:[%s734] sm:$0x1]
    %v737 = vlaneseq
    %v738 = vshrl.u32 %v737, 7
    %v739 = vsub.s32 0, %v738
    %v740 = vrot.slane %v735, %v739
    %742 = vmatprep.subr.mxu0 0.0
    %743 = vmatpush1.msra.mxu0 %v726
    %744 = vmatprep.subr.mxu0 0.0
    %745 = vmatpush1.msra.mxu0 %v727
    %746 = vmatprep.subr.mxu0 0.0
    %747 = vmatpush1.msra.mxu0 %v728
    %748 = vmatprep.subr.mxu0 0.0
    %749 = vmatpush1.msra.mxu0 %v729
    %750 = vmatprep.subr.mxu0 0.0
    %751 = vmatpush1.msra.mxu0 %v730
    %752 = vmatprep.subr.mxu0 0.0
    %753 = vmatpush1.msra.mxu0 %v731
    %754 = vmatprep.subr.mxu0 0.0
    %755 = vmatpush1.msra.mxu0 %v732
    %756 = vmatprep.subr.mxu0 0.0
    %757 = vmatpush1.msra.mxu0 %v733
    %758 = vmatprep.subr.mxu0 0.0
    %759 = vmatpush1.msra.mxu0 0.0
    %760 = vmatprep.subr.mxu0 0.0
    %761 = vmatpush1.msra.mxu0 0.0
    %762 = vmatprep.subr.mxu0 0.0
    %763 = vmatpush1.msra.mxu0 0.0
    %764 = vmatprep.subr.mxu0 0.0
    %765 = vmatpush1.msra.mxu0 0.0
    %766 = vmatprep.subr.mxu0 0.0
    %767 = vmatpush1.msra.mxu0 0.0
    %768 = vmatprep.subr.mxu0 0.0
    %769 = vmatpush1.msra.mxu0 0.0
    %770 = vmatprep.subr.mxu0 0.0
    %771 = vmatpush1.msra.mxu0 0.0
    %772 = vmatprep.subr.mxu0 0.0
    %773 = vmatpush1.msra.mxu0 0.0
    %774 = vmatprep.subr.mxu0 0.0
    %775 = vmatpush1.msra.mxu0 0.0
    %776 = vmatprep.subr.mxu0 0.0
    %777 = vmatpush1.msra.mxu0 0.0
    %778 = vmatprep.subr.mxu0 0.0
    %779 = vmatpush1.msra.mxu0 0.0
    %780 = vmatprep.subr.mxu0 0.0
    %781 = vmatpush1.msra.mxu0 0.0
    %782 = vmatprep.subr.mxu0 0.0
    %783 = vmatpush1.msra.mxu0 0.0
    %784 = vmatprep.subr.mxu0 0.0
    %785 = vmatpush1.msra.mxu0 0.0
    %786 = vmatprep.subr.mxu0 0.0
    %787 = vmatpush1.msra.mxu0 0.0
    %788 = vmatprep.subr.mxu0 0.0
    %789 = vmatpush1.msra.mxu0 0.0
    %790 = vmatprep.subr.mxu0 0.0
    %791 = vmatpush1.msra.mxu0 0.0
    %792 = vmatprep.subr.mxu0 0.0
    %793 = vmatpush1.msra.mxu0 0.0
    %794 = vmatprep.subr.mxu0 0.0
    %795 = vmatpush1.msra.mxu0 0.0
    %796 = vmatprep.subr.mxu0 0.0
    %797 = vmatpush1.msra.mxu0 0.0
    %798 = vmatprep.subr.mxu0 0.0
    %799 = vmatpush1.msra.mxu0 0.0
    %800 = vmatprep.subr.mxu0 0.0
    %801 = vmatpush1.msra.mxu0 0.0
    %802 = vmatprep.subr.mxu0 0.0
    %803 = vmatpush1.msra.mxu0 0.0
    %804 = vmatprep.subr.mxu0 0.0
    %805 = vmatpush1.msra.mxu0 0.0
    %806 = vmatprep.mubr.f32.mxu0 0.0
    %807 = vmatmul.mubr.f32.gmra.mrb[0].mxu0 %v141
    %v808 = vpop.f32.mrb[0].mxu0
    %v809 = vadd.f32 %v740, %v808
    %v810 = vpop.f32.mrb[0].mxu0
    %811 = vdwg.mxu0
    %v813 = vsel %vm383, %v635, 0
    %v816 = vsel %vm383, %v722, 0
    %818 = vmatprep.subr.mxu0 0.0
    %819 = vmatpush1.xpose.msra.mxu0 %v816
    %820 = vmatprep.subr.mxu0 0.0
    %821 = vmatpush1.xpose.msra.mxu0 0.0
    %822 = vmatprep.subr.mxu0 0.0
    %823 = vmatpush1.xpose.msra.mxu0 0.0
    %824 = vmatprep.subr.mxu0 0.0
    %825 = vmatpush1.xpose.msra.mxu0 0.0
    %826 = vmatprep.subr.mxu0 0.0
    %827 = vmatpush1.xpose.msra.mxu0 0.0
    %828 = vmatprep.subr.mxu0 0.0
    %829 = vmatpush1.xpose.msra.mxu0 0.0
    %830 = vmatprep.subr.mxu0 0.0
    %831 = vmatpush1.xpose.msra.mxu0 0.0
    %832 = vmatprep.subr.mxu0 0.0
    %833 = vmatpush1.xpose.msra.mxu0 0.0
    %834 = vmatprep.subr.mxu0 0.0
    %835 = vmatpush1.xpose.msra.mxu0 0.0
    %836 = vmatprep.subr.mxu0 0.0
    %837 = vmatpush1.xpose.msra.mxu0 0.0
    %838 = vmatprep.subr.mxu0 0.0
    %839 = vmatpush1.xpose.msra.mxu0 0.0
    %840 = vmatprep.subr.mxu0 0.0
    %841 = vmatpush1.xpose.msra.mxu0 0.0
    %842 = vmatprep.subr.mxu0 0.0
    %843 = vmatpush1.xpose.msra.mxu0 0.0
    %844 = vmatprep.subr.mxu0 0.0
    %845 = vmatpush1.xpose.msra.mxu0 0.0
    %846 = vmatprep.subr.mxu0 0.0
    %847 = vmatpush1.xpose.msra.mxu0 0.0
    %848 = vmatprep.subr.mxu0 0.0
    %849 = vmatpush1.xpose.msra.mxu0 0.0
    %850 = vmatprep.subr.mxu0 0.0
    %851 = vmatpush1.xpose.msra.mxu0 0.0
    %852 = vmatprep.subr.mxu0 0.0
    %853 = vmatpush1.xpose.msra.mxu0 0.0
    %854 = vmatprep.subr.mxu0 0.0
    %855 = vmatpush1.xpose.msra.mxu0 0.0
    %856 = vmatprep.subr.mxu0 0.0
    %857 = vmatpush1.xpose.msra.mxu0 0.0
    %858 = vmatprep.subr.mxu0 0.0
    %859 = vmatpush1.xpose.msra.mxu0 0.0
    %860 = vmatprep.subr.mxu0 0.0
    %861 = vmatpush1.xpose.msra.mxu0 0.0
    %862 = vmatprep.subr.mxu0 0.0
    %863 = vmatpush1.xpose.msra.mxu0 0.0
    %864 = vmatprep.subr.mxu0 0.0
    %865 = vmatpush1.xpose.msra.mxu0 0.0
    %866 = vmatprep.subr.mxu0 0.0
    %867 = vmatpush1.xpose.msra.mxu0 0.0
    %868 = vmatprep.subr.mxu0 0.0
    %869 = vmatpush1.xpose.msra.mxu0 0.0
    %870 = vmatprep.subr.mxu0 0.0
    %871 = vmatpush1.xpose.msra.mxu0 0.0
    %872 = vmatprep.subr.mxu0 0.0
    %873 = vmatpush1.xpose.msra.mxu0 0.0
    %874 = vmatprep.subr.mxu0 0.0
    %875 = vmatpush1.xpose.msra.mxu0 0.0
    %876 = vmatprep.subr.mxu0 0.0
    %877 = vmatpush1.xpose.msra.mxu0 0.0
    %878 = vmatprep.subr.mxu0 0.0
    %879 = vmatpush1.xpose.msra.mxu0 0.0
    %880 = vmatprep.subr.mxu0 0.0
    %881 = vmatpush1.xpose.msra.mxu0 0.0
    %882 = vmatprep.mubr.f32.mxu0 0.0
    %883 = vmatmul.mubr.f32.gmra.mrb[0].mxu0 %v813
    %v884 = vpop.f32.mrb[0].mxu0
    %v885 = vadd.f32 0.0, %v884
    %v886 = vpop.f32.mrb[0].mxu0
    %887 = vdwg.mxu0
    %v888 = vmul.f32 %v885, 0.17677669
    %v889 = vadd.f32 %v888, %v123
    %v890 = vsel %vm462, %v889, -inf
    %891 = vmax.xlane.f32.xlu0 %v890
    %v892 = vpop.xlane.xlu0 %891
    %v893 = vsub.f32 %v889, %v892
    %v894 = vmul.f32 %v893, 1.442695
    %v895 = vpow.pop %v894
    %v896 = vsel %vm462, %v895, 0.0
    %897 = vadd.xlane.f32.xlu0 %v896
    %v898 = vpop.xlane.xlu0 %897
    %v899 = vrcp.pop %v898
    %v900 = vmul.f32 %v895, %v899
    %v902 = vsel %vm462, %v900, 0
    %904 = vmatprep.subr.mxu0 0.0
    %905 = vmatpush1.msra.mxu0 %v809
    %906 = vmatprep.subr.mxu0 0.0
    %907 = vmatpush1.msra.mxu0 0.0
    %908 = vmatprep.subr.mxu0 0.0
    %909 = vmatpush1.msra.mxu0 0.0
    %910 = vmatprep.subr.mxu0 0.0
    %911 = vmatpush1.msra.mxu0 0.0
    %912 = vmatprep.subr.mxu0 0.0
    %913 = vmatpush1.msra.mxu0 0.0
    %914 = vmatprep.subr.mxu0 0.0
    %915 = vmatpush1.msra.mxu0 0.0
    %916 = vmatprep.subr.mxu0 0.0
    %917 = vmatpush1.msra.mxu0 0.0
    %918 = vmatprep.subr.mxu0 0.0
    %919 = vmatpush1.msra.mxu0 0.0
    %920 = vmatprep.subr.mxu0 0.0
    %921 = vmatpush1.msra.mxu0 0.0
    %922 = vmatprep.subr.mxu0 0.0
    %923 = vmatpush1.msra.mxu0 0.0
    %924 = vmatprep.subr.mxu0 0.0
    %925 = vmatpush1.msra.mxu0 0.0
    %926 = vmatprep.subr.mxu0 0.0
    %927 = vmatpush1.msra.mxu0 0.0
    %928 = vmatprep.subr.mxu0 0.0
    %929 = vmatpush1.msra.mxu0 0.0
    %930 = vmatprep.subr.mxu0 0.0
    %931 = vmatpush1.msra.mxu0 0.0
    %932 = vmatprep.subr.mxu0 0.0
    %933 = vmatpush1.msra.mxu0 0.0
    %934 = vmatprep.subr.mxu0 0.0
    %935 = vmatpush1.msra.mxu0 0.0
    %936 = vmatprep.subr.mxu0 0.0
    %937 = vmatpush1.msra.mxu0 0.0
    %938 = vmatprep.subr.mxu0 0.0
    %939 = vmatpush1.msra.mxu0 0.0
    %940 = vmatprep.subr.mxu0 0.0
    %941 = vmatpush1.msra.mxu0 0.0
    %942 = vmatprep.subr.mxu0 0.0
    %943 = vmatpush1.msra.mxu0 0.0
    %944 = vmatprep.subr.mxu0 0.0
    %945 = vmatpush1.msra.mxu0 0.0
    %946 = vmatprep.subr.mxu0 0.0
    %947 = vmatpush1.msra.mxu0 0.0
    %948 = vmatprep.subr.mxu0 0.0
    %949 = vmatpush1.msra.mxu0 0.0
    %950 = vmatprep.subr.mxu0 0.0
    %951 = vmatpush1.msra.mxu0 0.0
    %952 = vmatprep.subr.mxu0 0.0
    %953 = vmatpush1.msra.mxu0 0.0
    %954 = vmatprep.subr.mxu0 0.0
    %955 = vmatpush1.msra.mxu0 0.0
    %956 = vmatprep.subr.mxu0 0.0
    %957 = vmatpush1.msra.mxu0 0.0
    %958 = vmatprep.subr.mxu0 0.0
    %959 = vmatpush1.msra.mxu0 0.0
    %960 = vmatprep.subr.mxu0 0.0
    %961 = vmatpush1.msra.mxu0 0.0
    %962 = vmatprep.subr.mxu0 0.0
    %963 = vmatpush1.msra.mxu0 0.0
    %964 = vmatprep.subr.mxu0 0.0
    %965 = vmatpush1.msra.mxu0 0.0
    %966 = vmatprep.subr.mxu0 0.0
    %967 = vmatpush1.msra.mxu0 0.0
    %968 = vmatprep.mubr.f32.mxu0 0.0
    %969 = vmatmul.mubr.f32.gmra.mrb[0].mxu0 %v902
    %v970 = vpop.f32.mrb[0].mxu0
    %v971 = vadd.f32 0.0, %v970
    %v972 = vpop.f32.mrb[0].mxu0
    %973 = vdwg.mxu0
    %s974 = scalar_lea.vmem %s11, 32
    %v975 = vld [vmem:[%s974] sm:$0xff]
    %v976 = vld [vmem:[%s974 + $0x8] sm:$0xff]
    %v977 = vld [vmem:[%s974 + $0x10] sm:$0xff]
    %v978 = vld [vmem:[%s974 + $0x18] sm:$0xff]
    %v980 = vsel %vm383, %v971, 0
    %982 = vmatprep.subr.mxu0 0.0
    %983 = vmatpush1.msra.mxu0 %v975
    %984 = vmatprep.subr.mxu0 0.0
    %985 = vmatpush1.msra.mxu0 %v976
    %986 = vmatprep.subr.mxu0 0.0
    %987 = vmatpush1.msra.mxu0 %v977
    %988 = vmatprep.subr.mxu0 0.0
    %989 = vmatpush1.msra.mxu0 %v978
    %990 = vmatprep.subr.mxu0 0.0
    %991 = vmatpush1.msra.mxu0 0.0
    %992 = vmatprep.subr.mxu0 0.0
    %993 = vmatpush1.msra.mxu0 0.0
    %994 = vmatprep.subr.mxu0 0.0
    %995 = vmatpush1.msra.mxu0 0.0
    %996 = vmatprep.subr.mxu0 0.0
    %997 = vmatpush1.msra.mxu0 0.0
    %998 = vmatprep.subr.mxu0 0.0
    %999 = vmatpush1.msra.mxu0 0.0
    %1000 = vmatprep.subr.mxu0 0.0
    %1001 = vmatpush1.msra.mxu0 0.0
    %1002 = vmatprep.subr.mxu0 0.0
    %1003 = vmatpush1.msra.mxu0 0.0
    %1004 = vmatprep.subr.mxu0 0.0
    %1005 = vmatpush1.msra.mxu0 0.0
    %1006 = vmatprep.subr.mxu0 0.0
    %1007 = vmatpush1.msra.mxu0 0.0
    %1008 = vmatprep.subr.mxu0 0.0
    %1009 = vmatpush1.msra.mxu0 0.0
    %1010 = vmatprep.subr.mxu0 0.0
    %1011 = vmatpush1.msra.mxu0 0.0
    %1012 = vmatprep.subr.mxu0 0.0
    %1013 = vmatpush1.msra.mxu0 0.0
    %1014 = vmatprep.subr.mxu0 0.0
    %1015 = vmatpush1.msra.mxu0 0.0
    %1016 = vmatprep.subr.mxu0 0.0
    %1017 = vmatpush1.msra.mxu0 0.0
    %1018 = vmatprep.subr.mxu0 0.0
    %1019 = vmatpush1.msra.mxu0 0.0
    %1020 = vmatprep.subr.mxu0 0.0
    %1021 = vmatpush1.msra.mxu0 0.0
    %1022 = vmatprep.subr.mxu0 0.0
    %1023 = vmatpush1.msra.mxu0 0.0
    %1024 = vmatprep.subr.mxu0 0.0
    %1025 = vmatpush1.msra.mxu0 0.0
    %1026 = vmatprep.subr.mxu0 0.0
    %1027 = vmatpush1.msra.mxu0 0.0
    %1028 = vmatprep.subr.mxu0 0.0
    %1029 = vmatpush1.msra.mxu0 0.0
    %1030 = vmatprep.subr.mxu0 0.0
    %1031 = vmatpush1.msra.mxu0 0.0
    %1032 = vmatprep.subr.mxu0 0.0
    %1033 = vmatpush1.msra.mxu0 0.0
    %1034 = vmatprep.subr.mxu0 0.0
    %1035 = vmatpush1.msra.mxu0 0.0
    %1036 = vmatprep.subr.mxu0 0.0
    %1037 = vmatpush1.msra.mxu0 0.0
    %1038 = vmatprep.subr.mxu0 0.0
    %1039 = vmatpush1.msra.mxu0 0.0
    %1040 = vmatprep.subr.mxu0 0.0
    %1041 = vmatpush1.msra.mxu0 0.0
    %1042 = vmatprep.subr.mxu0 0.0
    %1043 = vmatpush1.msra.mxu0 0.0
    %1044 = vmatprep.subr.mxu0 0.0
    %1045 = vmatpush1.msra.mxu0 0.0
    %1046 = vmatprep.mubr.f32.mxu0 0.0
    %1047 = vmatmul.mubr.f32.gmra.mrb[0].mxu0 %v980
    %v1048 = vpop.f32.mrb[0].mxu0
    %v1049 = vadd.f32 0.0, %v1048
    %v1050 = vpop.f32.mrb[0].mxu0
    %1051 = vdwg.mxu0
    %v1053 = vsel %vm383, %v544, 0
    %1055 = vmatprep.subr.mxu0 0.0
    %1056 = vmatpush1.msra.mxu0 %v547
    %1057 = vmatprep.subr.mxu0 0.0
    %1058 = vmatpush1.msra.mxu0 %v548
    %1059 = vmatprep.subr.mxu0 0.0
    %1060 = vmatpush1.msra.mxu0 %v549
    %1061 = vmatprep.subr.mxu0 0.0
    %1062 = vmatpush1.msra.mxu0 %v550
    %1063 = vmatprep.subr.mxu0 0.0
    %1064 = vmatpush1.msra.mxu0 0.0
    %1065 = vmatprep.subr.mxu0 0.0
    %1066 = vmatpush1.msra.mxu0 0.0
    %1067 = vmatprep.subr.mxu0 0.0
    %1068 = vmatpush1.msra.mxu0 0.0
    %1069 = vmatprep.subr.mxu0 0.0
    %1070 = vmatpush1.msra.mxu0 0.0
    %1071 = vmatprep.subr.mxu0 0.0
    %1072 = vmatpush1.msra.mxu0 0.0
    %1073 = vmatprep.subr.mxu0 0.0
    %1074 = vmatpush1.msra.mxu0 0.0
    %1075 = vmatprep.subr.mxu0 0.0
    %1076 = vmatpush1.msra.mxu0 0.0
    %1077 = vmatprep.subr.mxu0 0.0
    %1078 = vmatpush1.msra.mxu0 0.0
    %1079 = vmatprep.subr.mxu0 0.0
    %1080 = vmatpush1.msra.mxu0 0.0
    %1081 = vmatprep.subr.mxu0 0.0
    %1082 = vmatpush1.msra.mxu0 0.0
    %1083 = vmatprep.subr.mxu0 0.0
    %1084 = vmatpush1.msra.mxu0 0.0
    %1085 = vmatprep.subr.mxu0 0.0
    %1086 = vmatpush1.msra.mxu0 0.0
    %1087 = vmatprep.subr.mxu0 0.0
    %1088 = vmatpush1.msra.mxu0 0.0
    %1089 = vmatprep.subr.mxu0 0.0
    %1090 = vmatpush1.msra.mxu0 0.0
    %1091 = vmatprep.subr.mxu0 0.0
    %1092 = vmatpush1.msra.mxu0 0.0
    %1093 = vmatprep.subr.mxu0 0.0
    %1094 = vmatpush1.msra.mxu0 0.0
    %1095 = vmatprep.subr.mxu0 0.0
    %1096 = vmatpush1.msra.mxu0 0.0
    %1097 = vmatprep.subr.mxu0 0.0
    %1098 = vmatpush1.msra.mxu0 0.0
    %1099 = vmatprep.subr.mxu0 0.0
    %1100 = vmatpush1.msra.mxu0 0.0
    %1101 = vmatprep.subr.mxu0 0.0
    %1102 = vmatpush1.msra.mxu0 0.0
    %1103 = vmatprep.subr.mxu0 0.0
    %1104 = vmatpush1.msra.mxu0 0.0
    %1105 = vmatprep.subr.mxu0 0.0
    %1106 = vmatpush1.msra.mxu0 0.0
    %1107 = vmatprep.subr.mxu0 0.0
    %1108 = vmatpush1.msra.mxu0 0.0
    %1109 = vmatprep.subr.mxu0 0.0
    %1110 = vmatpush1.msra.mxu0 0.0
    %1111 = vmatprep.subr.mxu0 0.0
    %1112 = vmatpush1.msra.mxu0 0.0
    %1113 = vmatprep.subr.mxu0 0.0
    %1114 = vmatpush1.msra.mxu0 0.0
    %1115 = vmatprep.subr.mxu0 0.0
    %1116 = vmatpush1.msra.mxu0 0.0
    %1117 = vmatprep.subr.mxu0 0.0
    %1118 = vmatpush1.msra.mxu0 0.0
    %1119 = vmatprep.mubr.f32.mxu0 0.0
    %1120 = vmatmul.mubr.f32.gmra.mrb[0].mxu0 %v1053
    %v1121 = vpop.f32.mrb[0].mxu0
    %v1122 = vadd.f32 %v1049, %v1121
    %v1123 = vpop.f32.mrb[0].mxu0
    %1124 = vdwg.mxu0
    %v1126 = vsel %vm79, %v122, 0
    %1128 = vmatprep.subr.mxu0 0.0
    %1129 = vmatpush1.msra.mxu0 %v125
    %1130 = vmatprep.subr.mxu0 0.0
    %1131 = vmatpush1.msra.mxu0 %v126
    %1132 = vmatprep.subr.mxu0 0.0
    %1133 = vmatpush1.msra.mxu0 %v127
    %1134 = vmatprep.subr.mxu0 0.0
    %1135 = vmatpush1.msra.mxu0 %v128
    %1136 = vmatprep.subr.mxu0 0.0
    %1137 = vmatpush1.msra.mxu0 %v129
    %1138 = vmatprep.subr.mxu0 0.0
    %1139 = vmatpush1.msra.mxu0 %v130
    %1140 = vmatprep.subr.mxu0 0.0
    %1141 = vmatpush1.msra.mxu0 %v131
    %1142 = vmatprep.subr.mxu0 0.0
    %1143 = vmatpush1.msra.mxu0 %v132
    %1144 = vmatprep.subr.mxu0 0.0
    %1145 = vmatpush1.msra.mxu0 0.0
    %1146 = vmatprep.subr.mxu0 0.0
    %1147 = vmatpush1.msra.mxu0 0.0
    %1148 = vmatprep.subr.mxu0 0.0
    %1149 = vmatpush1.msra.mxu0 0.0
    %1150 = vmatprep.subr.mxu0 0.0
    %1151 = vmatpush1.msra.mxu0 0.0
    %1152 = vmatprep.subr.mxu0 0.0
    %1153 = vmatpush1.msra.mxu0 0.0
    %1154 = vmatprep.subr.mxu0 0.0
    %1155 = vmatpush1.msra.mxu0 0.0
    %1156 = vmatprep.subr.mxu0 0.0
    %1157 = vmatpush1.msra.mxu0 0.0
    %1158 = vmatprep.subr.mxu0 0.0
    %1159 = vmatpush1.msra.mxu0 0.0
    %1160 = vmatprep.subr.mxu0 0.0
    %1161 = vmatpush1.msra.mxu0 0.0
    %1162 = vmatprep.subr.mxu0 0.0
    %1163 = vmatpush1.msra.mxu0 0.0
    %1164 = vmatprep.subr.mxu0 0.0
    %1165 = vmatpush1.msra.mxu0 0.0
    %1166 = vmatprep.subr.mxu0 0.0
    %1167 = vmatpush1.msra.mxu0 0.0
    %1168 = vmatprep.subr.mxu0 0.0
    %1169 = vmatpush1.msra.mxu0 0.0
    %1170 = vmatprep.subr.mxu0 0.0
    %1171 = vmatpush1.msra.mxu0 0.0
    %1172 = vmatprep.subr.mxu0 0.0
    %1173 = vmatpush1.msra.mxu0 0.0
    %1174 = vmatprep.subr.mxu0 0.0
    %1175 = vmatpush1.msra.mxu0 0.0
    %1176 = vmatprep.subr.mxu0 0.0
    %1177 = vmatpush1.msra.mxu0 0.0
    %1178 = vmatprep.subr.mxu0 0.0
    %1179 = vmatpush1.msra.mxu0 0.0
    %1180 = vmatprep.subr.mxu0 0.0
    %1181 = vmatpush1.msra.mxu0 0.0
    %1182 = vmatprep.subr.mxu0 0.0
    %1183 = vmatpush1.msra.mxu0 0.0
    %1184 = vmatprep.subr.mxu0 0.0
    %1185 = vmatpush1.msra.mxu0 0.0
    %1186 = vmatprep.subr.mxu0 0.0
    %1187 = vmatpush1.msra.mxu0 0.0
    %1188 = vmatprep.subr.mxu0 0.0
    %1189 = vmatpush1.msra.mxu0 0.0
    %1190 = vmatprep.subr.mxu0 0.0
    %1191 = vmatpush1.msra.mxu0 0.0
    %1192 = vmatprep.mubr.f32.mxu0 0.0
    %1193 = vmatmul.mubr.f32.gmra.mrb[0].mxu0 %v1126
    %v1194 = vpop.f32.mrb[0].mxu0
    %v1195 = vadd.f32 %v138, %v1194
    %v1196 = vpop.f32.mrb[0].mxu0
    %1197 = vdwg.mxu0
    %1198 = vmatprep.subr.mxu0 0.0
    %1199 = vmatpush1.msra.mxu0 %v213
    %1200 = vmatprep.subr.mxu0 0.0
    %1201 = vmatpush1.msra.mxu0 %v214
    %1202 = vmatprep.subr.mxu0 0.0
    %1203 = vmatpush1.msra.mxu0 %v215
    %1204 = vmatprep.subr.mxu0 0.0
    %1205 = vmatpush1.msra.mxu0 %v216
    %1206 = vmatprep.subr.mxu0 0.0
    %1207 = vmatpush1.msra.mxu0 %v217
    %1208 = vmatprep.subr.mxu0 0.0
    %1209 = vmatpush1.msra.mxu0 %v218
    %1210 = vmatprep.subr.mxu0 0.0
    %1211 = vmatpush1.msra.mxu0 %v219
    %1212 = vmatprep.subr.mxu0 0.0
    %1213 = vmatpush1.msra.mxu0 %v220
    %1214 = vmatprep.subr.mxu0 0.0
    %1215 = vmatpush1.msra.mxu0 0.0
    %1216 = vmatprep.subr.mxu0 0.0
    %1217 = vmatpush1.msra.mxu0 0.0
    %1218 = vmatprep.subr.mxu0 0.0
    %1219 = vmatpush1.msra.mxu0 0.0
    %1220 = vmatprep.subr.mxu0 0.0
    %1221 = vmatpush1.msra.mxu0 0.0
    %1222 = vmatprep.subr.mxu0 0.0
    %1223 = vmatpush1.msra.mxu0 0.0
    %1224 = vmatprep.subr.mxu0 0.0
    %1225 = vmatpush1.msra.mxu0 0.0
    %1226 = vmatprep.subr.mxu0 0.0
    %1227 = vmatpush1.msra.mxu0 0.0
    %1228 = vmatprep.subr.mxu0 0.0
    %1229 = vmatpush1.msra.mxu0 0.0
    %1230 = vmatprep.subr.mxu0 0.0
    %1231 = vmatpush1.msra.mxu0 0.0
    %1232 = vmatprep.subr.mxu0 0.0
    %1233 = vmatpush1.msra.mxu0 0.0
    %1234 = vmatprep.subr.mxu0 0.0
    %1235 = vmatpush1.msra.mxu0 0.0
    %1236 = vmatprep.subr.mxu0 0.0
    %1237 = vmatpush1.msra.mxu0 0.0
    %1238 = vmatprep.subr.mxu0 0.0
    %1239 = vmatpush1.msra.mxu0 0.0
    %1240 = vmatprep.subr.mxu0 0.0
    %1241 = vmatpush1.msra.mxu0 0.0
    %1242 = vmatprep.subr.mxu0 0.0
    %1243 = vmatpush1.msra.mxu0 0.0
    %1244 = vmatprep.subr.mxu0 0.0
    %1245 = vmatpush1.msra.mxu0 0.0
    %1246 = vmatprep.subr.mxu0 0.0
    %1247 = vmatpush1.msra.mxu0 0.0
    %1248 = vmatprep.subr.mxu0 0.0
    %1249 = vmatpush1.msra.mxu0 0.0
    %1250 = vmatprep.subr.mxu0 0.0
    %1251 = vmatpush1.msra.mxu0 0.0
    %1252 = vmatprep.subr.mxu0 0.0
    %1253 = vmatpush1.msra.mxu0 0.0
    %1254 = vmatprep.subr.mxu0 0.0
    %1255 = vmatpush1.msra.mxu0 0.0
    %1256 = vmatprep.subr.mxu0 0.0
    %1257 = vmatpush1.msra.mxu0 0.0
    %1258 = vmatprep.subr.mxu0 0.0
    %1259 = vmatpush1.msra.mxu0 0.0
    %1260 = vmatprep.subr.mxu0 0.0
    %1261 = vmatpush1.msra.mxu0 0.0
    %1262 = vmatprep.mubr.f32.mxu0 0.0
    %1263 = vmatmul.mubr.f32.gmra.mrb[0].mxu0 %v1126
    %v1264 = vpop.f32.mrb[0].mxu0
    %v1265 = vadd.f32 %v226, %v1264
    %v1266 = vpop.f32.mrb[0].mxu0
    %1267 = vdwg.mxu0
    %1268 = vmatprep.subr.mxu0 0.0
    %1269 = vmatpush1.msra.mxu0 %v298
    %1270 = vmatprep.subr.mxu0 0.0
    %1271 = vmatpush1.msra.mxu0 %v299
    %1272 = vmatprep.subr.mxu0 0.0
    %1273 = vmatpush1.msra.mxu0 %v300
    %1274 = vmatprep.subr.mxu0 0.0
    %1275 = vmatpush1.msra.mxu0 %v301
    %1276 = vmatprep.subr.mxu0 0.0
    %1277 = vmatpush1.msra.mxu0 %v302
    %1278 = vmatprep.subr.mxu0 0.0
    %1279 = vmatpush1.msra.mxu0 %v303
    %1280 = vmatprep.subr.mxu0 0.0
    %1281 = vmatpush1.msra.mxu0 %v304
    %1282 = vmatprep.subr.mxu0 0.0
    %1283 = vmatpush1.msra.mxu0 %v305
    %1284 = vmatprep.subr.mxu0 0.0
    %1285 = vmatpush1.msra.mxu0 0.0
    %1286 = vmatprep.subr.mxu0 0.0
    %1287 = vmatpush1.msra.mxu0 0.0
    %1288 = vmatprep.subr.mxu0 0.0
    %1289 = vmatpush1.msra.mxu0 0.0
    %1290 = vmatprep.subr.mxu0 0.0
    %1291 = vmatpush1.msra.mxu0 0.0
    %1292 = vmatprep.subr.mxu0 0.0
    %1293 = vmatpush1.msra.mxu0 0.0
    %1294 = vmatprep.subr.mxu0 0.0
    %1295 = vmatpush1.msra.mxu0 0.0
    %1296 = vmatprep.subr.mxu0 0.0
    %1297 = vmatpush1.msra.mxu0 0.0
    %1298 = vmatprep.subr.mxu0 0.0
    %1299 = vmatpush1.msra.mxu0 0.0
    %1300 = vmatprep.subr.mxu0 0.0
    %1301 = vmatpush1.msra.mxu0 0.0
    %1302 = vmatprep.subr.mxu0 0.0
    %1303 = vmatpush1.msra.mxu0 0.0
    %1304 = vmatprep.subr.mxu0 0.0
    %1305 = vmatpush1.msra.mxu0 0.0
    %1306 = vmatprep.subr.mxu0 0.0
    %1307 = vmatpush1.msra.mxu0 0.0
    %1308 = vmatprep.subr.mxu0 0.0
    %1309 = vmatpush1.msra.mxu0 0.0
    %1310 = vmatprep.subr.mxu0 0.0
    %1311 = vmatpush1.msra.mxu0 0.0
    %1312 = vmatprep.subr.mxu0 0.0
    %1313 = vmatpush1.msra.mxu0 0.0
    %1314 = vmatprep.subr.mxu0 0.0
    %1315 = vmatpush1.msra.mxu0 0.0
    %1316 = vmatprep.subr.mxu0 0.0
    %1317 = vmatpush1.msra.mxu0 0.0
    %1318 = vmatprep.subr.mxu0 0.0
    %1319 = vmatpush1.msra.mxu0 0.0
    %1320 = vmatprep.subr.mxu0 0.0
    %1321 = vmatpush1.msra.mxu0 0.0
    %1322 = vmatprep.subr.mxu0 0.0
    %1323 = vmatpush1.msra.mxu0 0.0
    %1324 = vmatprep.subr.mxu0 0.0
    %1325 = vmatpush1.msra.mxu0 0.0
    %1326 = vmatprep.subr.mxu0 0.0
    %1327 = vmatpush1.msra.mxu0 0.0
    %1328 = vmatprep.subr.mxu0 0.0
    %1329 = vmatpush1.msra.mxu0 0.0
    %1330 = vmatprep.subr.mxu0 0.0
    %1331 = vmatpush1.msra.mxu0 0.0
    %1332 = vmatprep.mubr.f32.mxu0 0.0
    %1333 = vmatmul.mubr.f32.gmra.mrb[0].mxu0 %v1126
    %v1334 = vpop.f32.mrb[0].mxu0
    %v1335 = vadd.f32 %v311, %v1334
    %v1336 = vpop.f32.mrb[0].mxu0
    %1337 = vdwg.mxu0
    %v1339 = vsel %vm383, %v1195, 0
    %v1342 = vsel %vm383, %v1265, 0
    %1344 = vmatprep.subr.mxu0 0.0
    %1345 = vmatpush1.xpose.msra.mxu0 %v1342
    %1346 = vmatprep.subr.mxu0 0.0
    %1347 = vmatpush1.xpose.msra.mxu0 0.0
    %1348 = vmatprep.subr.mxu0 0.0
    %1349 = vmatpush1.xpose.msra.mxu0 0.0
    %1350 = vmatprep.subr.mxu0 0.0
    %1351 = vmatpush1.xpose.msra.mxu0 0.0
    %1352 = vmatprep.subr.mxu0 0.0
    %1353 = vmatpush1.xpose.msra.mxu0 0.0
    %1354 = vmatprep.subr.mxu0 0.0
    %1355 = vmatpush1.xpose.msra.mxu0 0.0
    %1356 = vmatprep.subr.mxu0 0.0
    %1357 = vmatpush1.xpose.msra.mxu0 0.0
    %1358 = vmatprep.subr.mxu0 0.0
    %1359 = vmatpush1.xpose.msra.mxu0 0.0
    %1360 = vmatprep.subr.mxu0 0.0
    %1361 = vmatpush1.xpose.msra.mxu0 0.0
    %1362 = vmatprep.subr.mxu0 0.0
    %1363 = vmatpush1.xpose.msra.mxu0 0.0
    %1364 = vmatprep.subr.mxu0 0.0
    %1365 = vmatpush1.xpose.msra.mxu0 0.0
    %1366 = vmatprep.subr.mxu0 0.0
    %1367 = vmatpush1.xpose.msra.mxu0 0.0
    %1368 = vmatprep.subr.mxu0 0.0
    %1369 = vmatpush1.xpose.msra.mxu0 0.0
    %1370 = vmatprep.subr.mxu0 0.0
    %1371 = vmatpush1.xpose.msra.mxu0 0.0
    %1372 = vmatprep.subr.mxu0 0.0
    %1373 = vmatpush1.xpose.msra.mxu0 0.0
    %1374 = vmatprep.subr.mxu0 0.0
    %1375 = vmatpush1.xpose.msra.mxu0 0.0
    %1376 = vmatprep.subr.mxu0 0.0
    %1377 = vmatpush1.xpose.msra.mxu0 0.0
    %1378 = vmatprep.subr.mxu0 0.0
    %1379 = vmatpush1.xpose.msra.mxu0 0.0
    %1380 = vmatprep.subr.mxu0 0.0
    %1381 = vmatpush1.xpose.msra.mxu0 0.0
    %1382 = vmatprep.subr.mxu0 0.0
    %1383 = vmatpush1.xpose.msra.mxu0 0.0
    %1384 = vmatprep.subr.mxu0 0.0
    %1385 = vmatpush1.xpose.msra.mxu0 0.0
    %1386 = vmatprep.subr.mxu0 0.0
    %1387 = vmatpush1.xpose.msra.mxu0 0.0
    %1388 = vmatprep.subr.mxu0 0.0
    %1389 = vmatpush1.xpose.msra.mxu0 0.0
    %1390 = vmatprep.subr.mxu0 0.0
    %1391 = vmatpush1.xpose.msra.mxu0 0.0
    %1392 = vmatprep.subr.mxu0 0.0
    %1393 = vmatpush1.xpose.msra.mxu0 0.0
    %1394 = vmatprep.subr.mxu0 0.0
    %1395 = vmatpush1.xpose.msra.mxu0 0.0
    %1396 = vmatprep.subr.mxu0 0.0
    %1397 = vmatpush1.xpose.msra.mxu0 0.0
    %1398 = vmatprep.subr.mxu0 0.0
    %1399 = vmatpush1.xpose.msra.mxu0 0.0
    %1400 = vmatprep.subr.mxu0 0.0
    %1401 = vmatpush1.xpose.msra.mxu0 0.0
    %1402 = vmatprep.subr.mxu0 0.0
    %1403 = vmatpush1.xpose.msra.mxu0 0.0
    %1404 = vmatprep.subr.mxu0 0.0
    %1405 = vmatpush1.xpose.msra.mxu0 0.0
    %1406 = vmatprep.subr.mxu0 0.0
    %1407 = vmatpush1.xpose.msra.mxu0 0.0
    %1408 = vmatprep.mubr.f32.mxu0 0.0
    %1409 = vmatmul.mubr.f32.gmra.mrb[0].mxu0 %v1339
    %v1410 = vpop.f32.mrb[0].mxu0
    %v1411 = vadd.f32 0.0, %v1410
    %v1412 = vpop.f32.mrb[0].mxu0
    %1413 = vdwg.mxu0
    %v1414 = vmul.f32 %v1411, 0.17677669
    %v1415 = vadd.f32 %v1414, %v124
    %v1416 = vsel %vm462, %v1415, -inf
    %1417 = vmax.xlane.f32.xlu0 %v1416
    %v1418 = vpop.xlane.xlu0 %1417
    %v1419 = vsub.f32 %v1415, %v1418
    %v1420 = vmul.f32 %v1419, 1.442695
    %v1421 = vpow.pop %v1420
    %v1422 = vsel %vm462, %v1421, 0.0
    %1423 = vadd.xlane.f32.xlu0 %v1422
    %v1424 = vpop.xlane.xlu0 %1423
    %v1425 = vrcp.pop %v1424
    %v1426 = vmul.f32 %v1421, %v1425
    %v1428 = vsel %vm462, %v1426, 0
    %1430 = vmatprep.subr.mxu0 0.0
    %1431 = vmatpush1.msra.mxu0 %v1335
    %1432 = vmatprep.subr.mxu0 0.0
    %1433 = vmatpush1.msra.mxu0 0.0
    %1434 = vmatprep.subr.mxu0 0.0
    %1435 = vmatpush1.msra.mxu0 0.0
    %1436 = vmatprep.subr.mxu0 0.0
    %1437 = vmatpush1.msra.mxu0 0.0
    %1438 = vmatprep.subr.mxu0 0.0
    %1439 = vmatpush1.msra.mxu0 0.0
    %1440 = vmatprep.subr.mxu0 0.0
    %1441 = vmatpush1.msra.mxu0 0.0
    %1442 = vmatprep.subr.mxu0 0.0
    %1443 = vmatpush1.msra.mxu0 0.0
    %1444 = vmatprep.subr.mxu0 0.0
    %1445 = vmatpush1.msra.mxu0 0.0
    %1446 = vmatprep.subr.mxu0 0.0
    %1447 = vmatpush1.msra.mxu0 0.0
    %1448 = vmatprep.subr.mxu0 0.0
    %1449 = vmatpush1.msra.mxu0 0.0
    %1450 = vmatprep.subr.mxu0 0.0
    %1451 = vmatpush1.msra.mxu0 0.0
    %1452 = vmatprep.subr.mxu0 0.0
    %1453 = vmatpush1.msra.mxu0 0.0
    %1454 = vmatprep.subr.mxu0 0.0
    %1455 = vmatpush1.msra.mxu0 0.0
    %1456 = vmatprep.subr.mxu0 0.0
    %1457 = vmatpush1.msra.mxu0 0.0
    %1458 = vmatprep.subr.mxu0 0.0
    %1459 = vmatpush1.msra.mxu0 0.0
    %1460 = vmatprep.subr.mxu0 0.0
    %1461 = vmatpush1.msra.mxu0 0.0
    %1462 = vmatprep.subr.mxu0 0.0
    %1463 = vmatpush1.msra.mxu0 0.0
    %1464 = vmatprep.subr.mxu0 0.0
    %1465 = vmatpush1.msra.mxu0 0.0
    %1466 = vmatprep.subr.mxu0 0.0
    %1467 = vmatpush1.msra.mxu0 0.0
    %1468 = vmatprep.subr.mxu0 0.0
    %1469 = vmatpush1.msra.mxu0 0.0
    %1470 = vmatprep.subr.mxu0 0.0
    %1471 = vmatpush1.msra.mxu0 0.0
    %1472 = vmatprep.subr.mxu0 0.0
    %1473 = vmatpush1.msra.mxu0 0.0
    %1474 = vmatprep.subr.mxu0 0.0
    %1475 = vmatpush1.msra.mxu0 0.0
    %1476 = vmatprep.subr.mxu0 0.0
    %1477 = vmatpush1.msra.mxu0 0.0
    %1478 = vmatprep.subr.mxu0 0.0
    %1479 = vmatpush1.msra.mxu0 0.0
    %1480 = vmatprep.subr.mxu0 0.0
    %1481 = vmatpush1.msra.mxu0 0.0
    %1482 = vmatprep.subr.mxu0 0.0
    %1483 = vmatpush1.msra.mxu0 0.0
    %1484 = vmatprep.subr.mxu0 0.0
    %1485 = vmatpush1.msra.mxu0 0.0
    %1486 = vmatprep.subr.mxu0 0.0
    %1487 = vmatpush1.msra.mxu0 0.0
    %1488 = vmatprep.subr.mxu0 0.0
    %1489 = vmatpush1.msra.mxu0 0.0
    %1490 = vmatprep.subr.mxu0 0.0
    %1491 = vmatpush1.msra.mxu0 0.0
    %1492 = vmatprep.subr.mxu0 0.0
    %1493 = vmatpush1.msra.mxu0 0.0
    %1494 = vmatprep.mubr.f32.mxu0 0.0
    %1495 = vmatmul.mubr.f32.gmra.mrb[0].mxu0 %v1428
    %v1496 = vpop.f32.mrb[0].mxu0
    %v1497 = vadd.f32 0.0, %v1496
    %v1498 = vpop.f32.mrb[0].mxu0
    %1499 = vdwg.mxu0
    %1500 = vmatprep.subr.mxu0 0.0
    %1501 = vmatpush1.msra.mxu0 %v552
    %1502 = vmatprep.subr.mxu0 0.0
    %1503 = vmatpush1.msra.mxu0 %v553
    %1504 = vmatprep.subr.mxu0 0.0
    %1505 = vmatpush1.msra.mxu0 %v554
    %1506 = vmatprep.subr.mxu0 0.0
    %1507 = vmatpush1.msra.mxu0 %v555
    %1508 = vmatprep.subr.mxu0 0.0
    %1509 = vmatpush1.msra.mxu0 %v556
    %1510 = vmatprep.subr.mxu0 0.0
    %1511 = vmatpush1.msra.mxu0 %v557
    %1512 = vmatprep.subr.mxu0 0.0
    %1513 = vmatpush1.msra.mxu0 %v558
    %1514 = vmatprep.subr.mxu0 0.0
    %1515 = vmatpush1.msra.mxu0 %v559
    %1516 = vmatprep.subr.mxu0 0.0
    %1517 = vmatpush1.msra.mxu0 0.0
    %1518 = vmatprep.subr.mxu0 0.0
    %1519 = vmatpush1.msra.mxu0 0.0
    %1520 = vmatprep.subr.mxu0 0.0
    %1521 = vmatpush1.msra.mxu0 0.0
    %1522 = vmatprep.subr.mxu0 0.0
    %1523 = vmatpush1.msra.mxu0 0.0
    %1524 = vmatprep.subr.mxu0 0.0
    %1525 = vmatpush1.msra.mxu0 0.0
    %1526 = vmatprep.subr.mxu0 0.0
    %1527 = vmatpush1.msra.mxu0 0.0
    %1528 = vmatprep.subr.mxu0 0.0
    %1529 = vmatpush1.msra.mxu0 0.0
    %1530 = vmatprep.subr.mxu0 0.0
    %1531 = vmatpush1.msra.mxu0 0.0
    %1532 = vmatprep.subr.mxu0 0.0
    %1533 = vmatpush1.msra.mxu0 0.0
    %1534 = vmatprep.subr.mxu0 0.0
    %1535 = vmatpush1.msra.mxu0 0.0
    %1536 = vmatprep.subr.mxu0 0.0
    %1537 = vmatpush1.msra.mxu0 0.0
    %1538 = vmatprep.subr.mxu0 0.0
    %1539 = vmatpush1.msra.mxu0 0.0
    %1540 = vmatprep.subr.mxu0 0.0
    %1541 = vmatpush1.msra.mxu0 0.0
    %1542 = vmatprep.subr.mxu0 0.0
    %1543 = vmatpush1.msra.mxu0 0.0
    %1544 = vmatprep.subr.mxu0 0.0
    %1545 = vmatpush1.msra.mxu0 0.0
    %1546 = vmatprep.subr.mxu0 0.0
    %1547 = vmatpush1.msra.mxu0 0.0
    %1548 = vmatprep.subr.mxu0 0.0
    %1549 = vmatpush1.msra.mxu0 0.0
    %1550 = vmatprep.subr.mxu0 0.0
    %1551 = vmatpush1.msra.mxu0 0.0
    %1552 = vmatprep.subr.mxu0 0.0
    %1553 = vmatpush1.msra.mxu0 0.0
    %1554 = vmatprep.subr.mxu0 0.0
    %1555 = vmatpush1.msra.mxu0 0.0
    %1556 = vmatprep.subr.mxu0 0.0
    %1557 = vmatpush1.msra.mxu0 0.0
    %1558 = vmatprep.subr.mxu0 0.0
    %1559 = vmatpush1.msra.mxu0 0.0
    %1560 = vmatprep.subr.mxu0 0.0
    %1561 = vmatpush1.msra.mxu0 0.0
    %1562 = vmatprep.subr.mxu0 0.0
    %1563 = vmatpush1.msra.mxu0 0.0
    %1564 = vmatprep.mubr.f32.mxu0 0.0
    %1565 = vmatmul.mubr.f32.gmra.mrb[0].mxu0 %v1126
    %v1566 = vpop.f32.mrb[0].mxu0
    %v1567 = vadd.f32 %v566, %v1566
    %v1568 = vpop.f32.mrb[0].mxu0
    %1569 = vdwg.mxu0
    %1570 = vmatprep.subr.mxu0 0.0
    %1571 = vmatpush1.msra.mxu0 %v639
    %1572 = vmatprep.subr.mxu0 0.0
    %1573 = vmatpush1.msra.mxu0 %v640
    %1574 = vmatprep.subr.mxu0 0.0
    %1575 = vmatpush1.msra.mxu0 %v641
    %1576 = vmatprep.subr.mxu0 0.0
    %1577 = vmatpush1.msra.mxu0 %v642
    %1578 = vmatprep.subr.mxu0 0.0
    %1579 = vmatpush1.msra.mxu0 %v643
    %1580 = vmatprep.subr.mxu0 0.0
    %1581 = vmatpush1.msra.mxu0 %v644
    %1582 = vmatprep.subr.mxu0 0.0
    %1583 = vmatpush1.msra.mxu0 %v645
    %1584 = vmatprep.subr.mxu0 0.0
    %1585 = vmatpush1.msra.mxu0 %v646
    %1586 = vmatprep.subr.mxu0 0.0
    %1587 = vmatpush1.msra.mxu0 0.0
    %1588 = vmatprep.subr.mxu0 0.0
    %1589 = vmatpush1.msra.mxu0 0.0
    %1590 = vmatprep.subr.mxu0 0.0
    %1591 = vmatpush1.msra.mxu0 0.0
    %1592 = vmatprep.subr.mxu0 0.0
    %1593 = vmatpush1.msra.mxu0 0.0
    %1594 = vmatprep.subr.mxu0 0.0
    %1595 = vmatpush1.msra.mxu0 0.0
    %1596 = vmatprep.subr.mxu0 0.0
    %1597 = vmatpush1.msra.mxu0 0.0
    %1598 = vmatprep.subr.mxu0 0.0
    %1599 = vmatpush1.msra.mxu0 0.0
    %1600 = vmatprep.subr.mxu0 0.0
    %1601 = vmatpush1.msra.mxu0 0.0
    %1602 = vmatprep.subr.mxu0 0.0
    %1603 = vmatpush1.msra.mxu0 0.0
    %1604 = vmatprep.subr.mxu0 0.0
    %1605 = vmatpush1.msra.mxu0 0.0
    %1606 = vmatprep.subr.mxu0 0.0
    %1607 = vmatpush1.msra.mxu0 0.0
    %1608 = vmatprep.subr.mxu0 0.0
    %1609 = vmatpush1.msra.mxu0 0.0
    %1610 = vmatprep.subr.mxu0 0.0
    %1611 = vmatpush1.msra.mxu0 0.0
    %1612 = vmatprep.subr.mxu0 0.0
    %1613 = vmatpush1.msra.mxu0 0.0
    %1614 = vmatprep.subr.mxu0 0.0
    %1615 = vmatpush1.msra.mxu0 0.0
    %1616 = vmatprep.subr.mxu0 0.0
    %1617 = vmatpush1.msra.mxu0 0.0
    %1618 = vmatprep.subr.mxu0 0.0
    %1619 = vmatpush1.msra.mxu0 0.0
    %1620 = vmatprep.subr.mxu0 0.0
    %1621 = vmatpush1.msra.mxu0 0.0
    %1622 = vmatprep.subr.mxu0 0.0
    %1623 = vmatpush1.msra.mxu0 0.0
    %1624 = vmatprep.subr.mxu0 0.0
    %1625 = vmatpush1.msra.mxu0 0.0
    %1626 = vmatprep.subr.mxu0 0.0
    %1627 = vmatpush1.msra.mxu0 0.0
    %1628 = vmatprep.subr.mxu0 0.0
    %1629 = vmatpush1.msra.mxu0 0.0
    %1630 = vmatprep.subr.mxu0 0.0
    %1631 = vmatpush1.msra.mxu0 0.0
    %1632 = vmatprep.subr.mxu0 0.0
    %1633 = vmatpush1.msra.mxu0 0.0
    %1634 = vmatprep.mubr.f32.mxu0 0.0
    %1635 = vmatmul.mubr.f32.gmra.mrb[0].mxu0 %v1126
    %v1636 = vpop.f32.mrb[0].mxu0
    %v1637 = vadd.f32 %v653, %v1636
    %v1638 = vpop.f32.mrb[0].mxu0
    %1639 = vdwg.mxu0
    %1640 = vmatprep.subr.mxu0 0.0
    %1641 = vmatpush1.msra.mxu0 %v726
    %1642 = vmatprep.subr.mxu0 0.0
    %1643 = vmatpush1.msra.mxu0 %v727
    %1644 = vmatprep.subr.mxu0 0.0
    %1645 = vmatpush1.msra.mxu0 %v728
    %1646 = vmatprep.subr.mxu0 0.0
    %1647 = vmatpush1.msra.mxu0 %v729
    %1648 = vmatprep.subr.mxu0 0.0
    %1649 = vmatpush1.msra.mxu0 %v730
    %1650 = vmatprep.subr.mxu0 0.0
    %1651 = vmatpush1.msra.mxu0 %v731
    %1652 = vmatprep.subr.mxu0 0.0
    %1653 = vmatpush1.msra.mxu0 %v732
    %1654 = vmatprep.subr.mxu0 0.0
    %1655 = vmatpush1.msra.mxu0 %v733
    %1656 = vmatprep.subr.mxu0 0.0
    %1657 = vmatpush1.msra.mxu0 0.0
    %1658 = vmatprep.subr.mxu0 0.0
    %1659 = vmatpush1.msra.mxu0 0.0
    %1660 = vmatprep.subr.mxu0 0.0
    %1661 = vmatpush1.msra.mxu0 0.0
    %1662 = vmatprep.subr.mxu0 0.0
    %1663 = vmatpush1.msra.mxu0 0.0
    %1664 = vmatprep.subr.mxu0 0.0
    %1665 = vmatpush1.msra.mxu0 0.0
    %1666 = vmatprep.subr.mxu0 0.0
    %1667 = vmatpush1.msra.mxu0 0.0
    %1668 = vmatprep.subr.mxu0 0.0
    %1669 = vmatpush1.msra.mxu0 0.0
    %1670 = vmatprep.subr.mxu0 0.0
    %1671 = vmatpush1.msra.mxu0 0.0
    %1672 = vmatprep.subr.mxu0 0.0
    %1673 = vmatpush1.msra.mxu0 0.0
    %1674 = vmatprep.subr.mxu0 0.0
    %1675 = vmatpush1.msra.mxu0 0.0
    %1676 = vmatprep.subr.mxu0 0.0
    %1677 = vmatpush1.msra.mxu0 0.0
    %1678 = vmatprep.subr.mxu0 0.0
    %1679 = vmatpush1.msra.mxu0 0.0
    %1680 = vmatprep.subr.mxu0 0.0
    %1681 = vmatpush1.msra.mxu0 0.0
    %1682 = vmatprep.subr.mxu0 0.0
    %1683 = vmatpush1.msra.mxu0 0.0
    %1684 = vmatprep.subr.mxu0 0.0
    %1685 = vmatpush1.msra.mxu0 0.0
    %1686 = vmatprep.subr.mxu0 0.0
    %1687 = vmatpush1.msra.mxu0 0.0
    %1688 = vmatprep.subr.mxu0 0.0
    %1689 = vmatpush1.msra.mxu0 0.0
    %1690 = vmatprep.subr.mxu0 0.0
    %1691 = vmatpush1.msra.mxu0 0.0
    %1692 = vmatprep.subr.mxu0 0.0
    %1693 = vmatpush1.msra.mxu0 0.0
    %1694 = vmatprep.subr.mxu0 0.0
    %1695 = vmatpush1.msra.mxu0 0.0
    %1696 = vmatprep.subr.mxu0 0.0
    %1697 = vmatpush1.msra.mxu0 0.0
    %1698 = vmatprep.subr.mxu0 0.0
    %1699 = vmatpush1.msra.mxu0 0.0
    %1700 = vmatprep.subr.mxu0 0.0
    %1701 = vmatpush1.msra.mxu0 0.0
    %1702 = vmatprep.subr.mxu0 0.0
    %1703 = vmatpush1.msra.mxu0 0.0
    %1704 = vmatprep.mubr.f32.mxu0 0.0
    %1705 = vmatmul.mubr.f32.gmra.mrb[0].mxu0 %v1126
    %v1706 = vpop.f32.mrb[0].mxu0
    %v1707 = vadd.f32 %v740, %v1706
    %v1708 = vpop.f32.mrb[0].mxu0
    %1709 = vdwg.mxu0
    %v1711 = vsel %vm383, %v1567, 0
    %v1714 = vsel %vm383, %v1637, 0
    %1716 = vmatprep.subr.mxu0 0.0
    %1717 = vmatpush1.xpose.msra.mxu0 %v1714
    %1718 = vmatprep.subr.mxu0 0.0
    %1719 = vmatpush1.xpose.msra.mxu0 0.0
    %1720 = vmatprep.subr.mxu0 0.0
    %1721 = vmatpush1.xpose.msra.mxu0 0.0
    %1722 = vmatprep.subr.mxu0 0.0
    %1723 = vmatpush1.xpose.msra.mxu0 0.0
    %1724 = vmatprep.subr.mxu0 0.0
    %1725 = vmatpush1.xpose.msra.mxu0 0.0
    %1726 = vmatprep.subr.mxu0 0.0
    %1727 = vmatpush1.xpose.msra.mxu0 0.0
    %1728 = vmatprep.subr.mxu0 0.0
    %1729 = vmatpush1.xpose.msra.mxu0 0.0
    %1730 = vmatprep.subr.mxu0 0.0
    %1731 = vmatpush1.xpose.msra.mxu0 0.0
    %1732 = vmatprep.subr.mxu0 0.0
    %1733 = vmatpush1.xpose.msra.mxu0 0.0
    %1734 = vmatprep.subr.mxu0 0.0
    %1735 = vmatpush1.xpose.msra.mxu0 0.0
    %1736 = vmatprep.subr.mxu0 0.0
    %1737 = vmatpush1.xpose.msra.mxu0 0.0
    %1738 = vmatprep.subr.mxu0 0.0
    %1739 = vmatpush1.xpose.msra.mxu0 0.0
    %1740 = vmatprep.subr.mxu0 0.0
    %1741 = vmatpush1.xpose.msra.mxu0 0.0
    %1742 = vmatprep.subr.mxu0 0.0
    %1743 = vmatpush1.xpose.msra.mxu0 0.0
    %1744 = vmatprep.subr.mxu0 0.0
    %1745 = vmatpush1.xpose.msra.mxu0 0.0
    %1746 = vmatprep.subr.mxu0 0.0
    %1747 = vmatpush1.xpose.msra.mxu0 0.0
    %1748 = vmatprep.subr.mxu0 0.0
    %1749 = vmatpush1.xpose.msra.mxu0 0.0
    %1750 = vmatprep.subr.mxu0 0.0
    %1751 = vmatpush1.xpose.msra.mxu0 0.0
    %1752 = vmatprep.subr.mxu0 0.0
    %1753 = vmatpush1.xpose.msra.mxu0 0.0
    %1754 = vmatprep.subr.mxu0 0.0
    %1755 = vmatpush1.xpose.msra.mxu0 0.0
    %1756 = vmatprep.subr.mxu0 0.0
    %1757 = vmatpush1.xpose.msra.mxu0 0.0
    %1758 = vmatprep.subr.mxu0 0.0
    %1759 = vmatpush1.xpose.msra.mxu0 0.0
    %1760 = vmatprep.subr.mxu0 0.0
    %1761 = vmatpush1.xpose.msra.mxu0 0.0
    %1762 = vmatprep.subr.mxu0 0.0
    %1763 = vmatpush1.xpose.msra.mxu0 0.0
    %1764 = vmatprep.subr.mxu0 0.0
    %1765 = vmatpush1.xpose.msra.mxu0 0.0
    %1766 = vmatprep.subr.mxu0 0.0
    %1767 = vmatpush1.xpose.msra.mxu0 0.0
    %1768 = vmatprep.subr.mxu0 0.0
    %1769 = vmatpush1.xpose.msra.mxu0 0.0
    %1770 = vmatprep.subr.mxu0 0.0
    %1771 = vmatpush1.xpose.msra.mxu0 0.0
    %1772 = vmatprep.subr.mxu0 0.0
    %1773 = vmatpush1.xpose.msra.mxu0 0.0
    %1774 = vmatprep.subr.mxu0 0.0
    %1775 = vmatpush1.xpose.msra.mxu0 0.0
    %1776 = vmatprep.subr.mxu0 0.0
    %1777 = vmatpush1.xpose.msra.mxu0 0.0
    %1778 = vmatprep.subr.mxu0 0.0
    %1779 = vmatpush1.xpose.msra.mxu0 0.0
    %1780 = vmatprep.mubr.f32.mxu0 0.0
    %1781 = vmatmul.mubr.f32.gmra.mrb[0].mxu0 %v1711
    %v1782 = vpop.f32.mrb[0].mxu0
    %v1783 = vadd.f32 0.0, %v1782
    %v1784 = vpop.f32.mrb[0].mxu0
    %1785 = vdwg.mxu0
    %v1786 = vmul.f32 %v1783, 0.17677669
    %v1787 = vadd.f32 %v1786, %v124
    %v1788 = vsel %vm462, %v1787, -inf
    %1789 = vmax.xlane.f32.xlu0 %v1788
    %v1790 = vpop.xlane.xlu0 %1789
    %v1791 = vsub.f32 %v1787, %v1790
    %v1792 = vmul.f32 %v1791, 1.442695
    %v1793 = vpow.pop %v1792
    %v1794 = vsel %vm462, %v1793, 0.0
    %1795 = vadd.xlane.f32.xlu0 %v1794
    %v1796 = vpop.xlane.xlu0 %1795
    %v1797 = vrcp.pop %v1796
    %v1798 = vmul.f32 %v1793, %v1797
    %v1800 = vsel %vm462, %v1798, 0
    %1802 = vmatprep.subr.mxu0 0.0
    %1803 = vmatpush1.msra.mxu0 %v1707
    %1804 = vmatprep.subr.mxu0 0.0
    %1805 = vmatpush1.msra.mxu0 0.0
    %1806 = vmatprep.subr.mxu0 0.0
    %1807 = vmatpush1.msra.mxu0 0.0
    %1808 = vmatprep.subr.mxu0 0.0
    %1809 = vmatpush1.msra.mxu0 0.0
    %1810 = vmatprep.subr.mxu0 0.0
    %1811 = vmatpush1.msra.mxu0 0.0
    %1812 = vmatprep.subr.mxu0 0.0
    %1813 = vmatpush1.msra.mxu0 0.0
    %1814 = vmatprep.subr.mxu0 0.0
    %1815 = vmatpush1.msra.mxu0 0.0
    %1816 = vmatprep.subr.mxu0 0.0
    %1817 = vmatpush1.msra.mxu0 0.0
    %1818 = vmatprep.subr.mxu0 0.0
    %1819 = vmatpush1.msra.mxu0 0.0
    %1820 = vmatprep.subr.mxu0 0.0
    %1821 = vmatpush1.msra.mxu0 0.0
    %1822 = vmatprep.subr.mxu0 0.0
    %1823 = vmatpush1.msra.mxu0 0.0
    %1824 = vmatprep.subr.mxu0 0.0
    %1825 = vmatpush1.msra.mxu0 0.0
    %1826 = vmatprep.subr.mxu0 0.0
    %1827 = vmatpush1.msra.mxu0 0.0
    %1828 = vmatprep.subr.mxu0 0.0
    %1829 = vmatpush1.msra.mxu0 0.0
    %1830 = vmatprep.subr.mxu0 0.0
    %1831 = vmatpush1.msra.mxu0 0.0
    %1832 = vmatprep.subr.mxu0 0.0
    %1833 = vmatpush1.msra.mxu0 0.0
    %1834 = vmatprep.subr.mxu0 0.0
    %1835 = vmatpush1.msra.mxu0 0.0
    %1836 = vmatprep.subr.mxu0 0.0
    %1837 = vmatpush1.msra.mxu0 0.0
    %1838 = vmatprep.subr.mxu0 0.0
    %1839 = vmatpush1.msra.mxu0 0.0
    %1840 = vmatprep.subr.mxu0 0.0
    %1841 = vmatpush1.msra.mxu0 0.0
    %1842 = vmatprep.subr.mxu0 0.0
    %1843 = vmatpush1.msra.mxu0 0.0
    %1844 = vmatprep.subr.mxu0 0.0
    %1845 = vmatpush1.msra.mxu0 0.0
    %1846 = vmatprep.subr.mxu0 0.0
    %1847 = vmatpush1.msra.mxu0 0.0
    %1848 = vmatprep.subr.mxu0 0.0
    %1849 = vmatpush1.msra.mxu0 0.0
    %1850 = vmatprep.subr.mxu0 0.0
    %1851 = vmatpush1.msra.mxu0 0.0
    %1852 = vmatprep.subr.mxu0 0.0
    %1853 = vmatpush1.msra.mxu0 0.0
    %1854 = vmatprep.subr.mxu0 0.0
    %1855 = vmatpush1.msra.mxu0 0.0
    %1856 = vmatprep.subr.mxu0 0.0
    %1857 = vmatpush1.msra.mxu0 0.0
    %1858 = vmatprep.subr.mxu0 0.0
    %1859 = vmatpush1.msra.mxu0 0.0
    %1860 = vmatprep.subr.mxu0 0.0
    %1861 = vmatpush1.msra.mxu0 0.0
    %1862 = vmatprep.subr.mxu0 0.0
    %1863 = vmatpush1.msra.mxu0 0.0
    %1864 = vmatprep.subr.mxu0 0.0
    %1865 = vmatpush1.msra.mxu0 0.0
    %1866 = vmatprep.mubr.f32.mxu0 0.0
    %1867 = vmatmul.mubr.f32.gmra.mrb[0].mxu0 %v1800
    %v1868 = vpop.f32.mrb[0].mxu0
    %v1869 = vadd.f32 0.0, %v1868
    %v1870 = vpop.f32.mrb[0].mxu0
    %1871 = vdwg.mxu0
    %v1873 = vsel %vm383, %v1869, 0
    %1875 = vmatprep.subr.mxu0 0.0
    %1876 = vmatpush1.msra.mxu0 %v975
    %1877 = vmatprep.subr.mxu0 0.0
    %1878 = vmatpush1.msra.mxu0 %v976
    %1879 = vmatprep.subr.mxu0 0.0
    %1880 = vmatpush1.msra.mxu0 %v977
    %1881 = vmatprep.subr.mxu0 0.0
    %1882 = vmatpush1.msra.mxu0 %v978
    %1883 = vmatprep.subr.mxu0 0.0
    %1884 = vmatpush1.msra.mxu0 0.0
    %1885 = vmatprep.subr.mxu0 0.0
    %1886 = vmatpush1.msra.mxu0 0.0
    %1887 = vmatprep.subr.mxu0 0.0
    %1888 = vmatpush1.msra.mxu0 0.0
    %1889 = vmatprep.subr.mxu0 0.0
    %1890 = vmatpush1.msra.mxu0 0.0
    %1891 = vmatprep.subr.mxu0 0.0
    %1892 = vmatpush1.msra.mxu0 0.0
    %1893 = vmatprep.subr.mxu0 0.0
    %1894 = vmatpush1.msra.mxu0 0.0
    %1895 = vmatprep.subr.mxu0 0.0
    %1896 = vmatpush1.msra.mxu0 0.0
    %1897 = vmatprep.subr.mxu0 0.0
    %1898 = vmatpush1.msra.mxu0 0.0
    %1899 = vmatprep.subr.mxu0 0.0
    %1900 = vmatpush1.msra.mxu0 0.0
    %1901 = vmatprep.subr.mxu0 0.0
    %1902 = vmatpush1.msra.mxu0 0.0
    %1903 = vmatprep.subr.mxu0 0.0
    %1904 = vmatpush1.msra.mxu0 0.0
    %1905 = vmatprep.subr.mxu0 0.0
    %1906 = vmatpush1.msra.mxu0 0.0
    %1907 = vmatprep.subr.mxu0 0.0
    %1908 = vmatpush1.msra.mxu0 0.0
    %1909 = vmatprep.subr.mxu0 0.0
    %1910 = vmatpush1.msra.mxu0 0.0
    %1911 = vmatprep.subr.mxu0 0.0
    %1912 = vmatpush1.msra.mxu0 0.0
    %1913 = vmatprep.subr.mxu0 0.0
    %1914 = vmatpush1.msra.mxu0 0.0
    %1915 = vmatprep.subr.mxu0 0.0
    %1916 = vmatpush1.msra.mxu0 0.0
    %1917 = vmatprep.subr.mxu0 0.0
    %1918 = vmatpush1.msra.mxu0 0.0
    %1919 = vmatprep.subr.mxu0 0.0
    %1920 = vmatpush1.msra.mxu0 0.0
    %1921 = vmatprep.subr.mxu0 0.0
    %1922 = vmatpush1.msra.mxu0 0.0
    %1923 = vmatprep.subr.mxu0 0.0
    %1924 = vmatpush1.msra.mxu0 0.0
    %1925 = vmatprep.subr.mxu0 0.0
    %1926 = vmatpush1.msra.mxu0 0.0
    %1927 = vmatprep.subr.mxu0 0.0
    %1928 = vmatpush1.msra.mxu0 0.0
    %1929 = vmatprep.subr.mxu0 0.0
    %1930 = vmatpush1.msra.mxu0 0.0
    %1931 = vmatprep.subr.mxu0 0.0
    %1932 = vmatpush1.msra.mxu0 0.0
    %1933 = vmatprep.subr.mxu0 0.0
    %1934 = vmatpush1.msra.mxu0 0.0
    %1935 = vmatprep.subr.mxu0 0.0
    %1936 = vmatpush1.msra.mxu0 0.0
    %1937 = vmatprep.subr.mxu0 0.0
    %1938 = vmatpush1.msra.mxu0 0.0
    %1939 = vmatprep.mubr.f32.mxu0 0.0
    %1940 = vmatmul.mubr.f32.gmra.mrb[0].mxu0 %v1873
    %v1941 = vpop.f32.mrb[0].mxu0
    %v1942 = vadd.f32 0.0, %v1941
    %v1943 = vpop.f32.mrb[0].mxu0
    %1944 = vdwg.mxu0
    %v1946 = vsel %vm383, %v1497, 0
    %1948 = vmatprep.subr.mxu0 0.0
    %1949 = vmatpush1.msra.mxu0 %v547
    %1950 = vmatprep.subr.mxu0 0.0
    %1951 = vmatpush1.msra.mxu0 %v548
    %1952 = vmatprep.subr.mxu0 0.0
    %1953 = vmatpush1.msra.mxu0 %v549
    %1954 = vmatprep.subr.mxu0 0.0
    %1955 = vmatpush1.msra.mxu0 %v550
    %1956 = vmatprep.subr.mxu0 0.0
    %1957 = vmatpush1.msra.mxu0 0.0
    %1958 = vmatprep.subr.mxu0 0.0
    %1959 = vmatpush1.msra.mxu0 0.0
    %1960 = vmatprep.subr.mxu0 0.0
    %1961 = vmatpush1.msra.mxu0 0.0
    %1962 = vmatprep.subr.mxu0 0.0
    %1963 = vmatpush1.msra.mxu0 0.0
    %1964 = vmatprep.subr.mxu0 0.0
    %1965 = vmatpush1.msra.mxu0 0.0
    %1966 = vmatprep.subr.mxu0 0.0
    %1967 = vmatpush1.msra.mxu0 0.0
    %1968 = vmatprep.subr.mxu0 0.0
    %1969 = vmatpush1.msra.mxu0 0.0
    %1970 = vmatprep.subr.mxu0 0.0
    %1971 = vmatpush1.msra.mxu0 0.0
    %1972 = vmatprep.subr.mxu0 0.0
    %1973 = vmatpush1.msra.mxu0 0.0
    %1974 = vmatprep.subr.mxu0 0.0
    %1975 = vmatpush1.msra.mxu0 0.0
    %1976 = vmatprep.subr.mxu0 0.0
    %1977 = vmatpush1.msra.mxu0 0.0
    %1978 = vmatprep.subr.mxu0 0.0
    %1979 = vmatpush1.msra.mxu0 0.0
    %1980 = vmatprep.subr.mxu0 0.0
    %1981 = vmatpush1.msra.mxu0 0.0
    %1982 = vmatprep.subr.mxu0 0.0
    %1983 = vmatpush1.msra.mxu0 0.0
    %1984 = vmatprep.subr.mxu0 0.0
    %1985 = vmatpush1.msra.mxu0 0.0
    %1986 = vmatprep.subr.mxu0 0.0
    %1987 = vmatpush1.msra.mxu0 0.0
    %1988 = vmatprep.subr.mxu0 0.0
    %1989 = vmatpush1.msra.mxu0 0.0
    %1990 = vmatprep.subr.mxu0 0.0
    %1991 = vmatpush1.msra.mxu0 0.0
    %1992 = vmatprep.subr.mxu0 0.0
    %1993 = vmatpush1.msra.mxu0 0.0
    %1994 = vmatprep.subr.mxu0 0.0
    %1995 = vmatpush1.msra.mxu0 0.0
    %1996 = vmatprep.subr.mxu0 0.0
    %1997 = vmatpush1.msra.mxu0 0.0
    %1998 = vmatprep.subr.mxu0 0.0
    %1999 = vmatpush1.msra.mxu0 0.0
    %2000 = vmatprep.subr.mxu0 0.0
    %2001 = vmatpush1.msra.mxu0 0.0
    %2002 = vmatprep.subr.mxu0 0.0
    %2003 = vmatpush1.msra.mxu0 0.0
    %2004 = vmatprep.subr.mxu0 0.0
    %2005 = vmatpush1.msra.mxu0 0.0
    %2006 = vmatprep.subr.mxu0 0.0
    %2007 = vmatpush1.msra.mxu0 0.0
    %2008 = vmatprep.subr.mxu0 0.0
    %2009 = vmatpush1.msra.mxu0 0.0
    %2010 = vmatprep.subr.mxu0 0.0
    %2011 = vmatpush1.msra.mxu0 0.0
    %2012 = vmatprep.mubr.f32.mxu0 0.0
    %2013 = vmatmul.mubr.f32.gmra.mrb[0].mxu0 %v1946
    %v2014 = vpop.f32.mrb[0].mxu0
    %v2015 = vadd.f32 %v1942, %v2014
    %v2016 = vpop.f32.mrb[0].mxu0
    %2017 = vdwg.mxu0
    %v2018 = vld [vmem:[%s12] sm:$0x1]
    %v2020 = vlaneseq
    %v2021 = vshrl.u32 %v2020, 7
    %v2022 = vsub.s32 0, %v2021
    %v2023 = vrot.slane %v2018, %v2022
    %v2025 = vadd.f32 %v1122, %v2023
    %v2026 = vadd.f32 %v2015, %v2023
    %v2027 = vadd.f32 %v121, %v2025
    %v2028 = vadd.f32 %v122, %v2026
    %v2029 = vld [vmem:[%s13] sm:$0x1]
    %v2030 = vld [vmem:[%s14] sm:$0x1]
    %v2031 = vsel %vm79, %v2027, 0.0
    %2032 = vadd.xlane.f32.xlu0 %v2031
    %v2033 = vpop.xlane.xlu0 %2032
    %v2034 = vsel %vm79, %v2028, 0.0
    %2035 = vadd.xlane.f32.xlu0 %v2034
    %v2036 = vpop.xlane.xlu0 %2035
    %v2037 = vmul.f32 %v2033, %v86
    %v2038 = vmul.f32 %v2036, %v86
    %v2039 = vsub.f32 %v2027, %v2037
    %v2040 = vsub.f32 %v2028, %v2038
    %v2041 = vmul.f32 %v2039, %v2039
    %v2042 = vmul.f32 %v2040, %v2040
    %v2043 = vsel %vm79, %v2041, 0.0
    %2044 = vadd.xlane.f32.xlu0 %v2043
    %v2045 = vpop.xlane.xlu0 %2044
    %v2046 = vsel %vm79, %v2042, 0.0
    %2047 = vadd.xlane.f32.xlu0 %v2046
    %v2048 = vpop.xlane.xlu0 %2047
    %v2049 = vmul.f32 %v2045, %v86
    %v2050 = vmul.f32 %v2048, %v86
    %v2051 = vadd.f32 %v2049, 1e-12
    %v2052 = vadd.f32 %v2050, 1e-12
    %v2053 = vrsqrt.pop %v2051
    %v2054 = vrsqrt.pop %v2052
    %v2055 = vmul.f32 %v2039, %v2053
    %v2056 = vmul.f32 %v2040, %v2054
    %v2058 = vlaneseq
    %v2059 = vshrl.u32 %v2058, 7
    %v2060 = vsub.s32 0, %v2059
    %v2061 = vrot.slane %v2029, %v2060
    %v2063 = vmul.f32 %v2055, %v2061
    %v2064 = vmul.f32 %v2056, %v2061
    %v2066 = vlaneseq
    %v2067 = vshrl.u32 %v2066, 7
    %v2068 = vsub.s32 0, %v2067
    %v2069 = vrot.slane %v2030, %v2068
    %v2071 = vadd.f32 %v2063, %v2069
    %v2072 = vadd.f32 %v2064, %v2069
    %v2073 = vld [vmem:[%s15] sm:$0xff]
    %v2074 = vld [vmem:[%s15 + $0x8] sm:$0xff]
    %v2075 = vld [vmem:[%s15 + $0x10] sm:$0xff]
    %v2076 = vld [vmem:[%s15 + $0x18] sm:$0xff]
    %v2077 = vld [vmem:[%s15 + $0x20] sm:$0xff]
    %v2078 = vld [vmem:[%s15 + $0x28] sm:$0xff]
    %v2079 = vld [vmem:[%s15 + $0x30] sm:$0xff]
    %v2080 = vld [vmem:[%s15 + $0x38] sm:$0xff]
    %v2081 = vld [vmem:[%s16] sm:$0x1]
    %v2083 = vlaneseq
    %v2084 = vshrl.u32 %v2083, 7
    %v2085 = vsub.s32 0, %v2084
    %v2086 = vrot.slane %v2081, %v2085
    %v2089 = vsel %vm79, %v2071, 0
    %v2092 = vsel %vm79, %v2072, 0
    %2094 = vmatprep.subr.mxu0 0.0
    %2095 = vmatpush1.msra.mxu0 %v2073
    %2096 = vmatprep.subr.mxu0 0.0
    %2097 = vmatpush1.msra.mxu0 %v2074
    %2098 = vmatprep.subr.mxu0 0.0
    %2099 = vmatpush1.msra.mxu0 %v2075
    %2100 = vmatprep.subr.mxu0 0.0
    %2101 = vmatpush1.msra.mxu0 %v2076
    %2102 = vmatprep.subr.mxu0 0.0
    %2103 = vmatpush1.msra.mxu0 %v2077
    %2104 = vmatprep.subr.mxu0 0.0
    %2105 = vmatpush1.msra.mxu0 %v2078
    %2106 = vmatprep.subr.mxu0 0.0
    %2107 = vmatpush1.msra.mxu0 %v2079
    %2108 = vmatprep.subr.mxu0 0.0
    %2109 = vmatpush1.msra.mxu0 %v2080
    %2110 = vmatprep.subr.mxu0 0.0
    %2111 = vmatpush1.msra.mxu0 0.0
    %2112 = vmatprep.subr.mxu0 0.0
    %2113 = vmatpush1.msra.mxu0 0.0
    %2114 = vmatprep.subr.mxu0 0.0
    %2115 = vmatpush1.msra.mxu0 0.0
    %2116 = vmatprep.subr.mxu0 0.0
    %2117 = vmatpush1.msra.mxu0 0.0
    %2118 = vmatprep.subr.mxu0 0.0
    %2119 = vmatpush1.msra.mxu0 0.0
    %2120 = vmatprep.subr.mxu0 0.0
    %2121 = vmatpush1.msra.mxu0 0.0
    %2122 = vmatprep.subr.mxu0 0.0
    %2123 = vmatpush1.msra.mxu0 0.0
    %2124 = vmatprep.subr.mxu0 0.0
    %2125 = vmatpush1.msra.mxu0 0.0
    %2126 = vmatprep.subr.mxu0 0.0
    %2127 = vmatpush1.msra.mxu0 0.0
    %2128 = vmatprep.subr.mxu0 0.0
    %2129 = vmatpush1.msra.mxu0 0.0
    %2130 = vmatprep.subr.mxu0 0.0
    %2131 = vmatpush1.msra.mxu0 0.0
    %2132 = vmatprep.subr.mxu0 0.0
    %2133 = vmatpush1.msra.mxu0 0.0
    %2134 = vmatprep.subr.mxu0 0.0
    %2135 = vmatpush1.msra.mxu0 0.0
    %2136 = vmatprep.subr.mxu0 0.0
    %2137 = vmatpush1.msra.mxu0 0.0
    %2138 = vmatprep.subr.mxu0 0.0
    %2139 = vmatpush1.msra.mxu0 0.0
    %2140 = vmatprep.subr.mxu0 0.0
    %2141 = vmatpush1.msra.mxu0 0.0
    %2142 = vmatprep.subr.mxu0 0.0
    %2143 = vmatpush1.msra.mxu0 0.0
    %2144 = vmatprep.subr.mxu0 0.0
    %2145 = vmatpush1.msra.mxu0 0.0
    %2146 = vmatprep.subr.mxu0 0.0
    %2147 = vmatpush1.msra.mxu0 0.0
    %2148 = vmatprep.subr.mxu0 0.0
    %2149 = vmatpush1.msra.mxu0 0.0
    %2150 = vmatprep.subr.mxu0 0.0
    %2151 = vmatpush1.msra.mxu0 0.0
    %2152 = vmatprep.subr.mxu0 0.0
    %2153 = vmatpush1.msra.mxu0 0.0
    %2154 = vmatprep.subr.mxu0 0.0
    %2155 = vmatpush1.msra.mxu0 0.0
    %2156 = vmatprep.subr.mxu0 0.0
    %2157 = vmatpush1.msra.mxu0 0.0
    %2158 = vmatprep.mubr.f32.mxu0 0.0
    %2159 = vmatmul.mubr.f32.gmra.mrb[0].mxu0 %v2089
    %v2160 = vpop.f32.mrb[0].mxu0
    %v2161 = vadd.f32 %v2086, %v2160
    %v2162 = vpop.f32.mrb[0].mxu0
    %2163 = vmatprep.mubr.f32.mxu0 0.0
    %2164 = vmatmul.mubr.f32.gmra.mrb[0].mxu0 %v2092
    %v2165 = vpop.f32.mrb[0].mxu0
    %v2166 = vadd.f32 %v2086, %v2165
    %v2167 = vpop.f32.mrb[0].mxu0
    %2168 = vdwg.mxu0
    %v2169 = vmul.f32 %v2161, 0.5
    %v2170 = vmul.f32 %v2166, 0.5
    %v2171 = vmul.f32 %v2161, 0.044715
    %v2172 = vmul.f32 %v2166, 0.044715
    %v2173 = vmul.f32 %v2171, %v2161
    %v2174 = vmul.f32 %v2172, %v2166
    %v2175 = vmul.f32 %v2173, %v2161
    %v2176 = vmul.f32 %v2174, %v2166
    %v2177 = vadd.f32 %v2161, %v2175
    %v2178 = vadd.f32 %v2166, %v2176
    %v2179 = vmul.f32 %v2177, 0.7978846
    %v2180 = vmul.f32 %v2178, 0.7978846
    %v2181 = vtanh.pop %v2179
    %v2182 = vtanh.pop %v2180
    %v2183 = vadd.f32 %v2181, 1.0
    %v2184 = vadd.f32 %v2182, 1.0
    %v2185 = vmul.f32 %v2169, %v2183
    %v2186 = vmul.f32 %v2170, %v2184
    %v2187 = vld [vmem:[%s17] sm:$0xff]
    %v2188 = vld [vmem:[%s17 + $0x8] sm:$0xff]
    %v2189 = vld [vmem:[%s17 + $0x10] sm:$0xff]
    %v2190 = vld [vmem:[%s17 + $0x18] sm:$0xff]
    %v2191 = vld [vmem:[%s17 + $0x20] sm:$0xff]
    %v2192 = vld [vmem:[%s17 + $0x28] sm:$0xff]
    %v2193 = vld [vmem:[%s17 + $0x30] sm:$0xff]
    %v2194 = vld [vmem:[%s17 + $0x38] sm:$0xff]
    %v2195 = vld [vmem:[%s17 + $0x40] sm:$0xff]
    %v2196 = vld [vmem:[%s17 + $0x48] sm:$0xff]
    %v2197 = vld [vmem:[%s17 + $0x50] sm:$0xff]
    %v2198 = vld [vmem:[%s17 + $0x58] sm:$0xff]
    %v2199 = vld [vmem:[%s17 + $0x60] sm:$0xff]
    %v2200 = vld [vmem:[%s17 + $0x68] sm:$0xff]
    %v2201 = vld [vmem:[%s17 + $0x70] sm:$0xff]
    %v2202 = vld [vmem:[%s17 + $0x78] sm:$0xff]
    %v2203 = vld [vmem:[%s18] sm:$0x1]
    %v2205 = vlaneseq
    %v2206 = vshrl.u32 %v2205, 7
    %v2207 = vsub.s32 0, %v2206
    %v2208 = vrot.slane %v2203, %v2207
    %2210 = vmatprep.subr.mxu0 0.0
    %2211 = vmatpush1.msra.mxu0 %v2187
    %2212 = vmatprep.subr.mxu0 0.0
    %2213 = vmatpush1.msra.mxu0 %v2188
    %2214 = vmatprep.subr.mxu0 0.0
    %2215 = vmatpush1.msra.mxu0 %v2189
    %2216 = vmatprep.subr.mxu0 0.0
    %2217 = vmatpush1.msra.mxu0 %v2190
    %2218 = vmatprep.subr.mxu0 0.0
    %2219 = vmatpush1.msra.mxu0 %v2191
    %2220 = vmatprep.subr.mxu0 0.0
    %2221 = vmatpush1.msra.mxu0 %v2192
    %2222 = vmatprep.subr.mxu0 0.0
    %2223 = vmatpush1.msra.mxu0 %v2193
    %2224 = vmatprep.subr.mxu0 0.0
    %2225 = vmatpush1.msra.mxu0 %v2194
    %2226 = vmatprep.subr.mxu0 0.0
    %2227 = vmatpush1.msra.mxu0 %v2195
    %2228 = vmatprep.subr.mxu0 0.0
    %2229 = vmatpush1.msra.mxu0 %v2196
    %2230 = vmatprep.subr.mxu0 0.0
    %2231 = vmatpush1.msra.mxu0 %v2197
    %2232 = vmatprep.subr.mxu0 0.0
    %2233 = vmatpush1.msra.mxu0 %v2198
    %2234 = vmatprep.subr.mxu0 0.0
    %2235 = vmatpush1.msra.mxu0 %v2199
    %2236 = vmatprep.subr.mxu0 0.0
    %2237 = vmatpush1.msra.mxu0 %v2200
    %2238 = vmatprep.subr.mxu0 0.0
    %2239 = vmatpush1.msra.mxu0 %v2201
    %2240 = vmatprep.subr.mxu0 0.0
    %2241 = vmatpush1.msra.mxu0 %v2202
    %2242 = vmatprep.subr.mxu0 0.0
    %2243 = vmatpush1.msra.mxu0 0.0
    %2244 = vmatprep.subr.mxu0 0.0
    %2245 = vmatpush1.msra.mxu0 0.0
    %2246 = vmatprep.subr.mxu0 0.0
    %2247 = vmatpush1.msra.mxu0 0.0
    %2248 = vmatprep.subr.mxu0 0.0
    %2249 = vmatpush1.msra.mxu0 0.0
    %2250 = vmatprep.subr.mxu0 0.0
    %2251 = vmatpush1.msra.mxu0 0.0
    %2252 = vmatprep.subr.mxu0 0.0
    %2253 = vmatpush1.msra.mxu0 0.0
    %2254 = vmatprep.subr.mxu0 0.0
    %2255 = vmatpush1.msra.mxu0 0.0
    %2256 = vmatprep.subr.mxu0 0.0
    %2257 = vmatpush1.msra.mxu0 0.0
    %2258 = vmatprep.subr.mxu0 0.0
    %2259 = vmatpush1.msra.mxu0 0.0
    %2260 = vmatprep.subr.mxu0 0.0
    %2261 = vmatpush1.msra.mxu0 0.0
    %2262 = vmatprep.subr.mxu0 0.0
    %2263 = vmatpush1.msra.mxu0 0.0
    %2264 = vmatprep.subr.mxu0 0.0
    %2265 = vmatpush1.msra.mxu0 0.0
    %2266 = vmatprep.subr.mxu0 0.0
    %2267 = vmatpush1.msra.mxu0 0.0
    %2268 = vmatprep.subr.mxu0 0.0
    %2269 = vmatpush1.msra.mxu0 0.0
    %2270 = vmatprep.subr.mxu0 0.0
    %2271 = vmatpush1.msra.mxu0 0.0
    %2272 = vmatprep.subr.mxu0 0.0
    %2273 = vmatpush1.msra.mxu0 0.0
    %2274 = vmatprep.mubr.f32.mxu0 0.0
    %2275 = vmatmul.mubr.f32.gmra.mrb[0].mxu0 %v2185
    %v2276 = vpop.f32.mrb[0].mxu0
    %v2277 = vadd.f32 %v2208, %v2276
    %v2278 = vpop.f32.mrb[0].mxu0
    %2279 = vmatprep.mubr.f32.mxu0 0.0
    %2280 = vmatmul.mubr.f32.gmra.mrb[0].mxu0 %v2186
    %v2281 = vpop.f32.mrb[0].mxu0
    %v2282 = vadd.f32 %v2208, %v2281
    %v2283 = vpop.f32.mrb[0].mxu0
    %2284 = vdwg.mxu0
    %v2285 = vadd.f32 %v2071, %v2277
    %v2286 = vadd.f32 %v2072, %v2282
    %v2287 = vld [vmem:[%s19] sm:$0x1]
    %v2288 = vld [vmem:[%s20] sm:$0x1]
    %v2289 = vsel %vm79, %v2285, 0.0
    %2290 = vadd.xlane.f32.xlu0 %v2289
    %v2291 = vpop.xlane.xlu0 %2290
    %v2292 = vsel %vm79, %v2286, 0.0
    %2293 = vadd.xlane.f32.xlu0 %v2292
    %v2294 = vpop.xlane.xlu0 %2293
    %v2295 = vmul.f32 %v2291, %v86
    %v2296 = vmul.f32 %v2294, %v86
    %v2297 = vsub.f32 %v2285, %v2295
    %v2298 = vsub.f32 %v2286, %v2296
    %v2299 = vmul.f32 %v2297, %v2297
    %v2300 = vmul.f32 %v2298, %v2298
    %v2301 = vsel %vm79, %v2299, 0.0
    %2302 = vadd.xlane.f32.xlu0 %v2301
    %v2303 = vpop.xlane.xlu0 %2302
    %v2304 = vsel %vm79, %v2300, 0.0
    %2305 = vadd.xlane.f32.xlu0 %v2304
    %v2306 = vpop.xlane.xlu0 %2305
    %v2307 = vmul.f32 %v2303, %v86
    %v2308 = vmul.f32 %v2306, %v86
    %v2309 = vadd.f32 %v2307, 1e-12
    %v2310 = vadd.f32 %v2308, 1e-12
    %v2311 = vrsqrt.pop %v2309
    %v2312 = vrsqrt.pop %v2310
    %v2313 = vmul.f32 %v2297, %v2311
    %v2314 = vmul.f32 %v2298, %v2312
    %v2316 = vlaneseq
    %v2317 = vshrl.u32 %v2316, 7
    %v2318 = vsub.s32 0, %v2317
    %v2319 = vrot.slane %v2287, %v2318
    %v2321 = vmul.f32 %v2313, %v2319
    %v2322 = vmul.f32 %v2314, %v2319
    %v2324 = vlaneseq
    %v2325 = vshrl.u32 %v2324, 7
    %v2326 = vsub.s32 0, %v2325
    %v2327 = vrot.slane %v2288, %v2326
    %v2329 = vadd.f32 %v2321, %v2327
    %v2330 = vadd.f32 %v2322, %v2327
    %s2331 = scalar_lea.vmem %s5, 128
    %v2332 = vld [vmem:[%s2331] sm:$0xff]
    %v2333 = vld [vmem:[%s2331 + $0x8] sm:$0xff]
    %v2334 = vld [vmem:[%s2331 + $0x10] sm:$0xff]
    %v2335 = vld [vmem:[%s2331 + $0x18] sm:$0xff]
    %v2336 = vld [vmem:[%s2331 + $0x20] sm:$0xff]
    %v2337 = vld [vmem:[%s2331 + $0x28] sm:$0xff]
    %v2338 = vld [vmem:[%s2331 + $0x30] sm:$0xff]
    %v2339 = vld [vmem:[%s2331 + $0x38] sm:$0xff]
    %s2340 = scalar_lea.vmem %s6, 2
    %v2341 = vld [vmem:[%s2340] sm:$0x1]
    %v2343 = vlaneseq
    %v2344 = vshrl.u32 %v2343, 7
    %v2345 = vsub.s32 0, %v2344
    %v2346 = vrot.slane %v2341, %v2345
    %v2349 = vsel %vm79, %v2329, 0
    %2351 = vmatprep.subr.mxu0 0.0
    %2352 = vmatpush1.msra.mxu0 %v2332
    %2353 = vmatprep.subr.mxu0 0.0
    %2354 = vmatpush1.msra.mxu0 %v2333
    %2355 = vmatprep.subr.mxu0 0.0
    %2356 = vmatpush1.msra.mxu0 %v2334
    %2357 = vmatprep.subr.mxu0 0.0
    %2358 = vmatpush1.msra.mxu0 %v2335
    %2359 = vmatprep.subr.mxu0 0.0
    %2360 = vmatpush1.msra.mxu0 %v2336
    %2361 = vmatprep.subr.mxu0 0.0
    %2362 = vmatpush1.msra.mxu0 %v2337
    %2363 = vmatprep.subr.mxu0 0.0
    %2364 = vmatpush1.msra.mxu0 %v2338
    %2365 = vmatprep.subr.mxu0 0.0
    %2366 = vmatpush1.msra.mxu0 %v2339
    %2367 = vmatprep.subr.mxu0 0.0
    %2368 = vmatpush1.msra.mxu0 0.0
    %2369 = vmatprep.subr.mxu0 0.0
    %2370 = vmatpush1.msra.mxu0 0.0
    %2371 = vmatprep.subr.mxu0 0.0
    %2372 = vmatpush1.msra.mxu0 0.0
    %2373 = vmatprep.subr.mxu0 0.0
    %2374 = vmatpush1.msra.mxu0 0.0
    %2375 = vmatprep.subr.mxu0 0.0
    %2376 = vmatpush1.msra.mxu0 0.0
    %2377 = vmatprep.subr.mxu0 0.0
    %2378 = vmatpush1.msra.mxu0 0.0
    %2379 = vmatprep.subr.mxu0 0.0
    %2380 = vmatpush1.msra.mxu0 0.0
    %2381 = vmatprep.subr.mxu0 0.0
    %2382 = vmatpush1.msra.mxu0 0.0
    %2383 = vmatprep.subr.mxu0 0.0
    %2384 = vmatpush1.msra.mxu0 0.0
    %2385 = vmatprep.subr.mxu0 0.0
    %2386 = vmatpush1.msra.mxu0 0.0
    %2387 = vmatprep.subr.mxu0 0.0
    %2388 = vmatpush1.msra.mxu0 0.0
    %2389 = vmatprep.subr.mxu0 0.0
    %2390 = vmatpush1.msra.mxu0 0.0
    %2391 = vmatprep.subr.mxu0 0.0
    %2392 = vmatpush1.msra.mxu0 0.0
    %2393 = vmatprep.subr.mxu0 0.0
    %2394 = vmatpush1.msra.mxu0 0.0
    %2395 = vmatprep.subr.mxu0 0.0
    %2396 = vmatpush1.msra.mxu0 0.0
    %2397 = vmatprep.subr.mxu0 0.0
    %2398 = vmatpush1.msra.mxu0 0.0
    %2399 = vmatprep.subr.mxu0 0.0
    %2400 = vmatpush1.msra.mxu0 0.0
    %2401 = vmatprep.subr.mxu0 0.0
    %2402 = vmatpush1.msra.mxu0 0.0
    %2403 = vmatprep.subr.mxu0 0.0
    %2404 = vmatpush1.msra.mxu0 0.0
    %2405 = vmatprep.subr.mxu0 0.0
    %2406 = vmatpush1.msra.mxu0 0.0
    %2407 = vmatprep.subr.mxu0 0.0
    %2408 = vmatpush1.msra.mxu0 0.0
    %2409 = vmatprep.subr.mxu0 0.0
    %2410 = vmatpush1.msra.mxu0 0.0
    %2411 = vmatprep.subr.mxu0 0.0
    %2412 = vmatpush1.msra.mxu0 0.0
    %2413 = vmatprep.subr.mxu0 0.0
    %2414 = vmatpush1.msra.mxu0 0.0
    %2415 = vmatprep.mubr.f32.mxu0 0.0
    %2416 = vmatmul.mubr.f32.gmra.mrb[0].mxu0 %v2349
    %v2417 = vpop.f32.mrb[0].mxu0
    %v2418 = vadd.f32 %v2346, %v2417
    %v2419 = vpop.f32.mrb[0].mxu0
    %2420 = vdwg.mxu0
    %s2421 = scalar_lea.vmem %s7, 128
    %v2422 = vld [vmem:[%s2421] sm:$0xff]
    %v2423 = vld [vmem:[%s2421 + $0x8] sm:$0xff]
    %v2424 = vld [vmem:[%s2421 + $0x10] sm:$0xff]
    %v2425 = vld [vmem:[%s2421 + $0x18] sm:$0xff]
    %v2426 = vld [vmem:[%s2421 + $0x20] sm:$0xff]
    %v2427 = vld [vmem:[%s2421 + $0x28] sm:$0xff]
    %v2428 = vld [vmem:[%s2421 + $0x30] sm:$0xff]
    %v2429 = vld [vmem:[%s2421 + $0x38] sm:$0xff]
    %s2430 = scalar_lea.vmem %s8, 2
    %v2431 = vld [vmem:[%s2430] sm:$0x1]
    %v2433 = vlaneseq
    %v2434 = vshrl.u32 %v2433, 7
    %v2435 = vsub.s32 0, %v2434
    %v2436 = vrot.slane %v2431, %v2435
    %2438 = vmatprep.subr.mxu0 0.0
    %2439 = vmatpush1.msra.mxu0 %v2422
    %2440 = vmatprep.subr.mxu0 0.0
    %2441 = vmatpush1.msra.mxu0 %v2423
    %2442 = vmatprep.subr.mxu0 0.0
    %2443 = vmatpush1.msra.mxu0 %v2424
    %2444 = vmatprep.subr.mxu0 0.0
    %2445 = vmatpush1.msra.mxu0 %v2425
    %2446 = vmatprep.subr.mxu0 0.0
    %2447 = vmatpush1.msra.mxu0 %v2426
    %2448 = vmatprep.subr.mxu0 0.0
    %2449 = vmatpush1.msra.mxu0 %v2427
    %2450 = vmatprep.subr.mxu0 0.0
    %2451 = vmatpush1.msra.mxu0 %v2428
    %2452 = vmatprep.subr.mxu0 0.0
    %2453 = vmatpush1.msra.mxu0 %v2429
    %2454 = vmatprep.subr.mxu0 0.0
    %2455 = vmatpush1.msra.mxu0 0.0
    %2456 = vmatprep.subr.mxu0 0.0
    %2457 = vmatpush1.msra.mxu0 0.0
    %2458 = vmatprep.subr.mxu0 0.0
    %2459 = vmatpush1.msra.mxu0 0.0
    %2460 = vmatprep.subr.mxu0 0.0
    %2461 = vmatpush1.msra.mxu0 0.0
    %2462 = vmatprep.subr.mxu0 0.0
    %2463 = vmatpush1.msra.mxu0 0.0
    %2464 = vmatprep.subr.mxu0 0.0
    %2465 = vmatpush1.msra.mxu0 0.0
    %2466 = vmatprep.subr.mxu0 0.0
    %2467 = vmatpush1.msra.mxu0 0.0
    %2468 = vmatprep.subr.mxu0 0.0
    %2469 = vmatpush1.msra.mxu0 0.0
    %2470 = vmatprep.subr.mxu0 0.0
    %2471 = vmatpush1.msra.mxu0 0.0
    %2472 = vmatprep.subr.mxu0 0.0
    %2473 = vmatpush1.msra.mxu0 0.0
    %2474 = vmatprep.subr.mxu0 0.0
    %2475 = vmatpush1.msra.mxu0 0.0
    %2476 = vmatprep.subr.mxu0 0.0
    %2477 = vmatpush1.msra.mxu0 0.0
    %2478 = vmatprep.subr.mxu0 0.0
    %2479 = vmatpush1.msra.mxu0 0.0
    %2480 = vmatprep.subr.mxu0 0.0
    %2481 = vmatpush1.msra.mxu0 0.0
    %2482 = vmatprep.subr.mxu0 0.0
    %2483 = vmatpush1.msra.mxu0 0.0
    %2484 = vmatprep.subr.mxu0 0.0
    %2485 = vmatpush1.msra.mxu0 0.0
    %2486 = vmatprep.subr.mxu0 0.0
    %2487 = vmatpush1.msra.mxu0 0.0
    %2488 = vmatprep.subr.mxu0 0.0
    %2489 = vmatpush1.msra.mxu0 0.0
    %2490 = vmatprep.subr.mxu0 0.0
    %2491 = vmatpush1.msra.mxu0 0.0
    %2492 = vmatprep.subr.mxu0 0.0
    %2493 = vmatpush1.msra.mxu0 0.0
    %2494 = vmatprep.subr.mxu0 0.0
    %2495 = vmatpush1.msra.mxu0 0.0
    %2496 = vmatprep.subr.mxu0 0.0
    %2497 = vmatpush1.msra.mxu0 0.0
    %2498 = vmatprep.subr.mxu0 0.0
    %2499 = vmatpush1.msra.mxu0 0.0
    %2500 = vmatprep.subr.mxu0 0.0
    %2501 = vmatpush1.msra.mxu0 0.0
    %2502 = vmatprep.mubr.f32.mxu0 0.0
    %2503 = vmatmul.mubr.f32.gmra.mrb[0].mxu0 %v2349
    %v2504 = vpop.f32.mrb[0].mxu0
    %v2505 = vadd.f32 %v2436, %v2504
    %v2506 = vpop.f32.mrb[0].mxu0
    %2507 = vdwg.mxu0
    %s2508 = scalar_lea.vmem %s9, 128
    %v2509 = vld [vmem:[%s2508] sm:$0xff]
    %v2510 = vld [vmem:[%s2508 + $0x8] sm:$0xff]
    %v2511 = vld [vmem:[%s2508 + $0x10] sm:$0xff]
    %v2512 = vld [vmem:[%s2508 + $0x18] sm:$0xff]
    %v2513 = vld [vmem:[%s2508 + $0x20] sm:$0xff]
    %v2514 = vld [vmem:[%s2508 + $0x28] sm:$0xff]
    %v2515 = vld [vmem:[%s2508 + $0x30] sm:$0xff]
    %v2516 = vld [vmem:[%s2508 + $0x38] sm:$0xff]
    %s2517 = scalar_lea.vmem %s10, 2
    %v2518 = vld [vmem:[%s2517] sm:$0x1]
    %v2520 = vlaneseq
    %v2521 = vshrl.u32 %v2520, 7
    %v2522 = vsub.s32 0, %v2521
    %v2523 = vrot.slane %v2518, %v2522
    %2525 = vmatprep.subr.mxu0 0.0
    %2526 = vmatpush1.msra.mxu0 %v2509
    %2527 = vmatprep.subr.mxu0 0.0
    %2528 = vmatpush1.msra.mxu0 %v2510
    %2529 = vmatprep.subr.mxu0 0.0
    %2530 = vmatpush1.msra.mxu0 %v2511
    %2531 = vmatprep.subr.mxu0 0.0
    %2532 = vmatpush1.msra.mxu0 %v2512
    %2533 = vmatprep.subr.mxu0 0.0
    %2534 = vmatpush1.msra.mxu0 %v2513
    %2535 = vmatprep.subr.mxu0 0.0
    %2536 = vmatpush1.msra.mxu0 %v2514
    %2537 = vmatprep.subr.mxu0 0.0
    %2538 = vmatpush1.msra.mxu0 %v2515
    %2539 = vmatprep.subr.mxu0 0.0
    %2540 = vmatpush1.msra.mxu0 %v2516
    %2541 = vmatprep.subr.mxu0 0.0
    %2542 = vmatpush1.msra.mxu0 0.0
    %2543 = vmatprep.subr.mxu0 0.0
    %2544 = vmatpush1.msra.mxu0 0.0
    %2545 = vmatprep.subr.mxu0 0.0
    %2546 = vmatpush1.msra.mxu0 0.0
    %2547 = vmatprep.subr.mxu0 0.0
    %2548 = vmatpush1.msra.mxu0 0.0
    %2549 = vmatprep.subr.mxu0 0.0
    %2550 = vmatpush1.msra.mxu0 0.0
    %2551 = vmatprep.subr.mxu0 0.0
    %2552 = vmatpush1.msra.mxu0 0.0
    %2553 = vmatprep.subr.mxu0 0.0
    %2554 = vmatpush1.msra.mxu0 0.0
    %2555 = vmatprep.subr.mxu0 0.0
    %2556 = vmatpush1.msra.mxu0 0.0
    %2557 = vmatprep.subr.mxu0 0.0
    %2558 = vmatpush1.msra.mxu0 0.0
    %2559 = vmatprep.subr.mxu0 0.0
    %2560 = vmatpush1.msra.mxu0 0.0
    %2561 = vmatprep.subr.mxu0 0.0
    %2562 = vmatpush1.msra.mxu0 0.0
    %2563 = vmatprep.subr.mxu0 0.0
    %2564 = vmatpush1.msra.mxu0 0.0
    %2565 = vmatprep.subr.mxu0 0.0
    %2566 = vmatpush1.msra.mxu0 0.0
    %2567 = vmatprep.subr.mxu0 0.0
    %2568 = vmatpush1.msra.mxu0 0.0
    %2569 = vmatprep.subr.mxu0 0.0
    %2570 = vmatpush1.msra.mxu0 0.0
    %2571 = vmatprep.subr.mxu0 0.0
    %2572 = vmatpush1.msra.mxu0 0.0
    %2573 = vmatprep.subr.mxu0 0.0
    %2574 = vmatpush1.msra.mxu0 0.0
    %2575 = vmatprep.subr.mxu0 0.0
    %2576 = vmatpush1.msra.mxu0 0.0
    %2577 = vmatprep.subr.mxu0 0.0
    %2578 = vmatpush1.msra.mxu0 0.0
    %2579 = vmatprep.subr.mxu0 0.0
    %2580 = vmatpush1.msra.mxu0 0.0
    %2581 = vmatprep.subr.mxu0 0.0
    %2582 = vmatpush1.msra.mxu0 0.0
    %2583 = vmatprep.subr.mxu0 0.0
    %2584 = vmatpush1.msra.mxu0 0.0
    %2585 = vmatprep.subr.mxu0 0.0
    %2586 = vmatpush1.msra.mxu0 0.0
    %2587 = vmatprep.subr.mxu0 0.0
    %2588 = vmatpush1.msra.mxu0 0.0
    %2589 = vmatprep.mubr.f32.mxu0 0.0
    %2590 = vmatmul.mubr.f32.gmra.mrb[0].mxu0 %v2349
    %v2591 = vpop.f32.mrb[0].mxu0
    %v2592 = vadd.f32 %v2523, %v2591
    %v2593 = vpop.f32.mrb[0].mxu0
    %2594 = vdwg.mxu0
    %v2596 = vsel %vm383, %v2418, 0
    %v2599 = vsel %vm383, %v2505, 0
    %2601 = vmatprep.subr.mxu0 0.0
    %2602 = vmatpush1.xpose.msra.mxu0 %v2599
    %2603 = vmatprep.subr.mxu0 0.0
    %2604 = vmatpush1.xpose.msra.mxu0 0.0
    %2605 = vmatprep.subr.mxu0 0.0
    %2606 = vmatpush1.xpose.msra.mxu0 0.0
    %2607 = vmatprep.subr.mxu0 0.0
    %2608 = vmatpush1.xpose.msra.mxu0 0.0
    %2609 = vmatprep.subr.mxu0 0.0
    %2610 = vmatpush1.xpose.msra.mxu0 0.0
    %2611 = vmatprep.subr.mxu0 0.0
    %2612 = vmatpush1.xpose.msra.mxu0 0.0
    %2613 = vmatprep.subr.mxu0 0.0
    %2614 = vmatpush1.xpose.msra.mxu0 0.0
    %2615 = vmatprep.subr.mxu0 0.0
    %2616 = vmatpush1.xpose.msra.mxu0 0.0
    %2617 = vmatprep.subr.mxu0 0.0
    %2618 = vmatpush1.xpose.msra.mxu0 0.0
    %2619 = vmatprep.subr.mxu0 0.0
    %2620 = vmatpush1.xpose.msra.mxu0 0.0
    %2621 = vmatprep.subr.mxu0 0.0
    %2622 = vmatpush1.xpose.msra.mxu0 0.0
    %2623 = vmatprep.subr.mxu0 0.0
    %2624 = vmatpush1.xpose.msra.mxu0 0.0
    %2625 = vmatprep.subr.mxu0 0.0
    %2626 = vmatpush1.xpose.msra.mxu0 0.0
    %2627 = vmatprep.subr.mxu0 0.0
    %2628 = vmatpush1.xpose.msra.mxu0 0.0
    %2629 = vmatprep.subr.mxu0 0.0
    %2630 = vmatpush1.xpose.msra.mxu0 0.0
    %2631 = vmatprep.subr.mxu0 0.0
    %2632 = vmatpush1.xpose.msra.mxu0 0.0
    %2633 = vmatprep.subr.mxu0 0.0
    %2634 = vmatpush1.xpose.msra.mxu0 0.0
    %2635 = vmatprep.subr.mxu0 0.0
    %2636 = vmatpush1.xpose.msra.mxu0 0.0
    %2637 = vmatprep.subr.mxu0 0.0
    %2638 = vmatpush1.xpose.msra.mxu0 0.0
    %2639 = vmatprep.subr.mxu0 0.0
    %2640 = vmatpush1.xpose.msra.mxu0 0.0
    %2641 = vmatprep.subr.mxu0 0.0
    %2642 = vmatpush1.xpose.msra.mxu0 0.0
    %2643 = vmatprep.subr.mxu0 0.0
    %2644 = vmatpush1.xpose.msra.mxu0 0.0
    %2645 = vmatprep.subr.mxu0 0.0
    %2646 = vmatpush1.xpose.msra.mxu0 0.0
    %2647 = vmatprep.subr.mxu0 0.0
    %2648 = vmatpush1.xpose.msra.mxu0 0.0
    %2649 = vmatprep.subr.mxu0 0.0
    %2650 = vmatpush1.xpose.msra.mxu0 0.0
    %2651 = vmatprep.subr.mxu0 0.0
    %2652 = vmatpush1.xpose.msra.mxu0 0.0
    %2653 = vmatprep.subr.mxu0 0.0
    %2654 = vmatpush1.xpose.msra.mxu0 0.0
    %2655 = vmatprep.subr.mxu0 0.0
    %2656 = vmatpush1.xpose.msra.mxu0 0.0
    %2657 = vmatprep.subr.mxu0 0.0
    %2658 = vmatpush1.xpose.msra.mxu0 0.0
    %2659 = vmatprep.subr.mxu0 0.0
    %2660 = vmatpush1.xpose.msra.mxu0 0.0
    %2661 = vmatprep.subr.mxu0 0.0
    %2662 = vmatpush1.xpose.msra.mxu0 0.0
    %2663 = vmatprep.subr.mxu0 0.0
    %2664 = vmatpush1.xpose.msra.mxu0 0.0
    %2665 = vmatprep.mubr.f32.mxu0 0.0
    %2666 = vmatmul.mubr.f32.gmra.mrb[0].mxu0 %v2596
    %v2667 = vpop.f32.mrb[0].mxu0
    %v2668 = vadd.f32 0.0, %v2667
    %v2669 = vpop.f32.mrb[0].mxu0
    %2670 = vdwg.mxu0
    %v2671 = vmul.f32 %v2668, 0.17677669
    %v2672 = vadd.f32 %v2671, %v123
    %v2673 = vsel %vm462, %v2672, -inf
    %2674 = vmax.xlane.f32.xlu0 %v2673
    %v2675 = vpop.xlane.xlu0 %2674
    %v2676 = vsub.f32 %v2672, %v2675
    %v2677 = vmul.f32 %v2676, 1.442695
    %v2678 = vpow.pop %v2677
    %v2679 = vsel %vm462, %v2678, 0.0
    %2680 = vadd.xlane.f32.xlu0 %v2679
    %v2681 = vpop.xlane.xlu0 %2680
    %v2682 = vrcp.pop %v2681
    %v2683 = vmul.f32 %v2678, %v2682
    %v2685 = vsel %vm462, %v2683, 0
    %2687 = vmatprep.subr.mxu0 0.0
    %2688 = vmatpush1.msra.mxu0 %v2592
    %2689 = vmatprep.subr.mxu0 0.0
    %2690 = vmatpush1.msra.mxu0 0.0
    %2691 = vmatprep.subr.mxu0 0.0
    %2692 = vmatpush1.msra.mxu0 0.0
    %2693 = vmatprep.subr.mxu0 0.0
    %2694 = vmatpush1.msra.mxu0 0.0
    %2695 = vmatprep.subr.mxu0 0.0
    %2696 = vmatpush1.msra.mxu0 0.0
    %2697 = vmatprep.subr.mxu0 0.0
    %2698 = vmatpush1.msra.mxu0 0.0
    %2699 = vmatprep.subr.mxu0 0.0
    %2700 = vmatpush1.msra.mxu0 0.0
    %2701 = vmatprep.subr.mxu0 0.0
    %2702 = vmatpush1.msra.mxu0 0.0
    %2703 = vmatprep.subr.mxu0 0.0
    %2704 = vmatpush1.msra.mxu0 0.0
    %2705 = vmatprep.subr.mxu0 0.0
    %2706 = vmatpush1.msra.mxu0 0.0
    %2707 = vmatprep.subr.mxu0 0.0
    %2708 = vmatpush1.msra.mxu0 0.0
    %2709 = vmatprep.subr.mxu0 0.0
    %2710 = vmatpush1.msra.mxu0 0.0
    %2711 = vmatprep.subr.mxu0 0.0
    %2712 = vmatpush1.msra.mxu0 0.0
    %2713 = vmatprep.subr.mxu0 0.0
    %2714 = vmatpush1.msra.mxu0 0.0
    %2715 = vmatprep.subr.mxu0 0.0
    %2716 = vmatpush1.msra.mxu0 0.0
    %2717 = vmatprep.subr.mxu0 0.0
    %2718 = vmatpush1.msra.mxu0 0.0
    %2719 = vmatprep.subr.mxu0 0.0
    %2720 = vmatpush1.msra.mxu0 0.0
    %2721 = vmatprep.subr.mxu0 0.0
    %2722 = vmatpush1.msra.mxu0 0.0
    %2723 = vmatprep.subr.mxu0 0.0
    %2724 = vmatpush1.msra.mxu0 0.0
    %2725 = vmatprep.subr.mxu0 0.0
    %2726 = vmatpush1.msra.mxu0 0.0
    %2727 = vmatprep.subr.mxu0 0.0
    %2728 = vmatpush1.msra.mxu0 0.0
    %2729 = vmatprep.subr.mxu0 0.0
    %2730 = vmatpush1.msra.mxu0 0.0
    %2731 = vmatprep.subr.mxu0 0.0
    %2732 = vmatpush1.msra.mxu0 0.0
    %2733 = vmatprep.subr.mxu0 0.0
    %2734 = vmatpush1.msra.mxu0 0.0
    %2735 = vmatprep.subr.mxu0 0.0
    %2736 = vmatpush1.msra.mxu0 0.0
    %2737 = vmatprep.subr.mxu0 0.0
    %2738 = vmatpush1.msra.mxu0 0.0
    %2739 = vmatprep.subr.mxu0 0.0
    %2740 = vmatpush1.msra.mxu0 0.0
    %2741 = vmatprep.subr.mxu0 0.0
    %2742 = vmatpush1.msra.mxu0 0.0
    %2743 = vmatprep.subr.mxu0 0.0
    %2744 = vmatpush1.msra.mxu0 0.0
    %2745 = vmatprep.subr.mxu0 0.0
    %2746 = vmatpush1.msra.mxu0 0.0
    %2747 = vmatprep.subr.mxu0 0.0
    %2748 = vmatpush1.msra.mxu0 0.0
    %2749 = vmatprep.subr.mxu0 0.0
    %2750 = vmatpush1.msra.mxu0 0.0
    %2751 = vmatprep.mubr.f32.mxu0 0.0
    %2752 = vmatmul.mubr.f32.gmra.mrb[0].mxu0 %v2685
    %v2753 = vpop.f32.mrb[0].mxu0
    %v2754 = vadd.f32 0.0, %v2753
    %v2755 = vpop.f32.mrb[0].mxu0
    %2756 = vdwg.mxu0
    %s2757 = scalar_lea.vmem %s11, 64
    %v2758 = vld [vmem:[%s2757] sm:$0xff]
    %v2759 = vld [vmem:[%s2757 + $0x8] sm:$0xff]
    %v2760 = vld [vmem:[%s2757 + $0x10] sm:$0xff]
    %v2761 = vld [vmem:[%s2757 + $0x18] sm:$0xff]
    %s2762 = scalar_lea.vmem %s5, 192
    %v2763 = vld [vmem:[%s2762] sm:$0xff]
    %v2764 = vld [vmem:[%s2762 + $0x8] sm:$0xff]
    %v2765 = vld [vmem:[%s2762 + $0x10] sm:$0xff]
    %v2766 = vld [vmem:[%s2762 + $0x18] sm:$0xff]
    %v2767 = vld [vmem:[%s2762 + $0x20] sm:$0xff]
    %v2768 = vld [vmem:[%s2762 + $0x28] sm:$0xff]
    %v2769 = vld [vmem:[%s2762 + $0x30] sm:$0xff]
    %v2770 = vld [vmem:[%s2762 + $0x38] sm:$0xff]
    %s2771 = scalar_lea.vmem %s6, 3
    %v2772 = vld [vmem:[%s2771] sm:$0x1]
    %v2774 = vlaneseq
    %v2775 = vshrl.u32 %v2774, 7
    %v2776 = vsub.s32 0, %v2775
    %v2777 = vrot.slane %v2772, %v2776
    %2779 = vmatprep.subr.mxu0 0.0
    %2780 = vmatpush1.msra.mxu0 %v2763
    %2781 = vmatprep.subr.mxu0 0.0
    %2782 = vmatpush1.msra.mxu0 %v2764
    %2783 = vmatprep.subr.mxu0 0.0
    %2784 = vmatpush1.msra.mxu0 %v2765
    %2785 = vmatprep.subr.mxu0 0.0
    %2786 = vmatpush1.msra.mxu0 %v2766
    %2787 = vmatprep.subr.mxu0 0.0
    %2788 = vmatpush1.msra.mxu0 %v2767
    %2789 = vmatprep.subr.mxu0 0.0
    %2790 = vmatpush1.msra.mxu0 %v2768
    %2791 = vmatprep.subr.mxu0 0.0
    %2792 = vmatpush1.msra.mxu0 %v2769
    %2793 = vmatprep.subr.mxu0 0.0
    %2794 = vmatpush1.msra.mxu0 %v2770
    %2795 = vmatprep.subr.mxu0 0.0
    %2796 = vmatpush1.msra.mxu0 0.0
    %2797 = vmatprep.subr.mxu0 0.0
    %2798 = vmatpush1.msra.mxu0 0.0
    %2799 = vmatprep.subr.mxu0 0.0
    %2800 = vmatpush1.msra.mxu0 0.0
    %2801 = vmatprep.subr.mxu0 0.0
    %2802 = vmatpush1.msra.mxu0 0.0
    %2803 = vmatprep.subr.mxu0 0.0
    %2804 = vmatpush1.msra.mxu0 0.0
    %2805 = vmatprep.subr.mxu0 0.0
    %2806 = vmatpush1.msra.mxu0 0.0
    %2807 = vmatprep.subr.mxu0 0.0
    %2808 = vmatpush1.msra.mxu0 0.0
    %2809 = vmatprep.subr.mxu0 0.0
    %2810 = vmatpush1.msra.mxu0 0.0
    %2811 = vmatprep.subr.mxu0 0.0
    %2812 = vmatpush1.msra.mxu0 0.0
    %2813 = vmatprep.subr.mxu0 0.0
    %2814 = vmatpush1.msra.mxu0 0.0
    %2815 = vmatprep.subr.mxu0 0.0
    %2816 = vmatpush1.msra.mxu0 0.0
    %2817 = vmatprep.subr.mxu0 0.0
    %2818 = vmatpush1.msra.mxu0 0.0
    %2819 = vmatprep.subr.mxu0 0.0
    %2820 = vmatpush1.msra.mxu0 0.0
    %2821 = vmatprep.subr.mxu0 0.0
    %2822 = vmatpush1.msra.mxu0 0.0
    %2823 = vmatprep.subr.mxu0 0.0
    %2824 = vmatpush1.msra.mxu0 0.0
    %2825 = vmatprep.subr.mxu0 0.0
    %2826 = vmatpush1.msra.mxu0 0.0
    %2827 = vmatprep.subr.mxu0 0.0
    %2828 = vmatpush1.msra.mxu0 0.0
    %2829 = vmatprep.subr.mxu0 0.0
    %2830 = vmatpush1.msra.mxu0 0.0
    %2831 = vmatprep.subr.mxu0 0.0
    %2832 = vmatpush1.msra.mxu0 0.0
    %2833 = vmatprep.subr.mxu0 0.0
    %2834 = vmatpush1.msra.mxu0 0.0
    %2835 = vmatprep.subr.mxu0 0.0
    %2836 = vmatpush1.msra.mxu0 0.0
    %2837 = vmatprep.subr.mxu0 0.0
    %2838 = vmatpush1.msra.mxu0 0.0
    %2839 = vmatprep.subr.mxu0 0.0
    %2840 = vmatpush1.msra.mxu0 0.0
    %2841 = vmatprep.subr.mxu0 0.0
    %2842 = vmatpush1.msra.mxu0 0.0
    %2843 = vmatprep.mubr.f32.mxu0 0.0
    %2844 = vmatmul.mubr.f32.gmra.mrb[0].mxu0 %v2349
    %v2845 = vpop.f32.mrb[0].mxu0
    %v2846 = vadd.f32 %v2777, %v2845
    %v2847 = vpop.f32.mrb[0].mxu0
    %2848 = vdwg.mxu0
    %s2849 = scalar_lea.vmem %s7, 192
    %v2850 = vld [vmem:[%s2849] sm:$0xff]
    %v2851 = vld [vmem:[%s2849 + $0x8] sm:$0xff]
    %v2852 = vld [vmem:[%s2849 + $0x10] sm:$0xff]
    %v2853 = vld [vmem:[%s2849 + $0x18] sm:$0xff]
    %v2854 = vld [vmem:[%s2849 + $0x20] sm:$0xff]
    %v2855 = vld [vmem:[%s2849 + $0x28] sm:$0xff]
    %v2856 = vld [vmem:[%s2849 + $0x30] sm:$0xff]
    %v2857 = vld [vmem:[%s2849 + $0x38] sm:$0xff]
    %s2858 = scalar_lea.vmem %s8, 3
    %v2859 = vld [vmem:[%s2858] sm:$0x1]
    %v2861 = vlaneseq
    %v2862 = vshrl.u32 %v2861, 7
    %v2863 = vsub.s32 0, %v2862
    %v2864 = vrot.slane %v2859, %v2863
    %2866 = vmatprep.subr.mxu0 0.0
    %2867 = vmatpush1.msra.mxu0 %v2850
    %2868 = vmatprep.subr.mxu0 0.0
    %2869 = vmatpush1.msra.mxu0 %v2851
    %2870 = vmatprep.subr.mxu0 0.0
    %2871 = vmatpush1.msra.mxu0 %v2852
    %2872 = vmatprep.subr.mxu0 0.0
    %2873 = vmatpush1.msra.mxu0 %v2853
    %2874 = vmatprep.subr.mxu0 0.0
    %2875 = vmatpush1.msra.mxu0 %v2854
    %2876 = vmatprep.subr.mxu0 0.0
    %2877 = vmatpush1.msra.mxu0 %v2855
    %2878 = vmatprep.subr.mxu0 0.0
    %2879 = vmatpush1.msra.mxu0 %v2856
    %2880 = vmatprep.subr.mxu0 0.0
    %2881 = vmatpush1.msra.mxu0 %v2857
    %2882 = vmatprep.subr.mxu0 0.0
    %2883 = vmatpush1.msra.mxu0 0.0
    %2884 = vmatprep.subr.mxu0 0.0
    %2885 = vmatpush1.msra.mxu0 0.0
    %2886 = vmatprep.subr.mxu0 0.0
    %2887 = vmatpush1.msra.mxu0 0.0
    %2888 = vmatprep.subr.mxu0 0.0
    %2889 = vmatpush1.msra.mxu0 0.0
    %2890 = vmatprep.subr.mxu0 0.0
    %2891 = vmatpush1.msra.mxu0 0.0
    %2892 = vmatprep.subr.mxu0 0.0
    %2893 = vmatpush1.msra.mxu0 0.0
    %2894 = vmatprep.subr.mxu0 0.0
    %2895 = vmatpush1.msra.mxu0 0.0
    %2896 = vmatprep.subr.mxu0 0.0
    %2897 = vmatpush1.msra.mxu0 0.0
    %2898 = vmatprep.subr.mxu0 0.0
    %2899 = vmatpush1.msra.mxu0 0.0
    %2900 = vmatprep.subr.mxu0 0.0
    %2901 = vmatpush1.msra.mxu0 0.0
    %2902 = vmatprep.subr.mxu0 0.0
    %2903 = vmatpush1.msra.mxu0 0.0
    %2904 = vmatprep.subr.mxu0 0.0
    %2905 = vmatpush1.msra.mxu0 0.0
    %2906 = vmatprep.subr.mxu0 0.0
    %2907 = vmatpush1.msra.mxu0 0.0
    %2908 = vmatprep.subr.mxu0 0.0
    %2909 = vmatpush1.msra.mxu0 0.0
    %2910 = vmatprep.subr.mxu0 0.0
    %2911 = vmatpush1.msra.mxu0 0.0
    %2912 = vmatprep.subr.mxu0 0.0
    %2913 = vmatpush1.msra.mxu0 0.0
    %2914 = vmatprep.subr.mxu0 0.0
    %2915 = vmatpush1.msra.mxu0 0.0
    %2916 = vmatprep.subr.mxu0 0.0
    %2917 = vmatpush1.msra.mxu0 0.0
    %2918 = vmatprep.subr.mxu0 0.0
    %2919 = vmatpush1.msra.mxu0 0.0
    %2920 = vmatprep.subr.mxu0 0.0
    %2921 = vmatpush1.msra.mxu0 0.0
    %2922 = vmatprep.subr.mxu0 0.0
    %2923 = vmatpush1.msra.mxu0 0.0
    %2924 = vmatprep.subr.mxu0 0.0
    %2925 = vmatpush1.msra.mxu0 0.0
    %2926 = vmatprep.subr.mxu0 0.0
    %2927 = vmatpush1.msra.mxu0 0.0
    %2928 = vmatprep.subr.mxu0 0.0
    %2929 = vmatpush1.msra.mxu0 0.0
    %2930 = vmatprep.mubr.f32.mxu0 0.0
    %2931 = vmatmul.mubr.f32.gmra.mrb[0].mxu0 %v2349
    %v2932 = vpop.f32.mrb[0].mxu0
    %v2933 = vadd.f32 %v2864, %v2932
    %v2934 = vpop.f32.mrb[0].mxu0
    %2935 = vdwg.mxu0
    %s2936 = scalar_lea.vmem %s9, 192
    %v2937 = vld [vmem:[%s2936] sm:$0xff]
    %v2938 = vld [vmem:[%s2936 + $0x8] sm:$0xff]
    %v2939 = vld [vmem:[%s2936 + $0x10] sm:$0xff]
    %v2940 = vld [vmem:[%s2936 + $0x18] sm:$0xff]
    %v2941 = vld [vmem:[%s2936 + $0x20] sm:$0xff]
    %v2942 = vld [vmem:[%s2936 + $0x28] sm:$0xff]
    %v2943 = vld [vmem:[%s2936 + $0x30] sm:$0xff]
    %v2944 = vld [vmem:[%s2936 + $0x38] sm:$0xff]
    %s2945 = scalar_lea.vmem %s10, 3
    %v2946 = vld [vmem:[%s2945] sm:$0x1]
    %v2948 = vlaneseq
    %v2949 = vshrl.u32 %v2948, 7
    %v2950 = vsub.s32 0, %v2949
    %v2951 = vrot.slane %v2946, %v2950
    %2953 = vmatprep.subr.mxu0 0.0
    %2954 = vmatpush1.msra.mxu0 %v2937
    %2955 = vmatprep.subr.mxu0 0.0
    %2956 = vmatpush1.msra.mxu0 %v2938
    %2957 = vmatprep.subr.mxu0 0.0
    %2958 = vmatpush1.msra.mxu0 %v2939
    %2959 = vmatprep.subr.mxu0 0.0
    %2960 = vmatpush1.msra.mxu0 %v2940
    %2961 = vmatprep.subr.mxu0 0.0
    %2962 = vmatpush1.msra.mxu0 %v2941
    %2963 = vmatprep.subr.mxu0 0.0
    %2964 = vmatpush1.msra.mxu0 %v2942
    %2965 = vmatprep.subr.mxu0 0.0
    %2966 = vmatpush1.msra.mxu0 %v2943
    %2967 = vmatprep.subr.mxu0 0.0
    %2968 = vmatpush1.msra.mxu0 %v2944
    %2969 = vmatprep.subr.mxu0 0.0
    %2970 = vmatpush1.msra.mxu0 0.0
    %2971 = vmatprep.subr.mxu0 0.0
    %2972 = vmatpush1.msra.mxu0 0.0
    %2973 = vmatprep.subr.mxu0 0.0
    %2974 = vmatpush1.msra.mxu0 0.0
    %2975 = vmatprep.subr.mxu0 0.0
    %2976 = vmatpush1.msra.mxu0 0.0
    %2977 = vmatprep.subr.mxu0 0.0
    %2978 = vmatpush1.msra.mxu0 0.0
    %2979 = vmatprep.subr.mxu0 0.0
    %2980 = vmatpush1.msra.mxu0 0.0
    %2981 = vmatprep.subr.mxu0 0.0
    %2982 = vmatpush1.msra.mxu0 0.0
    %2983 = vmatprep.subr.mxu0 0.0
    %2984 = vmatpush1.msra.mxu0 0.0
    %2985 = vmatprep.subr.mxu0 0.0
    %2986 = vmatpush1.msra.mxu0 0.0
    %2987 = vmatprep.subr.mxu0 0.0
    %2988 = vmatpush1.msra.mxu0 0.0
    %2989 = vmatprep.subr.mxu0 0.0
    %2990 = vmatpush1.msra.mxu0 0.0
    %2991 = vmatprep.subr.mxu0 0.0
    %2992 = vmatpush1.msra.mxu0 0.0
    %2993 = vmatprep.subr.mxu0 0.0
    %2994 = vmatpush1.msra.mxu0 0.0
    %2995 = vmatprep.subr.mxu0 0.0
    %2996 = vmatpush1.msra.mxu0 0.0
    %2997 = vmatprep.subr.mxu0 0.0
    %2998 = vmatpush1.msra.mxu0 0.0
    %2999 = vmatprep.subr.mxu0 0.0
    %3000 = vmatpush1.msra.mxu0 0.0
    %3001 = vmatprep.subr.mxu0 0.0
    %3002 = vmatpush1.msra.mxu0 0.0
    %3003 = vmatprep.subr.mxu0 0.0
    %3004 = vmatpush1.msra.mxu0 0.0
    %3005 = vmatprep.subr.mxu0 0.0
    %3006 = vmatpush1.msra.mxu0 0.0
    %3007 = vmatprep.subr.mxu0 0.0
    %3008 = vmatpush1.msra.mxu0 0.0
    %3009 = vmatprep.subr.mxu0 0.0
    %3010 = vmatpush1.msra.mxu0 0.0
    %3011 = vmatprep.subr.mxu0 0.0
    %3012 = vmatpush1.msra.mxu0 0.0
    %3013 = vmatprep.subr.mxu0 0.0
    %3014 = vmatpush1.msra.mxu0 0.0
    %3015 = vmatprep.subr.mxu0 0.0
    %3016 = vmatpush1.msra.mxu0 0.0
    %3017 = vmatprep.mubr.f32.mxu0 0.0
    %3018 = vmatmul.mubr.f32.gmra.mrb[0].mxu0 %v2349
    %v3019 = vpop.f32.mrb[0].mxu0
    %v3020 = vadd.f32 %v2951, %v3019
    %v3021 = vpop.f32.mrb[0].mxu0
    %3022 = vdwg.mxu0
    %v3024 = vsel %vm383, %v2846, 0
    %v3027 = vsel %vm383, %v2933, 0
    %3029 = vmatprep.subr.mxu0 0.0
    %3030 = vmatpush1.xpose.msra.mxu0 %v3027
    %3031 = vmatprep.subr.mxu0 0.0
    %3032 = vmatpush1.xpose.msra.mxu0 0.0
    %3033 = vmatprep.subr.mxu0 0.0
    %3034 = vmatpush1.xpose.msra.mxu0 0.0
    %3035 = vmatprep.subr.mxu0 0.0
    %3036 = vmatpush1.xpose.msra.mxu0 0.0
    %3037 = vmatprep.subr.mxu0 0.0
    %3038 = vmatpush1.xpose.msra.mxu0 0.0
    %3039 = vmatprep.subr.mxu0 0.0
    %3040 = vmatpush1.xpose.msra.mxu0 0.0
    %3041 = vmatprep.subr.mxu0 0.0
    %3042 = vmatpush1.xpose.msra.mxu0 0.0
    %3043 = vmatprep.subr.mxu0 0.0
    %3044 = vmatpush1.xpose.msra.mxu0 0.0
    %3045 = vmatprep.subr.mxu0 0.0
    %3046 = vmatpush1.xpose.msra.mxu0 0.0
    %3047 = vmatprep.subr.mxu0 0.0
    %3048 = vmatpush1.xpose.msra.mxu0 0.0
    %3049 = vmatprep.subr.mxu0 0.0
    %3050 = vmatpush1.xpose.msra.mxu0 0.0
    %3051 = vmatprep.subr.mxu0 0.0
    %3052 = vmatpush1.xpose.msra.mxu0 0.0
    %3053 = vmatprep.subr.mxu0 0.0
    %3054 = vmatpush1.xpose.msra.mxu0 0.0
    %3055 = vmatprep.subr.mxu0 0.0
    %3056 = vmatpush1.xpose.msra.mxu0 0.0
    %3057 = vmatprep.subr.mxu0 0.0
    %3058 = vmatpush1.xpose.msra.mxu0 0.0
    %3059 = vmatprep.subr.mxu0 0.0
    %3060 = vmatpush1.xpose.msra.mxu0 0.0
    %3061 = vmatprep.subr.mxu0 0.0
    %3062 = vmatpush1.xpose.msra.mxu0 0.0
    %3063 = vmatprep.subr.mxu0 0.0
    %3064 = vmatpush1.xpose.msra.mxu0 0.0
    %3065 = vmatprep.subr.mxu0 0.0
    %3066 = vmatpush1.xpose.msra.mxu0 0.0
    %3067 = vmatprep.subr.mxu0 0.0
    %3068 = vmatpush1.xpose.msra.mxu0 0.0
    %3069 = vmatprep.subr.mxu0 0.0
    %3070 = vmatpush1.xpose.msra.mxu0 0.0
    %3071 = vmatprep.subr.mxu0 0.0
    %3072 = vmatpush1.xpose.msra.mxu0 0.0
    %3073 = vmatprep.subr.mxu0 0.0
    %3074 = vmatpush1.xpose.msra.mxu0 0.0
    %3075 = vmatprep.subr.mxu0 0.0
    %3076 = vmatpush1.xpose.msra.mxu0 0.0
    %3077 = vmatprep.subr.mxu0 0.0
    %3078 = vmatpush1.xpose.msra.mxu0 0.0
    %3079 = vmatprep.subr.mxu0 0.0
    %3080 = vmatpush1.xpose.msra.mxu0 0.0
    %3081 = vmatprep.subr.mxu0 0.0
    %3082 = vmatpush1.xpose.msra.mxu0 0.0
    %3083 = vmatprep.subr.mxu0 0.0
    %3084 = vmatpush1.xpose.msra.mxu0 0.0
    %3085 = vmatprep.subr.mxu0 0.0
    %3086 = vmatpush1.xpose.msra.mxu0 0.0
    %3087 = vmatprep.subr.mxu0 0.0
    %3088 = vmatpush1.xpose.msra.mxu0 0.0
    %3089 = vmatprep.subr.mxu0 0.0
    %3090 = vmatpush1.xpose.msra.mxu0 0.0
    %3091 = vmatprep.subr.mxu0 0.0
    %3092 = vmatpush1.xpose.msra.mxu0 0.0
    %3093 = vmatprep.mubr.f32.mxu0 0.0
    %3094 = vmatmul.mubr.f32.gmra.mrb[0].mxu0 %v3024
    %v3095 = vpop.f32.mrb[0].mxu0
    %v3096 = vadd.f32 0.0, %v3095
    %v3097 = vpop.f32.mrb[0].mxu0
    %3098 = vdwg.mxu0
    %v3099 = vmul.f32 %v3096, 0.17677669
    %v3100 = vadd.f32 %v3099, %v123
    %v3101 = vsel %vm462, %v3100, -inf
    %3102 = vmax.xlane.f32.xlu0 %v3101
    %v3103 = vpop.xlane.xlu0 %3102
    %v3104 = vsub.f32 %v3100, %v3103
    %v3105 = vmul.f32 %v3104, 1.442695
    %v3106 = vpow.pop %v3105
    %v3107 = vsel %vm462, %v3106, 0.0
    %3108 = vadd.xlane.f32.xlu0 %v3107
    %v3109 = vpop.xlane.xlu0 %3108
    %v3110 = vrcp.pop %v3109
    %v3111 = vmul.f32 %v3106, %v3110
    %v3113 = vsel %vm462, %v3111, 0
    %3115 = vmatprep.subr.mxu0 0.0
    %3116 = vmatpush1.msra.mxu0 %v3020
    %3117 = vmatprep.subr.mxu0 0.0
    %3118 = vmatpush1.msra.mxu0 0.0
    %3119 = vmatprep.subr.mxu0 0.0
    %3120 = vmatpush1.msra.mxu0 0.0
    %3121 = vmatprep.subr.mxu0 0.0
    %3122 = vmatpush1.msra.mxu0 0.0
    %3123 = vmatprep.subr.mxu0 0.0
    %3124 = vmatpush1.msra.mxu0 0.0
    %3125 = vmatprep.subr.mxu0 0.0
    %3126 = vmatpush1.msra.mxu0 0.0
    %3127 = vmatprep.subr.mxu0 0.0
    %3128 = vmatpush1.msra.mxu0 0.0
    %3129 = vmatprep.subr.mxu0 0.0
    %3130 = vmatpush1.msra.mxu0 0.0
    %3131 = vmatprep.subr.mxu0 0.0
    %3132 = vmatpush1.msra.mxu0 0.0
    %3133 = vmatprep.subr.mxu0 0.0
    %3134 = vmatpush1.msra.mxu0 0.0
    %3135 = vmatprep.subr.mxu0 0.0
    %3136 = vmatpush1.msra.mxu0 0.0
    %3137 = vmatprep.subr.mxu0 0.0
    %3138 = vmatpush1.msra.mxu0 0.0
    %3139 = vmatprep.subr.mxu0 0.0
    %3140 = vmatpush1.msra.mxu0 0.0
    %3141 = vmatprep.subr.mxu0 0.0
    %3142 = vmatpush1.msra.mxu0 0.0
    %3143 = vmatprep.subr.mxu0 0.0
    %3144 = vmatpush1.msra.mxu0 0.0
    %3145 = vmatprep.subr.mxu0 0.0
    %3146 = vmatpush1.msra.mxu0 0.0
    %3147 = vmatprep.subr.mxu0 0.0
    %3148 = vmatpush1.msra.mxu0 0.0
    %3149 = vmatprep.subr.mxu0 0.0
    %3150 = vmatpush1.msra.mxu0 0.0
    %3151 = vmatprep.subr.mxu0 0.0
    %3152 = vmatpush1.msra.mxu0 0.0
    %3153 = vmatprep.subr.mxu0 0.0
    %3154 = vmatpush1.msra.mxu0 0.0
    %3155 = vmatprep.subr.mxu0 0.0
    %3156 = vmatpush1.msra.mxu0 0.0
    %3157 = vmatprep.subr.mxu0 0.0
    %3158 = vmatpush1.msra.mxu0 0.0
    %3159 = vmatprep.subr.mxu0 0.0
    %3160 = vmatpush1.msra.mxu0 0.0
    %3161 = vmatprep.subr.mxu0 0.0
    %3162 = vmatpush1.msra.mxu0 0.0
    %3163 = vmatprep.subr.mxu0 0.0
    %3164 = vmatpush1.msra.mxu0 0.0
    %3165 = vmatprep.subr.mxu0 0.0
    %3166 = vmatpush1.msra.mxu0 0.0
    %3167 = vmatprep.subr.mxu0 0.0
    %3168 = vmatpush1.msra.mxu0 0.0
    %3169 = vmatprep.subr.mxu0 0.0
    %3170 = vmatpush1.msra.mxu0 0.0
    %3171 = vmatprep.subr.mxu0 0.0
    %3172 = vmatpush1.msra.mxu0 0.0
    %3173 = vmatprep.subr.mxu0 0.0
    %3174 = vmatpush1.msra.mxu0 0.0
    %3175 = vmatprep.subr.mxu0 0.0
    %3176 = vmatpush1.msra.mxu0 0.0
    %3177 = vmatprep.subr.mxu0 0.0
    %3178 = vmatpush1.msra.mxu0 0.0
    %3179 = vmatprep.mubr.f32.mxu0 0.0
    %3180 = vmatmul.mubr.f32.gmra.mrb[0].mxu0 %v3113
    %v3181 = vpop.f32.mrb[0].mxu0
    %v3182 = vadd.f32 0.0, %v3181
    %v3183 = vpop.f32.mrb[0].mxu0
    %3184 = vdwg.mxu0
    %s3185 = scalar_lea.vmem %s11, 96
    %v3186 = vld [vmem:[%s3185] sm:$0xff]
    %v3187 = vld [vmem:[%s3185 + $0x8] sm:$0xff]
    %v3188 = vld [vmem:[%s3185 + $0x10] sm:$0xff]
    %v3189 = vld [vmem:[%s3185 + $0x18] sm:$0xff]
    %v3191 = vsel %vm383, %v3182, 0
    %3193 = vmatprep.subr.mxu0 0.0
    %3194 = vmatpush1.msra.mxu0 %v3186
    %3195 = vmatprep.subr.mxu0 0.0
    %3196 = vmatpush1.msra.mxu0 %v3187
    %3197 = vmatprep.subr.mxu0 0.0
    %3198 = vmatpush1.msra.mxu0 %v3188
    %3199 = vmatprep.subr.mxu0 0.0
    %3200 = vmatpush1.msra.mxu0 %v3189
    %3201 = vmatprep.subr.mxu0 0.0
    %3202 = vmatpush1.msra.mxu0 0.0
    %3203 = vmatprep.subr.mxu0 0.0
    %3204 = vmatpush1.msra.mxu0 0.0
    %3205 = vmatprep.subr.mxu0 0.0
    %3206 = vmatpush1.msra.mxu0 0.0
    %3207 = vmatprep.subr.mxu0 0.0
    %3208 = vmatpush1.msra.mxu0 0.0
    %3209 = vmatprep.subr.mxu0 0.0
    %3210 = vmatpush1.msra.mxu0 0.0
    %3211 = vmatprep.subr.mxu0 0.0
    %3212 = vmatpush1.msra.mxu0 0.0
    %3213 = vmatprep.subr.mxu0 0.0
    %3214 = vmatpush1.msra.mxu0 0.0
    %3215 = vmatprep.subr.mxu0 0.0
    %3216 = vmatpush1.msra.mxu0 0.0
    %3217 = vmatprep.subr.mxu0 0.0
    %3218 = vmatpush1.msra.mxu0 0.0
    %3219 = vmatprep.subr.mxu0 0.0
    %3220 = vmatpush1.msra.mxu0 0.0
    %3221 = vmatprep.subr.mxu0 0.0
    %3222 = vmatpush1.msra.mxu0 0.0
    %3223 = vmatprep.subr.mxu0 0.0
    %3224 = vmatpush1.msra.mxu0 0.0
    %3225 = vmatprep.subr.mxu0 0.0
    %3226 = vmatpush1.msra.mxu0 0.0
    %3227 = vmatprep.subr.mxu0 0.0
    %3228 = vmatpush1.msra.mxu0 0.0
    %3229 = vmatprep.subr.mxu0 0.0
    %3230 = vmatpush1.msra.mxu0 0.0
    %3231 = vmatprep.subr.mxu0 0.0
    %3232 = vmatpush1.msra.mxu0 0.0
    %3233 = vmatprep.subr.mxu0 0.0
    %3234 = vmatpush1.msra.mxu0 0.0
    %3235 = vmatprep.subr.mxu0 0.0
    %3236 = vmatpush1.msra.mxu0 0.0
    %3237 = vmatprep.subr.mxu0 0.0
    %3238 = vmatpush1.msra.mxu0 0.0
    %3239 = vmatprep.subr.mxu0 0.0
    %3240 = vmatpush1.msra.mxu0 0.0
    %3241 = vmatprep.subr.mxu0 0.0
    %3242 = vmatpush1.msra.mxu0 0.0
    %3243 = vmatprep.subr.mxu0 0.0
    %3244 = vmatpush1.msra.mxu0 0.0
    %3245 = vmatprep.subr.mxu0 0.0
    %3246 = vmatpush1.msra.mxu0 0.0
    %3247 = vmatprep.subr.mxu0 0.0
    %3248 = vmatpush1.msra.mxu0 0.0
    %3249 = vmatprep.subr.mxu0 0.0
    %3250 = vmatpush1.msra.mxu0 0.0
    %3251 = vmatprep.subr.mxu0 0.0
    %3252 = vmatpush1.msra.mxu0 0.0
    %3253 = vmatprep.subr.mxu0 0.0
    %3254 = vmatpush1.msra.mxu0 0.0
    %3255 = vmatprep.subr.mxu0 0.0
    %3256 = vmatpush1.msra.mxu0 0.0
    %3257 = vmatprep.mubr.f32.mxu0 0.0
    %3258 = vmatmul.mubr.f32.gmra.mrb[0].mxu0 %v3191
    %v3259 = vpop.f32.mrb[0].mxu0
    %v3260 = vadd.f32 0.0, %v3259
    %v3261 = vpop.f32.mrb[0].mxu0
    %3262 = vdwg.mxu0
    %v3264 = vsel %vm383, %v2754, 0
    %3266 = vmatprep.subr.mxu0 0.0
    %3267 = vmatpush1.msra.mxu0 %v2758
    %3268 = vmatprep.subr.mxu0 0.0
    %3269 = vmatpush1.msra.mxu0 %v2759
    %3270 = vmatprep.subr.mxu0 0.0
    %3271 = vmatpush1.msra.mxu0 %v2760
    %3272 = vmatprep.subr.mxu0 0.0
    %3273 = vmatpush1.msra.mxu0 %v2761
    %3274 = vmatprep.subr.mxu0 0.0
    %3275 = vmatpush1.msra.mxu0 0.0
    %3276 = vmatprep.subr.mxu0 0.0
    %3277 = vmatpush1.msra.mxu0 0.0
    %3278 = vmatprep.subr.mxu0 0.0
    %3279 = vmatpush1.msra.mxu0 0.0
    %3280 = vmatprep.subr.mxu0 0.0
    %3281 = vmatpush1.msra.mxu0 0.0
    %3282 = vmatprep.subr.mxu0 0.0
    %3283 = vmatpush1.msra.mxu0 0.0
    %3284 = vmatprep.subr.mxu0 0.0
    %3285 = vmatpush1.msra.mxu0 0.0
    %3286 = vmatprep.subr.mxu0 0.0
    %3287 = vmatpush1.msra.mxu0 0.0
    %3288 = vmatprep.subr.mxu0 0.0
    %3289 = vmatpush1.msra.mxu0 0.0
    %3290 = vmatprep.subr.mxu0 0.0
    %3291 = vmatpush1.msra.mxu0 0.0
    %3292 = vmatprep.subr.mxu0 0.0
    %3293 = vmatpush1.msra.mxu0 0.0
    %3294 = vmatprep.subr.mxu0 0.0
    %3295 = vmatpush1.msra.mxu0 0.0
    %3296 = vmatprep.subr.mxu0 0.0
    %3297 = vmatpush1.msra.mxu0 0.0
    %3298 = vmatprep.subr.mxu0 0.0
    %3299 = vmatpush1.msra.mxu0 0.0
    %3300 = vmatprep.subr.mxu0 0.0
    %3301 = vmatpush1.msra.mxu0 0.0
    %3302 = vmatprep.subr.mxu0 0.0
    %3303 = vmatpush1.msra.mxu0 0.0
    %3304 = vmatprep.subr.mxu0 0.0
    %3305 = vmatpush1.msra.mxu0 0.0
    %3306 = vmatprep.subr.mxu0 0.0
    %3307 = vmatpush1.msra.mxu0 0.0
    %3308 = vmatprep.subr.mxu0 0.0
    %3309 = vmatpush1.msra.mxu0 0.0
    %3310 = vmatprep.subr.mxu0 0.0
    %3311 = vmatpush1.msra.mxu0 0.0
    %3312 = vmatprep.subr.mxu0 0.0
    %3313 = vmatpush1.msra.mxu0 0.0
    %3314 = vmatprep.subr.mxu0 0.0
    %3315 = vmatpush1.msra.mxu0 0.0
    %3316 = vmatprep.subr.mxu0 0.0
    %3317 = vmatpush1.msra.mxu0 0.0
    %3318 = vmatprep.subr.mxu0 0.0
    %3319 = vmatpush1.msra.mxu0 0.0
    %3320 = vmatprep.subr.mxu0 0.0
    %3321 = vmatpush1.msra.mxu0 0.0
    %3322 = vmatprep.subr.mxu0 0.0
    %3323 = vmatpush1.msra.mxu0 0.0
    %3324 = vmatprep.subr.mxu0 0.0
    %3325 = vmatpush1.msra.mxu0 0.0
    %3326 = vmatprep.subr.mxu0 0.0
    %3327 = vmatpush1.msra.mxu0 0.0
    %3328 = vmatprep.subr.mxu0 0.0
    %3329 = vmatpush1.msra.mxu0 0.0
    %3330 = vmatprep.mubr.f32.mxu0 0.0
    %3331 = vmatmul.mubr.f32.gmra.mrb[0].mxu0 %v3264
    %v3332 = vpop.f32.mrb[0].mxu0
    %v3333 = vadd.f32 %v3260, %v3332
    %v3334 = vpop.f32.mrb[0].mxu0
    %3335 = vdwg.mxu0
    %v3337 = vsel %vm79, %v2330, 0
    %3339 = vmatprep.subr.mxu0 0.0
    %3340 = vmatpush1.msra.mxu0 %v2332
    %3341 = vmatprep.subr.mxu0 0.0
    %3342 = vmatpush1.msra.mxu0 %v2333
    %3343 = vmatprep.subr.mxu0 0.0
    %3344 = vmatpush1.msra.mxu0 %v2334
    %3345 = vmatprep.subr.mxu0 0.0
    %3346 = vmatpush1.msra.mxu0 %v2335
    %3347 = vmatprep.subr.mxu0 0.0
    %3348 = vmatpush1.msra.mxu0 %v2336
    %3349 = vmatprep.subr.mxu0 0.0
    %3350 = vmatpush1.msra.mxu0 %v2337
    %3351 = vmatprep.subr.mxu0 0.0
    %3352 = vmatpush1.msra.mxu0 %v2338
    %3353 = vmatprep.subr.mxu0 0.0
    %3354 = vmatpush1.msra.mxu0 %v2339
    %3355 = vmatprep.subr.mxu0 0.0
    %3356 = vmatpush1.msra.mxu0 0.0
    %3357 = vmatprep.subr.mxu0 0.0
    %3358 = vmatpush1.msra.mxu0 0.0
    %3359 = vmatprep.subr.mxu0 0.0
    %3360 = vmatpush1.msra.mxu0 0.0
    %3361 = vmatprep.subr.mxu0 0.0
    %3362 = vmatpush1.msra.mxu0 0.0
    %3363 = vmatprep.subr.mxu0 0.0
    %3364 = vmatpush1.msra.mxu0 0.0
    %3365 = vmatprep.subr.mxu0 0.0
    %3366 = vmatpush1.msra.mxu0 0.0
    %3367 = vmatprep.subr.mxu0 0.0
    %3368 = vmatpush1.msra.mxu0 0.0
    %3369 = vmatprep.subr.mxu0 0.0
    %3370 = vmatpush1.msra.mxu0 0.0
    %3371 = vmatprep.subr.mxu0 0.0
    %3372 = vmatpush1.msra.mxu0 0.0
    %3373 = vmatprep.subr.mxu0 0.0
    %3374 = vmatpush1.msra.mxu0 0.0
    %3375 = vmatprep.subr.mxu0 0.0
    %3376 = vmatpush1.msra.mxu0 0.0
    %3377 = vmatprep.subr.mxu0 0.0
    %3378 = vmatpush1.msra.mxu0 0.0
    %3379 = vmatprep.subr.mxu0 0.0
    %3380 = vmatpush1.msra.mxu0 0.0
    %3381 = vmatprep.subr.mxu0 0.0
    %3382 = vmatpush1.msra.mxu0 0.0
    %3383 = vmatprep.subr.mxu0 0.0
    %3384 = vmatpush1.msra.mxu0 0.0
    %3385 = vmatprep.subr.mxu0 0.0
    %3386 = vmatpush1.msra.mxu0 0.0
    %3387 = vmatprep.subr.mxu0 0.0
    %3388 = vmatpush1.msra.mxu0 0.0
    %3389 = vmatprep.subr.mxu0 0.0
    %3390 = vmatpush1.msra.mxu0 0.0
    %3391 = vmatprep.subr.mxu0 0.0
    %3392 = vmatpush1.msra.mxu0 0.0
    %3393 = vmatprep.subr.mxu0 0.0
    %3394 = vmatpush1.msra.mxu0 0.0
    %3395 = vmatprep.subr.mxu0 0.0
    %3396 = vmatpush1.msra.mxu0 0.0
    %3397 = vmatprep.subr.mxu0 0.0
    %3398 = vmatpush1.msra.mxu0 0.0
    %3399 = vmatprep.subr.mxu0 0.0
    %3400 = vmatpush1.msra.mxu0 0.0
    %3401 = vmatprep.subr.mxu0 0.0
    %3402 = vmatpush1.msra.mxu0 0.0
    %3403 = vmatprep.mubr.f32.mxu0 0.0
    %3404 = vmatmul.mubr.f32.gmra.mrb[0].mxu0 %v3337
    %v3405 = vpop.f32.mrb[0].mxu0
    %v3406 = vadd.f32 %v2346, %v3405
    %v3407 = vpop.f32.mrb[0].mxu0
    %3408 = vdwg.mxu0
    %3409 = vmatprep.subr.mxu0 0.0
    %3410 = vmatpush1.msra.mxu0 %v2422
    %3411 = vmatprep.subr.mxu0 0.0
    %3412 = vmatpush1.msra.mxu0 %v2423
    %3413 = vmatprep.subr.mxu0 0.0
    %3414 = vmatpush1.msra.mxu0 %v2424
    %3415 = vmatprep.subr.mxu0 0.0
    %3416 = vmatpush1.msra.mxu0 %v2425
    %3417 = vmatprep.subr.mxu0 0.0
    %3418 = vmatpush1.msra.mxu0 %v2426
    %3419 = vmatprep.subr.mxu0 0.0
    %3420 = vmatpush1.msra.mxu0 %v2427
    %3421 = vmatprep.subr.mxu0 0.0
    %3422 = vmatpush1.msra.mxu0 %v2428
    %3423 = vmatprep.subr.mxu0 0.0
    %3424 = vmatpush1.msra.mxu0 %v2429
    %3425 = vmatprep.subr.mxu0 0.0
    %3426 = vmatpush1.msra.mxu0 0.0
    %3427 = vmatprep.subr.mxu0 0.0
    %3428 = vmatpush1.msra.mxu0 0.0
    %3429 = vmatprep.subr.mxu0 0.0
    %3430 = vmatpush1.msra.mxu0 0.0
    %3431 = vmatprep.subr.mxu0 0.0
    %3432 = vmatpush1.msra.mxu0 0.0
    %3433 = vmatprep.subr.mxu0 0.0
    %3434 = vmatpush1.msra.mxu0 0.0
    %3435 = vmatprep.subr.mxu0 0.0
    %3436 = vmatpush1.msra.mxu0 0.0
    %3437 = vmatprep.subr.mxu0 0.0
    %3438 = vmatpush1.msra.mxu0 0.0
    %3439 = vmatprep.subr.mxu0 0.0
    %3440 = vmatpush1.msra.mxu0 0.0
    %3441 = vmatprep.subr.mxu0 0.0
    %3442 = vmatpush1.msra.mxu0 0.0
    %3443 = vmatprep.subr.mxu0 0.0
    %3444 = vmatpush1.msra.mxu0 0.0
    %3445 = vmatprep.subr.mxu0 0.0
    %3446 = vmatpush1.msra.mxu0 0.0
    %3447 = vmatprep.subr.mxu0 0.0
    %3448 = vmatpush1.msra.mxu0 0.0
    %3449 = vmatprep.subr.mxu0 0.0
    %3450 = vmatpush1.msra.mxu0 0.0
    %3451 = vmatprep.subr.mxu0 0.0
    %3452 = vmatpush1.msra.mxu0 0.0
    %3453 = vmatprep.subr.mxu0 0.0
    %3454 = vmatpush1.msra.mxu0 0.0
    %3455 = vmatprep.subr.mxu0 0.0
    %3456 = vmatpush1.msra.mxu0 0.0
    %3457 = vmatprep.subr.mxu0 0.0
    %3458 = vmatpush1.msra.mxu0 0.0
    %3459 = vmatprep.subr.mxu0 0.0
    %3460 = vmatpush1.msra.mxu0 0.0
    %3461 = vmatprep.subr.mxu0 0.0
    %3462 = vmatpush1.msra.mxu0 0.0
    %3463 = vmatprep.subr.mxu0 0.0
    %3464 = vmatpush1.msra.mxu0 0.0
    %3465 = vmatprep.subr.mxu0 0.0
    %3466 = vmatpush1.msra.mxu0 0.0
    %3467 = vmatprep.subr.mxu0 0.0
    %3468 = vmatpush1.msra.mxu0 0.0
    %3469 = vmatprep.subr.mxu0 0.0
    %3470 = vmatpush1.msra.mxu0 0.0
    %3471 = vmatprep.subr.mxu0 0.0
    %3472 = vmatpush1.msra.mxu0 0.0
    %3473 = vmatprep.mubr.f32.mxu0 0.0
    %3474 = vmatmul.mubr.f32.gmra.mrb[0].mxu0 %v3337
    %v3475 = vpop.f32.mrb[0].mxu0
    %v3476 = vadd.f32 %v2436, %v3475
    %v3477 = vpop.f32.mrb[0].mxu0
    %3478 = vdwg.mxu0
    %3479 = vmatprep.subr.mxu0 0.0
    %3480 = vmatpush1.msra.mxu0 %v2509
    %3481 = vmatprep.subr.mxu0 0.0
    %3482 = vmatpush1.msra.mxu0 %v2510
    %3483 = vmatprep.subr.mxu0 0.0
    %3484 = vmatpush1.msra.mxu0 %v2511
    %3485 = vmatprep.subr.mxu0 0.0
    %3486 = vmatpush1.msra.mxu0 %v2512
    %3487 = vmatprep.subr.mxu0 0.0
    %3488 = vmatpush1.msra.mxu0 %v2513
    %3489 = vmatprep.subr.mxu0 0.0
    %3490 = vmatpush1.msra.mxu0 %v2514
    %3491 = vmatprep.subr.mxu0 0.0
    %3492 = vmatpush1.msra.mxu0 %v2515
    %3493 = vmatprep.subr.mxu0 0.0
    %3494 = vmatpush1.msra.mxu0 %v2516
    %3495 = vmatprep.subr.mxu0 0.0
    %3496 = vmatpush1.msra.mxu0 0.0
    %3497 = vmatprep.subr.mxu0 0.0
    %3498 = vmatpush1.msra.mxu0 0.0
    %3499 = vmatprep.subr.mxu0 0.0
    %3500 = vmatpush1.msra.mxu0 0.0
    %3501 = vmatprep.subr.mxu0 0.0
    %3502 = vmatpush1.msra.mxu0 0.0
    %3503 = vmatprep.subr.mxu0 0.0
    %3504 = vmatpush1.msra.mxu0 0.0
    %3505 = vmatprep.subr.mxu0 0.0
    %3506 = vmatpush1.msra.mxu0 0.0
    %3507 = vmatprep.subr.mxu0 0.0
    %3508 = vmatpush1.msra.mxu0 0.0
    %3509 = vmatprep.subr.mxu0 0.0
    %3510 = vmatpush1.msra.mxu0 0.0
    %3511 = vmatprep.subr.mxu0 0.0
    %3512 = vmatpush1.msra.mxu0 0.0
    %3513 = vmatprep.subr.mxu0 0.0
    %3514 = vmatpush1.msra.mxu0 0.0
    %3515 = vmatprep.subr.mxu0 0.0
    %3516 = vmatpush1.msra.mxu0 0.0
    %3517 = vmatprep.subr.mxu0 0.0
    %3518 = vmatpush1.msra.mxu0 0.0
    %3519 = vmatprep.subr.mxu0 0.0
    %3520 = vmatpush1.msra.mxu0 0.0
    %3521 = vmatprep.subr.mxu0 0.0
    %3522 = vmatpush1.msra.mxu0 0.0
    %3523 = vmatprep.subr.mxu0 0.0
    %3524 = vmatpush1.msra.mxu0 0.0
    %3525 = vmatprep.subr.mxu0 0.0
    %3526 = vmatpush1.msra.mxu0 0.0
    %3527 = vmatprep.subr.mxu0 0.0
    %3528 = vmatpush1.msra.mxu0 0.0
    %3529 = vmatprep.subr.mxu0 0.0
    %3530 = vmatpush1.msra.mxu0 0.0
    %3531 = vmatprep.subr.mxu0 0.0
    %3532 = vmatpush1.msra.mxu0 0.0
    %3533 = vmatprep.subr.mxu0 0.0
    %3534 = vmatpush1.msra.mxu0 0.0
    %3535 = vmatprep.subr.mxu0 0.0
    %3536 = vmatpush1.msra.mxu0 0.0
    %3537 = vmatprep.subr.mxu0 0.0
    %3538 = vmatpush1.msra.mxu0 0.0
    %3539 = vmatprep.subr.mxu0 0.0
    %3540 = vmatpush1.msra.mxu0 0.0
    %3541 = vmatprep.subr.mxu0 0.0
    %3542 = vmatpush1.msra.mxu0 0.0
    %3543 = vmatprep.mubr.f32.mxu0 0.0
    %3544 = vmatmul.mubr.f32.gmra.mrb[0].mxu0 %v3337
    %v3545 = vpop.f32.mrb[0].mxu0
    %v3546 = vadd.f32 %v2523, %v3545
    %v3547 = vpop.f32.mrb[0].mxu0
    %3548 = vdwg.mxu0
    %v3550 = vsel %vm383, %v3406, 0
    %v3553 = vsel %vm383, %v3476, 0
    %3555 = vmatprep.subr.mxu0 0.0
    %3556 = vmatpush1.xpose.msra.mxu0 %v3553
    %3557 = vmatprep.subr.mxu0 0.0
    %3558 = vmatpush1.xpose.msra.mxu0 0.0
    %3559 = vmatprep.subr.mxu0 0.0
    %3560 = vmatpush1.xpose.msra.mxu0 0.0
    %3561 = vmatprep.subr.mxu0 0.0
    %3562 = vmatpush1.xpose.msra.mxu0 0.0
    %3563 = vmatprep.subr.mxu0 0.0
    %3564 = vmatpush1.xpose.msra.mxu0 0.0
    %3565 = vmatprep.subr.mxu0 0.0
    %3566 = vmatpush1.xpose.msra.mxu0 0.0
    %3567 = vmatprep.subr.mxu0 0.0
    %3568 = vmatpush1.xpose.msra.mxu0 0.0
    %3569 = vmatprep.subr.mxu0 0.0
    %3570 = vmatpush1.xpose.msra.mxu0 0.0
    %3571 = vmatprep.subr.mxu0 0.0
    %3572 = vmatpush1.xpose.msra.mxu0 0.0
    %3573 = vmatprep.subr.mxu0 0.0
    %3574 = vmatpush1.xpose.msra.mxu0 0.0
    %3575 = vmatprep.subr.mxu0 0.0
    %3576 = vmatpush1.xpose.msra.mxu0 0.0
    %3577 = vmatprep.subr.mxu0 0.0
    %3578 = vmatpush1.xpose.msra.mxu0 0.0
    %3579 = vmatprep.subr.mxu0 0.0
    %3580 = vmatpush1.xpose.msra.mxu0 0.0
    %3581 = vmatprep.subr.mxu0 0.0
    %3582 = vmatpush1.xpose.msra.mxu0 0.0
    %3583 = vmatprep.subr.mxu0 0.0
    %3584 = vmatpush1.xpose.msra.mxu0 0.0
    %3585 = vmatprep.subr.mxu0 0.0
    %3586 = vmatpush1.xpose.msra.mxu0 0.0
    %3587 = vmatprep.subr.mxu0 0.0
    %3588 = vmatpush1.xpose.msra.mxu0 0.0
    %3589 = vmatprep.subr.mxu0 0.0
    %3590 = vmatpush1.xpose.msra.mxu0 0.0
    %3591 = vmatprep.subr.mxu0 0.0
    %3592 = vmatpush1.xpose.msra.mxu0 0.0
    %3593 = vmatprep.subr.mxu0 0.0
    %3594 = vmatpush1.xpose.msra.mxu0 0.0
    %3595 = vmatprep.subr.mxu0 0.0
    %3596 = vmatpush1.xpose.msra.mxu0 0.0
    %3597 = vmatprep.subr.mxu0 0.0
    %3598 = vmatpush1.xpose.msra.mxu0 0.0
    %3599 = vmatprep.subr.mxu0 0.0
    %3600 = vmatpush1.xpose.msra.mxu0 0.0
    %3601 = vmatprep.subr.mxu0 0.0
    %3602 = vmatpush1.xpose.msra.mxu0 0.0
    %3603 = vmatprep.subr.mxu0 0.0
    %3604 = vmatpush1.xpose.msra.mxu0 0.0
    %3605 = vmatprep.subr.mxu0 0.0
    %3606 = vmatpush1.xpose.msra.mxu0 0.0
    %3607 = vmatprep.subr.mxu0 0.0
    %3608 = vmatpush1.xpose.msra.mxu0 0.0
    %3609 = vmatprep.subr.mxu0 0.0
    %3610 = vmatpush1.xpose.msra.mxu0 0.0
    %3611 = vmatprep.subr.mxu0 0.0
    %3612 = vmatpush1.xpose.msra.mxu0 0.0
    %3613 = vmatprep.subr.mxu0 0.0
    %3614 = vmatpush1.xpose.msra.mxu0 0.0
    %3615 = vmatprep.subr.mxu0 0.0
    %3616 = vmatpush1.xpose.msra.mxu0 0.0
    %3617 = vmatprep.subr.mxu0 0.0
    %3618 = vmatpush1.xpose.msra.mxu0 0.0
    %3619 = vmatprep.mubr.f32.mxu0 0.0
    %3620 = vmatmul.mubr.f32.gmra.mrb[0].mxu0 %v3550
    %v3621 = vpop.f32.mrb[0].mxu0
    %v3622 = vadd.f32 0.0, %v3621
    %v3623 = vpop.f32.mrb[0].mxu0
    %3624 = vdwg.mxu0
    %v3625 = vmul.f32 %v3622, 0.17677669
    %v3626 = vadd.f32 %v3625, %v124
    %v3627 = vsel %vm462, %v3626, -inf
    %3628 = vmax.xlane.f32.xlu0 %v3627
    %v3629 = vpop.xlane.xlu0 %3628
    %v3630 = vsub.f32 %v3626, %v3629
    %v3631 = vmul.f32 %v3630, 1.442695
    %v3632 = vpow.pop %v3631
    %v3633 = vsel %vm462, %v3632, 0.0
    %3634 = vadd.xlane.f32.xlu0 %v3633
    %v3635 = vpop.xlane.xlu0 %3634
    %v3636 = vrcp.pop %v3635
    %v3637 = vmul.f32 %v3632, %v3636
    %v3639 = vsel %vm462, %v3637, 0
    %3641 = vmatprep.subr.mxu0 0.0
    %3642 = vmatpush1.msra.mxu0 %v3546
    %3643 = vmatprep.subr.mxu0 0.0
    %3644 = vmatpush1.msra.mxu0 0.0
    %3645 = vmatprep.subr.mxu0 0.0
    %3646 = vmatpush1.msra.mxu0 0.0
    %3647 = vmatprep.subr.mxu0 0.0
    %3648 = vmatpush1.msra.mxu0 0.0
    %3649 = vmatprep.subr.mxu0 0.0
    %3650 = vmatpush1.msra.mxu0 0.0
    %3651 = vmatprep.subr.mxu0 0.0
    %3652 = vmatpush1.msra.mxu0 0.0
    %3653 = vmatprep.subr.mxu0 0.0
    %3654 = vmatpush1.msra.mxu0 0.0
    %3655 = vmatprep.subr.mxu0 0.0
    %3656 = vmatpush1.msra.mxu0 0.0
    %3657 = vmatprep.subr.mxu0 0.0
    %3658 = vmatpush1.msra.mxu0 0.0
    %3659 = vmatprep.subr.mxu0 0.0
    %3660 = vmatpush1.msra.mxu0 0.0
    %3661 = vmatprep.subr.mxu0 0.0
    %3662 = vmatpush1.msra.mxu0 0.0
    %3663 = vmatprep.subr.mxu0 0.0
    %3664 = vmatpush1.msra.mxu0 0.0
    %3665 = vmatprep.subr.mxu0 0.0
    %3666 = vmatpush1.msra.mxu0 0.0
    %3667 = vmatprep.subr.mxu0 0.0
    %3668 = vmatpush1.msra.mxu0 0.0
    %3669 = vmatprep.subr.mxu0 0.0
    %3670 = vmatpush1.msra.mxu0 0.0
    %3671 = vmatprep.subr.mxu0 0.0
    %3672 = vmatpush1.msra.mxu0 0.0
    %3673 = vmatprep.subr.mxu0 0.0
    %3674 = vmatpush1.msra.mxu0 0.0
    %3675 = vmatprep.subr.mxu0 0.0
    %3676 = vmatpush1.msra.mxu0 0.0
    %3677 = vmatprep.subr.mxu0 0.0
    %3678 = vmatpush1.msra.mxu0 0.0
    %3679 = vmatprep.subr.mxu0 0.0
    %3680 = vmatpush1.msra.mxu0 0.0
    %3681 = vmatprep.subr.mxu0 0.0
    %3682 = vmatpush1.msra.mxu0 0.0
    %3683 = vmatprep.subr.mxu0 0.0
    %3684 = vmatpush1.msra.mxu0 0.0
    %3685 = vmatprep.subr.mxu0 0.0
    %3686 = vmatpush1.msra.mxu0 0.0
    %3687 = vmatprep.subr.mxu0 0.0
    %3688 = vmatpush1.msra.mxu0 0.0
    %3689 = vmatprep.subr.mxu0 0.0
    %3690 = vmatpush1.msra.mxu0 0.0
    %3691 = vmatprep.subr.mxu0 0.0
    %3692 = vmatpush1.msra.mxu0 0.0
    %3693 = vmatprep.subr.mxu0 0.0
    %3694 = vmatpush1.msra.mxu0 0.0
    %3695 = vmatprep.subr.mxu0 0.0
    %3696 = vmatpush1.msra.mxu0 0.0
    %3697 = vmatprep.subr.mxu0 0.0
    %3698 = vmatpush1.msra.mxu0 0.0
    %3699 = vmatprep.subr.mxu0 0.0
    %3700 = vmatpush1.msra.mxu0 0.0
    %3701 = vmatprep.subr.mxu0 0.0
    %3702 = vmatpush1.msra.mxu0 0.0
    %3703 = vmatprep.subr.mxu0 0.0
    %3704 = vmatpush1.msra.mxu0 0.0
    %3705 = vmatprep.mubr.f32.mxu0 0.0
    %3706 = vmatmul.mubr.f32.gmra.mrb[0].mxu0 %v3639
    %v3707 = vpop.f32.mrb[0].mxu0
    %v3708 = vadd.f32 0.0, %v3707
    %v3709 = vpop.f32.mrb[0].mxu0
    %3710 = vdwg.mxu0
    %3711 = vmatprep.subr.mxu0 0.0
    %3712 = vmatpush1.msra.mxu0 %v2763
    %3713 = vmatprep.subr.mxu0 0.0
    %3714 = vmatpush1.msra.mxu0 %v2764
    %3715 = vmatprep.subr.mxu0 0.0
    %3716 = vmatpush1.msra.mxu0 %v2765
    %3717 = vmatprep.subr.mxu0 0.0
    %3718 = vmatpush1.msra.mxu0 %v2766
    %3719 = vmatprep.subr.mxu0 0.0
    %3720 = vmatpush1.msra.mxu0 %v2767
    %3721 = vmatprep.subr.mxu0 0.0
    %3722 = vmatpush1.msra.mxu0 %v2768
    %3723 = vmatprep.subr.mxu0 0.0
    %3724 = vmatpush1.msra.mxu0 %v2769
    %3725 = vmatprep.subr.mxu0 0.0
    %3726 = vmatpush1.msra.mxu0 %v2770
    %3727 = vmatprep.subr.mxu0 0.0
    %3728 = vmatpush1.msra.mxu0 0.0
    %3729 = vmatprep.subr.mxu0 0.0
    %3730 = vmatpush1.msra.mxu0 0.0
    %3731 = vmatprep.subr.mxu0 0.0
    %3732 = vmatpush1.msra.mxu0 0.0
    %3733 = vmatprep.subr.mxu0 0.0
    %3734 = vmatpush1.msra.mxu0 0.0
    %3735 = vmatprep.subr.mxu0 0.0
    %3736 = vmatpush1.msra.mxu0 0.0
    %3737 = vmatprep.subr.mxu0 0.0
    %3738 = vmatpush1.msra.mxu0 0.0
    %3739 = vmatprep.subr.mxu0 0.0
    %3740 = vmatpush1.msra.mxu0 0.0
    %3741 = vmatprep.subr.mxu0 0.0
    %3742 = vmatpush1.msra.mxu0 0.0
    %3743 = vmatprep.subr.mxu0 0.0
    %3744 = vmatpush1.msra.mxu0 0.0
    %3745 = vmatprep.subr.mxu0 0.0
    %3746 = vmatpush1.msra.mxu0 0.0
    %3747 = vmatprep.subr.mxu0 0.0
    %3748 = vmatpush1.msra.mxu0 0.0
    %3749 = vmatprep.subr.mxu0 0.0
    %3750 = vmatpush1.msra.mxu0 0.0
    %3751 = vmatprep.subr.mxu0 0.0
    %3752 = vmatpush1.msra.mxu0 0.0
    %3753 = vmatprep.subr.mxu0 0.0
    %3754 = vmatpush1.msra.mxu0 0.0
    %3755 = vmatprep.subr.mxu0 0.0
    %3756 = vmatpush1.msra.mxu0 0.0
    %3757 = vmatprep.subr.mxu0 0.0
    %3758 = vmatpush1.msra.mxu0 0.0
    %3759 = vmatprep.subr.mxu0 0.0
    %3760 = vmatpush1.msra.mxu0 0.0
    %3761 = vmatprep.subr.mxu0 0.0
    %3762 = vmatpush1.msra.mxu0 0.0
    %3763 = vmatprep.subr.mxu0 0.0
    %3764 = vmatpush1.msra.mxu0 0.0
    %3765 = vmatprep.subr.mxu0 0.0
    %3766 = vmatpush1.msra.mxu0 0.0
    %3767 = vmatprep.subr.mxu0 0.0
    %3768 = vmatpush1.msra.mxu0 0.0
    %3769 = vmatprep.subr.mxu0 0.0
    %3770 = vmatpush1.msra.mxu0 0.0
    %3771 = vmatprep.subr.mxu0 0.0
    %3772 = vmatpush1.msra.mxu0 0.0
    %3773 = vmatprep.subr.mxu0 0.0
    %3774 = vmatpush1.msra.mxu0 0.0
    %3775 = vmatprep.mubr.f32.mxu0 0.0
    %3776 = vmatmul.mubr.f32.gmra.mrb[0].mxu0 %v3337
    %v3777 = vpop.f32.mrb[0].mxu0
    %v3778 = vadd.f32 %v2777, %v3777
    %v3779 = vpop.f32.mrb[0].mxu0
    %3780 = vdwg.mxu0
    %3781 = vmatprep.subr.mxu0 0.0
    %3782 = vmatpush1.msra.mxu0 %v2850
    %3783 = vmatprep.subr.mxu0 0.0
    %3784 = vmatpush1.msra.mxu0 %v2851
    %3785 = vmatprep.subr.mxu0 0.0
    %3786 = vmatpush1.msra.mxu0 %v2852
    %3787 = vmatprep.subr.mxu0 0.0
    %3788 = vmatpush1.msra.mxu0 %v2853
    %3789 = vmatprep.subr.mxu0 0.0
    %3790 = vmatpush1.msra.mxu0 %v2854
    %3791 = vmatprep.subr.mxu0 0.0
    %3792 = vmatpush1.msra.mxu0 %v2855
    %3793 = vmatprep.subr.mxu0 0.0
    %3794 = vmatpush1.msra.mxu0 %v2856
    %3795 = vmatprep.subr.mxu0 0.0
    %3796 = vmatpush1.msra.mxu0 %v2857
    %3797 = vmatprep.subr.mxu0 0.0
    %3798 = vmatpush1.msra.mxu0 0.0
    %3799 = vmatprep.subr.mxu0 0.0
    %3800 = vmatpush1.msra.mxu0 0.0
    %3801 = vmatprep.subr.mxu0 0.0
    %3802 = vmatpush1.msra.mxu0 0.0
    %3803 = vmatprep.subr.mxu0 0.0
    %3804 = vmatpush1.msra.mxu0 0.0
    %3805 = vmatprep.subr.mxu0 0.0
    %3806 = vmatpush1.msra.mxu0 0.0
    %3807 = vmatprep.subr.mxu0 0.0
    %3808 = vmatpush1.msra.mxu0 0.0
    %3809 = vmatprep.subr.mxu0 0.0
    %3810 = vmatpush1.msra.mxu0 0.0
    %3811 = vmatprep.subr.mxu0 0.0
    %3812 = vmatpush1.msra.mxu0 0.0
    %3813 = vmatprep.subr.mxu0 0.0
    %3814 = vmatpush1.msra.mxu0 0.0
    %3815 = vmatprep.subr.mxu0 0.0
    %3816 = vmatpush1.msra.mxu0 0.0
    %3817 = vmatprep.subr.mxu0 0.0
    %3818 = vmatpush1.msra.mxu0 0.0
    %3819 = vmatprep.subr.mxu0 0.0
    %3820 = vmatpush1.msra.mxu0 0.0
    %3821 = vmatprep.subr.mxu0 0.0
    %3822 = vmatpush1.msra.mxu0 0.0
    %3823 = vmatprep.subr.mxu0 0.0
    %3824 = vmatpush1.msra.mxu0 0.0
    %3825 = vmatprep.subr.mxu0 0.0
    %3826 = vmatpush1.msra.mxu0 0.0
    %3827 = vmatprep.subr.mxu0 0.0
    %3828 = vmatpush1.msra.mxu0 0.0
    %3829 = vmatprep.subr.mxu0 0.0
    %3830 = vmatpush1.msra.mxu0 0.0
    %3831 = vmatprep.subr.mxu0 0.0
    %3832 = vmatpush1.msra.mxu0 0.0
    %3833 = vmatprep.subr.mxu0 0.0
    %3834 = vmatpush1.msra.mxu0 0.0
    %3835 = vmatprep.subr.mxu0 0.0
    %3836 = vmatpush1.msra.mxu0 0.0
    %3837 = vmatprep.subr.mxu0 0.0
    %3838 = vmatpush1.msra.mxu0 0.0
    %3839 = vmatprep.subr.mxu0 0.0
    %3840 = vmatpush1.msra.mxu0 0.0
    %3841 = vmatprep.subr.mxu0 0.0
    %3842 = vmatpush1.msra.mxu0 0.0
    %3843 = vmatprep.subr.mxu0 0.0
    %3844 = vmatpush1.msra.mxu0 0.0
    %3845 = vmatprep.mubr.f32.mxu0 0.0
    %3846 = vmatmul.mubr.f32.gmra.mrb[0].mxu0 %v3337
    %v3847 = vpop.f32.mrb[0].mxu0
    %v3848 = vadd.f32 %v2864, %v3847
    %v3849 = vpop.f32.mrb[0].mxu0
    %3850 = vdwg.mxu0
    %3851 = vmatprep.subr.mxu0 0.0
    %3852 = vmatpush1.msra.mxu0 %v2937
    %3853 = vmatprep.subr.mxu0 0.0
    %3854 = vmatpush1.msra.mxu0 %v2938
    %3855 = vmatprep.subr.mxu0 0.0
    %3856 = vmatpush1.msra.mxu0 %v2939
    %3857 = vmatprep.subr.mxu0 0.0
    %3858 = vmatpush1.msra.mxu0 %v2940
    %3859 = vmatprep.subr.mxu0 0.0
    %3860 = vmatpush1.msra.mxu0 %v2941
    %3861 = vmatprep.subr.mxu0 0.0
    %3862 = vmatpush1.msra.mxu0 %v2942
    %3863 = vmatprep.subr.mxu0 0.0
    %3864 = vmatpush1.msra.mxu0 %v2943
    %3865 = vmatprep.subr.mxu0 0.0
    %3866 = vmatpush1.msra.mxu0 %v2944
    %3867 = vmatprep.subr.mxu0 0.0
    %3868 = vmatpush1.msra.mxu0 0.0
    %3869 = vmatprep.subr.mxu0 0.0
    %3870 = vmatpush1.msra.mxu0 0.0
    %3871 = vmatprep.subr.mxu0 0.0
    %3872 = vmatpush1.msra.mxu0 0.0
    %3873 = vmatprep.subr.mxu0 0.0
    %3874 = vmatpush1.msra.mxu0 0.0
    %3875 = vmatprep.subr.mxu0 0.0
    %3876 = vmatpush1.msra.mxu0 0.0
    %3877 = vmatprep.subr.mxu0 0.0
    %3878 = vmatpush1.msra.mxu0 0.0
    %3879 = vmatprep.subr.mxu0 0.0
    %3880 = vmatpush1.msra.mxu0 0.0
    %3881 = vmatprep.subr.mxu0 0.0
    %3882 = vmatpush1.msra.mxu0 0.0
    %3883 = vmatprep.subr.mxu0 0.0
    %3884 = vmatpush1.msra.mxu0 0.0
    %3885 = vmatprep.subr.mxu0 0.0
    %3886 = vmatpush1.msra.mxu0 0.0
    %3887 = vmatprep.subr.mxu0 0.0
    %3888 = vmatpush1.msra.mxu0 0.0
    %3889 = vmatprep.subr.mxu0 0.0
    %3890 = vmatpush1.msra.mxu0 0.0
    %3891 = vmatprep.subr.mxu0 0.0
    %3892 = vmatpush1.msra.mxu0 0.0
    %3893 = vmatprep.subr.mxu0 0.0
    %3894 = vmatpush1.msra.mxu0 0.0
    %3895 = vmatprep.subr.mxu0 0.0
    %3896 = vmatpush1.msra.mxu0 0.0
    %3897 = vmatprep.subr.mxu0 0.0
    %3898 = vmatpush1.msra.mxu0 0.0
    %3899 = vmatprep.subr.mxu0 0.0
    %3900 = vmatpush1.msra.mxu0 0.0
    %3901 = vmatprep.subr.mxu0 0.0
    %3902 = vmatpush1.msra.mxu0 0.0
    %3903 = vmatprep.subr.mxu0 0.0
    %3904 = vmatpush1.msra.mxu0 0.0
    %3905 = vmatprep.subr.mxu0 0.0
    %3906 = vmatpush1.msra.mxu0 0.0
    %3907 = vmatprep.subr.mxu0 0.0
    %3908 = vmatpush1.msra.mxu0 0.0
    %3909 = vmatprep.subr.mxu0 0.0
    %3910 = vmatpush1.msra.mxu0 0.0
    %3911 = vmatprep.subr.mxu0 0.0
    %3912 = vmatpush1.msra.mxu0 0.0
    %3913 = vmatprep.subr.mxu0 0.0
    %3914 = vmatpush1.msra.mxu0 0.0
    %3915 = vmatprep.mubr.f32.mxu0 0.0
    %3916 = vmatmul.mubr.f32.gmra.mrb[0].mxu0 %v3337
    %v3917 = vpop.f32.mrb[0].mxu0
    %v3918 = vadd.f32 %v2951, %v3917
    %v3919 = vpop.f32.mrb[0].mxu0
    %3920 = vdwg.mxu0
    %v3922 = vsel %vm383, %v3778, 0
    %v3925 = vsel %vm383, %v3848, 0
    %3927 = vmatprep.subr.mxu0 0.0
    %3928 = vmatpush1.xpose.msra.mxu0 %v3925
    %3929 = vmatprep.subr.mxu0 0.0
    %3930 = vmatpush1.xpose.msra.mxu0 0.0
    %3931 = vmatprep.subr.mxu0 0.0
    %3932 = vmatpush1.xpose.msra.mxu0 0.0
    %3933 = vmatprep.subr.mxu0 0.0
    %3934 = vmatpush1.xpose.msra.mxu0 0.0
    %3935 = vmatprep.subr.mxu0 0.0
    %3936 = vmatpush1.xpose.msra.mxu0 0.0
    %3937 = vmatprep.subr.mxu0 0.0
    %3938 = vmatpush1.xpose.msra.mxu0 0.0
    %3939 = vmatprep.subr.mxu0 0.0
    %3940 = vmatpush1.xpose.msra.mxu0 0.0
    %3941 = vmatprep.subr.mxu0 0.0
    %3942 = vmatpush1.xpose.msra.mxu0 0.0
    %3943 = vmatprep.subr.mxu0 0.0
    %3944 = vmatpush1.xpose.msra.mxu0 0.0
    %3945 = vmatprep.subr.mxu0 0.0
    %3946 = vmatpush1.xpose.msra.mxu0 0.0
    %3947 = vmatprep.subr.mxu0 0.0
    %3948 = vmatpush1.xpose.msra.mxu0 0.0
    %3949 = vmatprep.subr.mxu0 0.0
    %3950 = vmatpush1.xpose.msra.mxu0 0.0
    %3951 = vmatprep.subr.mxu0 0.0
    %3952 = vmatpush1.xpose.msra.mxu0 0.0
    %3953 = vmatprep.subr.mxu0 0.0
    %3954 = vmatpush1.xpose.msra.mxu0 0.0
    %3955 = vmatprep.subr.mxu0 0.0
    %3956 = vmatpush1.xpose.msra.mxu0 0.0
    %3957 = vmatprep.subr.mxu0 0.0
    %3958 = vmatpush1.xpose.msra.mxu0 0.0
    %3959 = vmatprep.subr.mxu0 0.0
    %3960 = vmatpush1.xpose.msra.mxu0 0.0
    %3961 = vmatprep.subr.mxu0 0.0
    %3962 = vmatpush1.xpose.msra.mxu0 0.0
    %3963 = vmatprep.subr.mxu0 0.0
    %3964 = vmatpush1.xpose.msra.mxu0 0.0
    %3965 = vmatprep.subr.mxu0 0.0
    %3966 = vmatpush1.xpose.msra.mxu0 0.0
    %3967 = vmatprep.subr.mxu0 0.0
    %3968 = vmatpush1.xpose.msra.mxu0 0.0
    %3969 = vmatprep.subr.mxu0 0.0
    %3970 = vmatpush1.xpose.msra.mxu0 0.0
    %3971 = vmatprep.subr.mxu0 0.0
    %3972 = vmatpush1.xpose.msra.mxu0 0.0
    %3973 = vmatprep.subr.mxu0 0.0
    %3974 = vmatpush1.xpose.msra.mxu0 0.0
    %3975 = vmatprep.subr.mxu0 0.0
    %3976 = vmatpush1.xpose.msra.mxu0 0.0
    %3977 = vmatprep.subr.mxu0 0.0
    %3978 = vmatpush1.xpose.msra.mxu0 0.0
    %3979 = vmatprep.subr.mxu0 0.0
    %3980 = vmatpush1.xpose.msra.mxu0 0.0
    %3981 = vmatprep.subr.mxu0 0.0
    %3982 = vmatpush1.xpose.msra.mxu0 0.0
    %3983 = vmatprep.subr.mxu0 0.0
    %3984 = vmatpush1.xpose.msra.mxu0 0.0
    %3985 = vmatprep.subr.mxu0 0.0
    %3986 = vmatpush1.xpose.msra.mxu0 0.0
    %3987 = vmatprep.subr.mxu0 0.0
    %3988 = vmatpush1.xpose.msra.mxu0 0.0
    %3989 = vmatprep.subr.mxu0 0.0
    %3990 = vmatpush1.xpose.msra.mxu0 0.0
    %3991 = vmatprep.mubr.f32.mxu0 0.0
    %3992 = vmatmul.mubr.f32.gmra.mrb[0].mxu0 %v3922
    %v3993 = vpop.f32.mrb[0].mxu0
    %v3994 = vadd.f32 0.0, %v3993
    %v3995 = vpop.f32.mrb[0].mxu0
    %3996 = vdwg.mxu0
    %v3997 = vmul.f32 %v3994, 0.17677669
    %v3998 = vadd.f32 %v3997, %v124
    %v3999 = vsel %vm462, %v3998, -inf
    %4000 = vmax.xlane.f32.xlu0 %v3999
    %v4001 = vpop.xlane.xlu0 %4000
    %v4002 = vsub.f32 %v3998, %v4001
    %v4003 = vmul.f32 %v4002, 1.442695
    %v4004 = vpow.pop %v4003
    %v4005 = vsel %vm462, %v4004, 0.0
    %4006 = vadd.xlane.f32.xlu0 %v4005
    %v4007 = vpop.xlane.xlu0 %4006
    %v4008 = vrcp.pop %v4007
    %v4009 = vmul.f32 %v4004, %v4008
    %v4011 = vsel %vm462, %v4009, 0
    %4013 = vmatprep.subr.mxu0 0.0
    %4014 = vmatpush1.msra.mxu0 %v3918
    %4015 = vmatprep.subr.mxu0 0.0
    %4016 = vmatpush1.msra.mxu0 0.0
    %4017 = vmatprep.subr.mxu0 0.0
    %4018 = vmatpush1.msra.mxu0 0.0
    %4019 = vmatprep.subr.mxu0 0.0
    %4020 = vmatpush1.msra.mxu0 0.0
    %4021 = vmatprep.subr.mxu0 0.0
    %4022 = vmatpush1.msra.mxu0 0.0
    %4023 = vmatprep.subr.mxu0 0.0
    %4024 = vmatpush1.msra.mxu0 0.0
    %4025 = vmatprep.subr.mxu0 0.0
    %4026 = vmatpush1.msra.mxu0 0.0
    %4027 = vmatprep.subr.mxu0 0.0
    %4028 = vmatpush1.msra.mxu0 0.0
    %4029 = vmatprep.subr.mxu0 0.0
    %4030 = vmatpush1.msra.mxu0 0.0
    %4031 = vmatprep.subr.mxu0 0.0
    %4032 = vmatpush1.msra.mxu0 0.0
    %4033 = vmatprep.subr.mxu0 0.0
    %4034 = vmatpush1.msra.mxu0 0.0
    %4035 = vmatprep.subr.mxu0 0.0
    %4036 = vmatpush1.msra.mxu0 0.0
    %4037 = vmatprep.subr.mxu0 0.0
    %4038 = vmatpush1.msra.mxu0 0.0
    %4039 = vmatprep.subr.mxu0 0.0
    %4040 = vmatpush1.msra.mxu0 0.0
    %4041 = vmatprep.subr.mxu0 0.0
    %4042 = vmatpush1.msra.mxu0 0.0
    %4043 = vmatprep.subr.mxu0 0.0
    %4044 = vmatpush1.msra.mxu0 0.0
    %4045 = vmatprep.subr.mxu0 0.0
    %4046 = vmatpush1.msra.mxu0 0.0
    %4047 = vmatprep.subr.mxu0 0.0
    %4048 = vmatpush1.msra.mxu0 0.0
    %4049 = vmatprep.subr.mxu0 0.0
    %4050 = vmatpush1.msra.mxu0 0.0
    %4051 = vmatprep.subr.mxu0 0.0
    %4052 = vmatpush1.msra.mxu0 0.0
    %4053 = vmatprep.subr.mxu0 0.0
    %4054 = vmatpush1.msra.mxu0 0.0
    %4055 = vmatprep.subr.mxu0 0.0
    %4056 = vmatpush1.msra.mxu0 0.0
    %4057 = vmatprep.subr.mxu0 0.0
    %4058 = vmatpush1.msra.mxu0 0.0
    %4059 = vmatprep.subr.mxu0 0.0
    %4060 = vmatpush1.msra.mxu0 0.0
    %4061 = vmatprep.subr.mxu0 0.0
    %4062 = vmatpush1.msra.mxu0 0.0
    %4063 = vmatprep.subr.mxu0 0.0
    %4064 = vmatpush1.msra.mxu0 0.0
    %4065 = vmatprep.subr.mxu0 0.0
    %4066 = vmatpush1.msra.mxu0 0.0
    %4067 = vmatprep.subr.mxu0 0.0
    %4068 = vmatpush1.msra.mxu0 0.0
    %4069 = vmatprep.subr.mxu0 0.0
    %4070 = vmatpush1.msra.mxu0 0.0
    %4071 = vmatprep.subr.mxu0 0.0
    %4072 = vmatpush1.msra.mxu0 0.0
    %4073 = vmatprep.subr.mxu0 0.0
    %4074 = vmatpush1.msra.mxu0 0.0
    %4075 = vmatprep.subr.mxu0 0.0
    %4076 = vmatpush1.msra.mxu0 0.0
    %4077 = vmatprep.mubr.f32.mxu0 0.0
    %4078 = vmatmul.mubr.f32.gmra.mrb[0].mxu0 %v4011
    %v4079 = vpop.f32.mrb[0].mxu0
    %v4080 = vadd.f32 0.0, %v4079
    %v4081 = vpop.f32.mrb[0].mxu0
    %4082 = vdwg.mxu0
    %v4084 = vsel %vm383, %v4080, 0
    %4086 = vmatprep.subr.mxu0 0.0
    %4087 = vmatpush1.msra.mxu0 %v3186
    %4088 = vmatprep.subr.mxu0 0.0
    %4089 = vmatpush1.msra.mxu0 %v3187
    %4090 = vmatprep.subr.mxu0 0.0
    %4091 = vmatpush1.msra.mxu0 %v3188
    %4092 = vmatprep.subr.mxu0 0.0
    %4093 = vmatpush1.msra.mxu0 %v3189
    %4094 = vmatprep.subr.mxu0 0.0
    %4095 = vmatpush1.msra.mxu0 0.0
    %4096 = vmatprep.subr.mxu0 0.0
    %4097 = vmatpush1.msra.mxu0 0.0
    %4098 = vmatprep.subr.mxu0 0.0
    %4099 = vmatpush1.msra.mxu0 0.0
    %4100 = vmatprep.subr.mxu0 0.0
    %4101 = vmatpush1.msra.mxu0 0.0
    %4102 = vmatprep.subr.mxu0 0.0
    %4103 = vmatpush1.msra.mxu0 0.0
    %4104 = vmatprep.subr.mxu0 0.0
    %4105 = vmatpush1.msra.mxu0 0.0
    %4106 = vmatprep.subr.mxu0 0.0
    %4107 = vmatpush1.msra.mxu0 0.0
    %4108 = vmatprep.subr.mxu0 0.0
    %4109 = vmatpush1.msra.mxu0 0.0
    %4110 = vmatprep.subr.mxu0 0.0
    %4111 = vmatpush1.msra.mxu0 0.0
    %4112 = vmatprep.subr.mxu0 0.0
    %4113 = vmatpush1.msra.mxu0 0.0
    %4114 = vmatprep.subr.mxu0 0.0
    %4115 = vmatpush1.msra.mxu0 0.0
    %4116 = vmatprep.subr.mxu0 0.0
    %4117 = vmatpush1.msra.mxu0 0.0
    %4118 = vmatprep.subr.mxu0 0.0
    %4119 = vmatpush1.msra.mxu0 0.0
    %4120 = vmatprep.subr.mxu0 0.0
    %4121 = vmatpush1.msra.mxu0 0.0
    %4122 = vmatprep.subr.mxu0 0.0
    %4123 = vmatpush1.msra.mxu0 0.0
    %4124 = vmatprep.subr.mxu0 0.0
    %4125 = vmatpush1.msra.mxu0 0.0
    %4126 = vmatprep.subr.mxu0 0.0
    %4127 = vmatpush1.msra.mxu0 0.0
    %4128 = vmatprep.subr.mxu0 0.0
    %4129 = vmatpush1.msra.mxu0 0.0
    %4130 = vmatprep.subr.mxu0 0.0
    %4131 = vmatpush1.msra.mxu0 0.0
    %4132 = vmatprep.subr.mxu0 0.0
    %4133 = vmatpush1.msra.mxu0 0.0
    %4134 = vmatprep.subr.mxu0 0.0
    %4135 = vmatpush1.msra.mxu0 0.0
    %4136 = vmatprep.subr.mxu0 0.0
    %4137 = vmatpush1.msra.mxu0 0.0
    %4138 = vmatprep.subr.mxu0 0.0
    %4139 = vmatpush1.msra.mxu0 0.0
    %4140 = vmatprep.subr.mxu0 0.0
    %4141 = vmatpush1.msra.mxu0 0.0
    %4142 = vmatprep.subr.mxu0 0.0
    %4143 = vmatpush1.msra.mxu0 0.0
    %4144 = vmatprep.subr.mxu0 0.0
    %4145 = vmatpush1.msra.mxu0 0.0
    %4146 = vmatprep.subr.mxu0 0.0
    %4147 = vmatpush1.msra.mxu0 0.0
    %4148 = vmatprep.subr.mxu0 0.0
    %4149 = vmatpush1.msra.mxu0 0.0
    %4150 = vmatprep.mubr.f32.mxu0 0.0
    %4151 = vmatmul.mubr.f32.gmra.mrb[0].mxu0 %v4084
    %v4152 = vpop.f32.mrb[0].mxu0
    %v4153 = vadd.f32 0.0, %v4152
    %v4154 = vpop.f32.mrb[0].mxu0
    %4155 = vdwg.mxu0
    %v4157 = vsel %vm383, %v3708, 0
    %4159 = vmatprep.subr.mxu0 0.0
    %4160 = vmatpush1.msra.mxu0 %v2758
    %4161 = vmatprep.subr.mxu0 0.0
    %4162 = vmatpush1.msra.mxu0 %v2759
    %4163 = vmatprep.subr.mxu0 0.0
    %4164 = vmatpush1.msra.mxu0 %v2760
    %4165 = vmatprep.subr.mxu0 0.0
    %4166 = vmatpush1.msra.mxu0 %v2761
    %4167 = vmatprep.subr.mxu0 0.0
    %4168 = vmatpush1.msra.mxu0 0.0
    %4169 = vmatprep.subr.mxu0 0.0
    %4170 = vmatpush1.msra.mxu0 0.0
    %4171 = vmatprep.subr.mxu0 0.0
    %4172 = vmatpush1.msra.mxu0 0.0
    %4173 = vmatprep.subr.mxu0 0.0
    %4174 = vmatpush1.msra.mxu0 0.0
    %4175 = vmatprep.subr.mxu0 0.0
    %4176 = vmatpush1.msra.mxu0 0.0
    %4177 = vmatprep.subr.mxu0 0.0
    %4178 = vmatpush1.msra.mxu0 0.0
    %4179 = vmatprep.subr.mxu0 0.0
    %4180 = vmatpush1.msra.mxu0 0.0
    %4181 = vmatprep.subr.mxu0 0.0
    %4182 = vmatpush1.msra.mxu0 0.0
    %4183 = vmatprep.subr.mxu0 0.0
    %4184 = vmatpush1.msra.mxu0 0.0
    %4185 = vmatprep.subr.mxu0 0.0
    %4186 = vmatpush1.msra.mxu0 0.0
    %4187 = vmatprep.subr.mxu0 0.0
    %4188 = vmatpush1.msra.mxu0 0.0
    %4189 = vmatprep.subr.mxu0 0.0
    %4190 = vmatpush1.msra.mxu0 0.0
    %4191 = vmatprep.subr.mxu0 0.0
    %4192 = vmatpush1.msra.mxu0 0.0
    %4193 = vmatprep.subr.mxu0 0.0
    %4194 = vmatpush1.msra.mxu0 0.0
    %4195 = vmatprep.subr.mxu0 0.0
    %4196 = vmatpush1.msra.mxu0 0.0
    %4197 = vmatprep.subr.mxu0 0.0
    %4198 = vmatpush1.msra.mxu0 0.0
    %4199 = vmatprep.subr.mxu0 0.0
    %4200 = vmatpush1.msra.mxu0 0.0
    %4201 = vmatprep.subr.mxu0 0.0
    %4202 = vmatpush1.msra.mxu0 0.0
    %4203 = vmatprep.subr.mxu0 0.0
    %4204 = vmatpush1.msra.mxu0 0.0
    %4205 = vmatprep.subr.mxu0 0.0
    %4206 = vmatpush1.msra.mxu0 0.0
    %4207 = vmatprep.subr.mxu0 0.0
    %4208 = vmatpush1.msra.mxu0 0.0
    %4209 = vmatprep.subr.mxu0 0.0
    %4210 = vmatpush1.msra.mxu0 0.0
    %4211 = vmatprep.subr.mxu0 0.0
    %4212 = vmatpush1.msra.mxu0 0.0
    %4213 = vmatprep.subr.mxu0 0.0
    %4214 = vmatpush1.msra.mxu0 0.0
    %4215 = vmatprep.subr.mxu0 0.0
    %4216 = vmatpush1.msra.mxu0 0.0
    %4217 = vmatprep.subr.mxu0 0.0
    %4218 = vmatpush1.msra.mxu0 0.0
    %4219 = vmatprep.subr.mxu0 0.0
    %4220 = vmatpush1.msra.mxu0 0.0
    %4221 = vmatprep.subr.mxu0 0.0
    %4222 = vmatpush1.msra.mxu0 0.0
    %4223 = vmatprep.mubr.f32.mxu0 0.0
    %4224 = vmatmul.mubr.f32.gmra.mrb[0].mxu0 %v4157
    %v4225 = vpop.f32.mrb[0].mxu0
    %v4226 = vadd.f32 %v4153, %v4225
    %v4227 = vpop.f32.mrb[0].mxu0
    %4228 = vdwg.mxu0
    %s4229 = scalar_lea.vmem %s12, 1
    %v4230 = vld [vmem:[%s4229] sm:$0x1]
    %v4232 = vlaneseq
    %v4233 = vshrl.u32 %v4232, 7
    %v4234 = vsub.s32 0, %v4233
    %v4235 = vrot.slane %v4230, %v4234
    %v4237 = vadd.f32 %v3333, %v4235
    %v4238 = vadd.f32 %v4226, %v4235
    %v4239 = vadd.f32 %v2329, %v4237
    %v4240 = vadd.f32 %v2330, %v4238
    %s4241 = scalar_lea.vmem %s13, 1
    %v4242 = vld [vmem:[%s4241] sm:$0x1]
    %s4243 = scalar_lea.vmem %s14, 1
    %v4244 = vld [vmem:[%s4243] sm:$0x1]
    %v4245 = vsel %vm79, %v4239, 0.0
    %4246 = vadd.xlane.f32.xlu0 %v4245
    %v4247 = vpop.xlane.xlu0 %4246
    %v4248 = vsel %vm79, %v4240, 0.0
    %4249 = vadd.xlane.f32.xlu0 %v4248
    %v4250 = vpop.xlane.xlu0 %4249
    %v4251 = vmul.f32 %v4247, %v86
    %v4252 = vmul.f32 %v4250, %v86
    %v4253 = vsub.f32 %v4239, %v4251
    %v4254 = vsub.f32 %v4240, %v4252
    %v4255 = vmul.f32 %v4253, %v4253
    %v4256 = vmul.f32 %v4254, %v4254
    %v4257 = vsel %vm79, %v4255, 0.0
    %4258 = vadd.xlane.f32.xlu0 %v4257
    %v4259 = vpop.xlane.xlu0 %4258
    %v4260 = vsel %vm79, %v4256, 0.0
    %4261 = vadd.xlane.f32.xlu0 %v4260
    %v4262 = vpop.xlane.xlu0 %4261
    %v4263 = vmul.f32 %v4259, %v86
    %v4264 = vmul.f32 %v4262, %v86
    %v4265 = vadd.f32 %v4263, 1e-12
    %v4266 = vadd.f32 %v4264, 1e-12
    %v4267 = vrsqrt.pop %v4265
    %v4268 = vrsqrt.pop %v4266
    %v4269 = vmul.f32 %v4253, %v4267
    %v4270 = vmul.f32 %v4254, %v4268
    %v4272 = vlaneseq
    %v4273 = vshrl.u32 %v4272, 7
    %v4274 = vsub.s32 0, %v4273
    %v4275 = vrot.slane %v4242, %v4274
    %v4277 = vmul.f32 %v4269, %v4275
    %v4278 = vmul.f32 %v4270, %v4275
    %v4280 = vlaneseq
    %v4281 = vshrl.u32 %v4280, 7
    %v4282 = vsub.s32 0, %v4281
    %v4283 = vrot.slane %v4244, %v4282
    %v4285 = vadd.f32 %v4277, %v4283
    %v4286 = vadd.f32 %v4278, %v4283
    %s4287 = scalar_lea.vmem %s15, 64
    %v4288 = vld [vmem:[%s4287] sm:$0xff]
    %v4289 = vld [vmem:[%s4287 + $0x8] sm:$0xff]
    %v4290 = vld [vmem:[%s4287 + $0x10] sm:$0xff]
    %v4291 = vld [vmem:[%s4287 + $0x18] sm:$0xff]
    %v4292 = vld [vmem:[%s4287 + $0x20] sm:$0xff]
    %v4293 = vld [vmem:[%s4287 + $0x28] sm:$0xff]
    %v4294 = vld [vmem:[%s4287 + $0x30] sm:$0xff]
    %v4295 = vld [vmem:[%s4287 + $0x38] sm:$0xff]
    %s4296 = scalar_lea.vmem %s16, 1
    %v4297 = vld [vmem:[%s4296] sm:$0x1]
    %v4299 = vlaneseq
    %v4300 = vshrl.u32 %v4299, 7
    %v4301 = vsub.s32 0, %v4300
    %v4302 = vrot.slane %v4297, %v4301
    %v4305 = vsel %vm79, %v4285, 0
    %v4308 = vsel %vm79, %v4286, 0
    %4310 = vmatprep.subr.mxu0 0.0
    %4311 = vmatpush1.msra.mxu0 %v4288
    %4312 = vmatprep.subr.mxu0 0.0
    %4313 = vmatpush1.msra.mxu0 %v4289
    %4314 = vmatprep.subr.mxu0 0.0
    %4315 = vmatpush1.msra.mxu0 %v4290
    %4316 = vmatprep.subr.mxu0 0.0
    %4317 = vmatpush1.msra.mxu0 %v4291
    %4318 = vmatprep.subr.mxu0 0.0
    %4319 = vmatpush1.msra.mxu0 %v4292
    %4320 = vmatprep.subr.mxu0 0.0
    %4321 = vmatpush1.msra.mxu0 %v4293
    %4322 = vmatprep.subr.mxu0 0.0
    %4323 = vmatpush1.msra.mxu0 %v4294
    %4324 = vmatprep.subr.mxu0 0.0
    %4325 = vmatpush1.msra.mxu0 %v4295
    %4326 = vmatprep.subr.mxu0 0.0
    %4327 = vmatpush1.msra.mxu0 0.0
    %4328 = vmatprep.subr.mxu0 0.0
    %4329 = vmatpush1.msra.mxu0 0.0
    %4330 = vmatprep.subr.mxu0 0.0
    %4331 = vmatpush1.msra.mxu0 0.0
    %4332 = vmatprep.subr.mxu0 0.0
    %4333 = vmatpush1.msra.mxu0 0.0
    %4334 = vmatprep.subr.mxu0 0.0
    %4335 = vmatpush1.msra.mxu0 0.0
    %4336 = vmatprep.subr.mxu0 0.0
    %4337 = vmatpush1.msra.mxu0 0.0
    %4338 = vmatprep.subr.mxu0 0.0
    %4339 = vmatpush1.msra.mxu0 0.0
    %4340 = vmatprep.subr.mxu0 0.0
    %4341 = vmatpush1.msra.mxu0 0.0
    %4342 = vmatprep.subr.mxu0 0.0
    %4343 = vmatpush1.msra.mxu0 0.0
    %4344 = vmatprep.subr.mxu0 0.0
    %4345 = vmatpush1.msra.mxu0 0.0
    %4346 = vmatprep.subr.mxu0 0.0
    %4347 = vmatpush1.msra.mxu0 0.0
    %4348 = vmatprep.subr.mxu0 0.0
    %4349 = vmatpush1.msra.mxu0 0.0
    %4350 = vmatprep.subr.mxu0 0.0
    %4351 = vmatpush1.msra.mxu0 0.0
    %4352 = vmatprep.subr.mxu0 0.0
    %4353 = vmatpush1.msra.mxu0 0.0
    %4354 = vmatprep.subr.mxu0 0.0
    %4355 = vmatpush1.msra.mxu0 0.0
    %4356 = vmatprep.subr.mxu0 0.0
    %4357 = vmatpush1.msra.mxu0 0.0
    %4358 = vmatprep.subr.mxu0 0.0
    %4359 = vmatpush1.msra.mxu0 0.0
    %4360 = vmatprep.subr.mxu0 0.0
    %4361 = vmatpush1.msra.mxu0 0.0
    %4362 = vmatprep.subr.mxu0 0.0
    %4363 = vmatpush1.msra.mxu0 0.0
    %4364 = vmatprep.subr.mxu0 0.0
    %4365 = vmatpush1.msra.mxu0 0.0
    %4366 = vmatprep.subr.mxu0 0.0
    %4367 = vmatpush1.msra.mxu0 0.0
    %4368 = vmatprep.subr.mxu0 0.0
    %4369 = vmatpush1.msra.mxu0 0.0
    %4370 = vmatprep.subr.mxu0 0.0
    %4371 = vmatpush1.msra.mxu0 0.0
    %4372 = vmatprep.subr.mxu0 0.0
    %4373 = vmatpush1.msra.mxu0 0.0
    %4374 = vmatprep.mubr.f32.mxu0 0.0
    %4375 = vmatmul.mubr.f32.gmra.mrb[0].mxu0 %v4305
    %v4376 = vpop.f32.mrb[0].mxu0
    %v4377 = vadd.f32 %v4302, %v4376
    %v4378 = vpop.f32.mrb[0].mxu0
    %4379 = vmatprep.mubr.f32.mxu0 0.0
    %4380 = vmatmul.mubr.f32.gmra.mrb[0].mxu0 %v4308
    %v4381 = vpop.f32.mrb[0].mxu0
    %v4382 = vadd.f32 %v4302, %v4381
    %v4383 = vpop.f32.mrb[0].mxu0
    %4384 = vdwg.mxu0
    %v4385 = vmul.f32 %v4377, 0.5
    %v4386 = vmul.f32 %v4382, 0.5
    %v4387 = vmul.f32 %v4377, 0.044715
    %v4388 = vmul.f32 %v4382, 0.044715
    %v4389 = vmul.f32 %v4387, %v4377
    %v4390 = vmul.f32 %v4388, %v4382
    %v4391 = vmul.f32 %v4389, %v4377
    %v4392 = vmul.f32 %v4390, %v4382
    %v4393 = vadd.f32 %v4377, %v4391
    %v4394 = vadd.f32 %v4382, %v4392
    %v4395 = vmul.f32 %v4393, 0.7978846
    %v4396 = vmul.f32 %v4394, 0.7978846
    %v4397 = vtanh.pop %v4395
    %v4398 = vtanh.pop %v4396
    %v4399 = vadd.f32 %v4397, 1.0
    %v4400 = vadd.f32 %v4398, 1.0
    %v4401 = vmul.f32 %v4385, %v4399
    %v4402 = vmul.f32 %v4386, %v4400
    %s4403 = scalar_lea.vmem %s17, 128
    %v4404 = vld [vmem:[%s4403] sm:$0xff]
    %v4405 = vld [vmem:[%s4403 + $0x8] sm:$0xff]
    %v4406 = vld [vmem:[%s4403 + $0x10] sm:$0xff]
    %v4407 = vld [vmem:[%s4403 + $0x18] sm:$0xff]
    %v4408 = vld [vmem:[%s4403 + $0x20] sm:$0xff]
    %v4409 = vld [vmem:[%s4403 + $0x28] sm:$0xff]
    %v4410 = vld [vmem:[%s4403 + $0x30] sm:$0xff]
    %v4411 = vld [vmem:[%s4403 + $0x38] sm:$0xff]
    %v4412 = vld [vmem:[%s4403 + $0x40] sm:$0xff]
    %v4413 = vld [vmem:[%s4403 + $0x48] sm:$0xff]
    %v4414 = vld [vmem:[%s4403 + $0x50] sm:$0xff]
    %v4415 = vld [vmem:[%s4403 + $0x58] sm:$0xff]
    %v4416 = vld [vmem:[%s4403 + $0x60] sm:$0xff]
    %v4417 = vld [vmem:[%s4403 + $0x68] sm:$0xff]
    %v4418 = vld [vmem:[%s4403 + $0x70] sm:$0xff]
    %v4419 = vld [vmem:[%s4403 + $0x78] sm:$0xff]
    %s4420 = scalar_lea.vmem %s18, 1
    %v4421 = vld [vmem:[%s4420] sm:$0x1]
    %v4423 = vlaneseq
    %v4424 = vshrl.u32 %v4423, 7
    %v4425 = vsub.s32 0, %v4424
    %v4426 = vrot.slane %v4421, %v4425
    %4428 = vmatprep.subr.mxu0 0.0
    %4429 = vmatpush1.msra.mxu0 %v4404
    %4430 = vmatprep.subr.mxu0 0.0
    %4431 = vmatpush1.msra.mxu0 %v4405
    %4432 = vmatprep.subr.mxu0 0.0
    %4433 = vmatpush1.msra.mxu0 %v4406
    %4434 = vmatprep.subr.mxu0 0.0
    %4435 = vmatpush1.msra.mxu0 %v4407
    %4436 = vmatprep.subr.mxu0 0.0
    %4437 = vmatpush1.msra.mxu0 %v4408
    %4438 = vmatprep.subr.mxu0 0.0
    %4439 = vmatpush1.msra.mxu0 %v4409
    %4440 = vmatprep.subr.mxu0 0.0
    %4441 = vmatpush1.msra.mxu0 %v4410
    %4442 = vmatprep.subr.mxu0 0.0
    %4443 = vmatpush1.msra.mxu0 %v4411
    %4444 = vmatprep.subr.mxu0 0.0
    %4445 = vmatpush1.msra.mxu0 %v4412
    %4446 = vmatprep.subr.mxu0 0.0
    %4447 = vmatpush1.msra.mxu0 %v4413
    %4448 = vmatprep.subr.mxu0 0.0
    %4449 = vmatpush1.msra.mxu0 %v4414
    %4450 = vmatprep.subr.mxu0 0.0
    %4451 = vmatpush1.msra.mxu0 %v4415
    %4452 = vmatprep.subr.mxu0 0.0
    %4453 = vmatpush1.msra.mxu0 %v4416
    %4454 = vmatprep.subr.mxu0 0.0
    %4455 = vmatpush1.msra.mxu0 %v4417
    %4456 = vmatprep.subr.mxu0 0.0
    %4457 = vmatpush1.msra.mxu0 %v4418
    %4458 = vmatprep.subr.mxu0 0.0
    %4459 = vmatpush1.msra.mxu0 %v4419
    %4460 = vmatprep.subr.mxu0 0.0
    %4461 = vmatpush1.msra.mxu0 0.0
    %4462 = vmatprep.subr.mxu0 0.0
    %4463 = vmatpush1.msra.mxu0 0.0
    %4464 = vmatprep.subr.mxu0 0.0
    %4465 = vmatpush1.msra.mxu0 0.0
    %4466 = vmatprep.subr.mxu0 0.0
    %4467 = vmatpush1.msra.mxu0 0.0
    %4468 = vmatprep.subr.mxu0 0.0
    %4469 = vmatpush1.msra.mxu0 0.0
    %4470 = vmatprep.subr.mxu0 0.0
    %4471 = vmatpush1.msra.mxu0 0.0
    %4472 = vmatprep.subr.mxu0 0.0
    %4473 = vmatpush1.msra.mxu0 0.0
    %4474 = vmatprep.subr.mxu0 0.0
    %4475 = vmatpush1.msra.mxu0 0.0
    %4476 = vmatprep.subr.mxu0 0.0
    %4477 = vmatpush1.msra.mxu0 0.0
    %4478 = vmatprep.subr.mxu0 0.0
    %4479 = vmatpush1.msra.mxu0 0.0
    %4480 = vmatprep.subr.mxu0 0.0
    %4481 = vmatpush1.msra.mxu0 0.0
    %4482 = vmatprep.subr.mxu0 0.0
    %4483 = vmatpush1.msra.mxu0 0.0
    %4484 = vmatprep.subr.mxu0 0.0
    %4485 = vmatpush1.msra.mxu0 0.0
    %4486 = vmatprep.subr.mxu0 0.0
    %4487 = vmatpush1.msra.mxu0 0.0
    %4488 = vmatprep.subr.mxu0 0.0
    %4489 = vmatpush1.msra.mxu0 0.0
    %4490 = vmatprep.subr.mxu0 0.0
    %4491 = vmatpush1.msra.mxu0 0.0
    %4492 = vmatprep.mubr.f32.mxu0 0.0
    %4493 = vmatmul.mubr.f32.gmra.mrb[0].mxu0 %v4401
    %v4494 = vpop.f32.mrb[0].mxu0
    %v4495 = vadd.f32 %v4426, %v4494
    %v4496 = vpop.f32.mrb[0].mxu0
    %4497 = vmatprep.mubr.f32.mxu0 0.0
    %4498 = vmatmul.mubr.f32.gmra.mrb[0].mxu0 %v4402
    %v4499 = vpop.f32.mrb[0].mxu0
    %v4500 = vadd.f32 %v4426, %v4499
    %v4501 = vpop.f32.mrb[0].mxu0
    %4502 = vdwg.mxu0
    %v4503 = vadd.f32 %v4285, %v4495
    %v4504 = vadd.f32 %v4286, %v4500
    %s4505 = scalar_lea.vmem %s19, 1
    %v4506 = vld [vmem:[%s4505] sm:$0x1]
    %s4507 = scalar_lea.vmem %s20, 1
    %v4508 = vld [vmem:[%s4507] sm:$0x1]
    %v4509 = vsel %vm79, %v4503, 0.0
    %4510 = vadd.xlane.f32.xlu0 %v4509
    %v4511 = vpop.xlane.xlu0 %4510
    %v4512 = vsel %vm79, %v4504, 0.0
    %4513 = vadd.xlane.f32.xlu0 %v4512
    %v4514 = vpop.xlane.xlu0 %4513
    %v4515 = vmul.f32 %v4511, %v86
    %v4516 = vmul.f32 %v4514, %v86
    %v4517 = vsub.f32 %v4503, %v4515
    %v4518 = vsub.f32 %v4504, %v4516
    %v4519 = vmul.f32 %v4517, %v4517
    %v4520 = vmul.f32 %v4518, %v4518
    %v4521 = vsel %vm79, %v4519, 0.0
    %4522 = vadd.xlane.f32.xlu0 %v4521
    %v4523 = vpop.xlane.xlu0 %4522
    %v4524 = vsel %vm79, %v4520, 0.0
    %4525 = vadd.xlane.f32.xlu0 %v4524
    %v4526 = vpop.xlane.xlu0 %4525
    %v4527 = vmul.f32 %v4523, %v86
    %v4528 = vmul.f32 %v4526, %v86
    %v4529 = vadd.f32 %v4527, 1e-12
    %v4530 = vadd.f32 %v4528, 1e-12
    %v4531 = vrsqrt.pop %v4529
    %v4532 = vrsqrt.pop %v4530
    %v4533 = vmul.f32 %v4517, %v4531
    %v4534 = vmul.f32 %v4518, %v4532
    %v4536 = vlaneseq
    %v4537 = vshrl.u32 %v4536, 7
    %v4538 = vsub.s32 0, %v4537
    %v4539 = vrot.slane %v4506, %v4538
    %v4541 = vmul.f32 %v4533, %v4539
    %v4542 = vmul.f32 %v4534, %v4539
    %v4544 = vlaneseq
    %v4545 = vshrl.u32 %v4544, 7
    %v4546 = vsub.s32 0, %v4545
    %v4547 = vrot.slane %v4508, %v4546
    %v4549 = vadd.f32 %v4541, %v4547
    %v4550 = vadd.f32 %v4542, %v4547
    %v4551 = vld [vmem:[%s2] sm:$0x3]
    %vm4552 = vcmask 130048
    %v4554 = vsel %vm4552, %v4551, 0
    %4556 = vmatprep.subr.mxu0 0.0
    %4557 = vmatpush1.msra.mxu0 %v4549
    %4558 = vmatprep.subr.mxu0 0.0
    %4559 = vmatpush1.msra.mxu0 %v4550
    %4560 = vmatprep.subr.mxu0 0.0
    %4561 = vmatpush1.msra.mxu0 0.0
    %4562 = vmatprep.subr.mxu0 0.0
    %4563 = vmatpush1.msra.mxu0 0.0
    %4564 = vmatprep.subr.mxu0 0.0
    %4565 = vmatpush1.msra.mxu0 0.0
    %4566 = vmatprep.subr.mxu0 0.0
    %4567 = vmatpush1.msra.mxu0 0.0
    %4568 = vmatprep.subr.mxu0 0.0
    %4569 = vmatpush1.msra.mxu0 0.0
    %4570 = vmatprep.subr.mxu0 0.0
    %4571 = vmatpush1.msra.mxu0 0.0
    %4572 = vmatprep.subr.mxu0 0.0
    %4573 = vmatpush1.msra.mxu0 0.0
    %4574 = vmatprep.subr.mxu0 0.0
    %4575 = vmatpush1.msra.mxu0 0.0
    %4576 = vmatprep.subr.mxu0 0.0
    %4577 = vmatpush1.msra.mxu0 0.0
    %4578 = vmatprep.subr.mxu0 0.0
    %4579 = vmatpush1.msra.mxu0 0.0
    %4580 = vmatprep.subr.mxu0 0.0
    %4581 = vmatpush1.msra.mxu0 0.0
    %4582 = vmatprep.subr.mxu0 0.0
    %4583 = vmatpush1.msra.mxu0 0.0
    %4584 = vmatprep.subr.mxu0 0.0
    %4585 = vmatpush1.msra.mxu0 0.0
    %4586 = vmatprep.subr.mxu0 0.0
    %4587 = vmatpush1.msra.mxu0 0.0
    %4588 = vmatprep.subr.mxu0 0.0
    %4589 = vmatpush1.msra.mxu0 0.0
    %4590 = vmatprep.subr.mxu0 0.0
    %4591 = vmatpush1.msra.mxu0 0.0
    %4592 = vmatprep.subr.mxu0 0.0
    %4593 = vmatpush1.msra.mxu0 0.0
    %4594 = vmatprep.subr.mxu0 0.0
    %4595 = vmatpush1.msra.mxu0 0.0
    %4596 = vmatprep.subr.mxu0 0.0
    %4597 = vmatpush1.msra.mxu0 0.0
    %4598 = vmatprep.subr.mxu0 0.0
    %4599 = vmatpush1.msra.mxu0 0.0
    %4600 = vmatprep.subr.mxu0 0.0
    %4601 = vmatpush1.msra.mxu0 0.0
    %4602 = vmatprep.subr.mxu0 0.0
    %4603 = vmatpush1.msra.mxu0 0.0
    %4604 = vmatprep.subr.mxu0 0.0
    %4605 = vmatpush1.msra.mxu0 0.0
    %4606 = vmatprep.subr.mxu0 0.0
    %4607 = vmatpush1.msra.mxu0 0.0
    %4608 = vmatprep.subr.mxu0 0.0
    %4609 = vmatpush1.msra.mxu0 0.0
    %4610 = vmatprep.subr.mxu0 0.0
    %4611 = vmatpush1.msra.mxu0 0.0
    %4612 = vmatprep.subr.mxu0 0.0
    %4613 = vmatpush1.msra.mxu0 0.0
    %4614 = vmatprep.subr.mxu0 0.0
    %4615 = vmatpush1.msra.mxu0 0.0
    %4616 = vmatprep.subr.mxu0 0.0
    %4617 = vmatpush1.msra.mxu0 0.0
    %4618 = vmatprep.subr.mxu0 0.0
    %4619 = vmatpush1.msra.mxu0 0.0
    %4620 = vmatprep.mubr.f32.mxu0 0.0
    %4621 = vmatmul.mubr.f32.gmra.mrb[0].mxu0 %v4554
    %v4622 = vpop.f32.mrb[0].mxu0
    %v4623 = vadd.f32 0.0, %v4622
    %v4624 = vpop.f32.mrb[0].mxu0
    %4625 = vdwg.mxu0
    %v4626 = vld [vmem:[%s21] sm:$0xff]
    %v4627 = vld [vmem:[%s21 + $0x8] sm:$0xff]
    %v4628 = vld [vmem:[%s21 + $0x10] sm:$0xff]
    %v4629 = vld [vmem:[%s21 + $0x18] sm:$0xff]
    %v4630 = vld [vmem:[%s21 + $0x20] sm:$0xff]
    %v4631 = vld [vmem:[%s21 + $0x28] sm:$0xff]
    %v4632 = vld [vmem:[%s21 + $0x30] sm:$0xff]
    %v4633 = vld [vmem:[%s21 + $0x38] sm:$0xff]
    %v4634 = vld [vmem:[%s22] sm:$0x1]
    %v4636 = vlaneseq
    %v4637 = vshrl.u32 %v4636, 7
    %v4638 = vsub.s32 0, %v4637
    %v4639 = vrot.slane %v4634, %v4638
    %v4642 = vsel %vm79, %v4623, 0
    %4644 = vmatprep.subr.mxu0 0.0
    %4645 = vmatpush1.msra.mxu0 %v4626
    %4646 = vmatprep.subr.mxu0 0.0
    %4647 = vmatpush1.msra.mxu0 %v4627
    %4648 = vmatprep.subr.mxu0 0.0
    %4649 = vmatpush1.msra.mxu0 %v4628
    %4650 = vmatprep.subr.mxu0 0.0
    %4651 = vmatpush1.msra.mxu0 %v4629
    %4652 = vmatprep.subr.mxu0 0.0
    %4653 = vmatpush1.msra.mxu0 %v4630
    %4654 = vmatprep.subr.mxu0 0.0
    %4655 = vmatpush1.msra.mxu0 %v4631
    %4656 = vmatprep.subr.mxu0 0.0
    %4657 = vmatpush1.msra.mxu0 %v4632
    %4658 = vmatprep.subr.mxu0 0.0
    %4659 = vmatpush1.msra.mxu0 %v4633
    %4660 = vmatprep.subr.mxu0 0.0
    %4661 = vmatpush1.msra.mxu0 0.0
    %4662 = vmatprep.subr.mxu0 0.0
    %4663 = vmatpush1.msra.mxu0 0.0
    %4664 = vmatprep.subr.mxu0 0.0
    %4665 = vmatpush1.msra.mxu0 0.0
    %4666 = vmatprep.subr.mxu0 0.0
    %4667 = vmatpush1.msra.mxu0 0.0
    %4668 = vmatprep.subr.mxu0 0.0
    %4669 = vmatpush1.msra.mxu0 0.0
    %4670 = vmatprep.subr.mxu0 0.0
    %4671 = vmatpush1.msra.mxu0 0.0
    %4672 = vmatprep.subr.mxu0 0.0
    %4673 = vmatpush1.msra.mxu0 0.0
    %4674 = vmatprep.subr.mxu0 0.0
    %4675 = vmatpush1.msra.mxu0 0.0
    %4676 = vmatprep.subr.mxu0 0.0
    %4677 = vmatpush1.msra.mxu0 0.0
    %4678 = vmatprep.subr.mxu0 0.0
    %4679 = vmatpush1.msra.mxu0 0.0
    %4680 = vmatprep.subr.mxu0 0.0
    %4681 = vmatpush1.msra.mxu0 0.0
    %4682 = vmatprep.subr.mxu0 0.0
    %4683 = vmatpush1.msra.mxu0 0.0
    %4684 = vmatprep.subr.mxu0 0.0
    %4685 = vmatpush1.msra.mxu0 0.0
    %4686 = vmatprep.subr.mxu0 0.0
    %4687 = vmatpush1.msra.mxu0 0.0
    %4688 = vmatprep.subr.mxu0 0.0
    %4689 = vmatpush1.msra.mxu0 0.0
    %4690 = vmatprep.subr.mxu0 0.0
    %4691 = vmatpush1.msra.mxu0 0.0
    %4692 = vmatprep.subr.mxu0 0.0
    %4693 = vmatpush1.msra.mxu0 0.0
    %4694 = vmatprep.subr.mxu0 0.0
    %4695 = vmatpush1.msra.mxu0 0.0
    %4696 = vmatprep.subr.mxu0 0.0
    %4697 = vmatpush1.msra.mxu0 0.0
    %4698 = vmatprep.subr.mxu0 0.0
    %4699 = vmatpush1.msra.mxu0 0.0
    %4700 = vmatprep.subr.mxu0 0.0
    %4701 = vmatpush1.msra.mxu0 0.0
    %4702 = vmatprep.subr.mxu0 0.0
    %4703 = vmatpush1.msra.mxu0 0.0
    %4704 = vmatprep.subr.mxu0 0.0
    %4705 = vmatpush1.msra.mxu0 0.0
    %4706 = vmatprep.subr.mxu0 0.0
    %4707 = vmatpush1.msra.mxu0 0.0
    %4708 = vmatprep.mubr.f32.mxu0 0.0
    %4709 = vmatmul.mubr.f32.gmra.mrb[0].mxu0 %v4642
    %v4710 = vpop.f32.mrb[0].mxu0
    %v4711 = vadd.f32 %v4639, %v4710
    %v4712 = vpop.f32.mrb[0].mxu0
    %4713 = vdwg.mxu0
    %4714 = vst [vmem:[#allocation2] sm:$0x3] %v4711
    // Predicated region
    $region94: #{intent_classifier.1} parent=1 // pred_check
      _
    $region95: #{intent_classifier.1} parent=1 // pred_check_branch
      %4716 = sbr.rel (0) target = $region97
    $region96: #{intent_classifier.1} parent=1 // pred_region
      %s4718 = ssub.s32 32, 32
      %4719 = vsyncadd [#allocation3], %s4718
      %s4721 = sshll.u32 [#allocation2], 4
      %s4722 = int_to_ptr.vmem [resolvable:$true] %s4721
      %4724 = dma.vmem_to_hbm [thread:$0]  %s4722, 32, %s23, [#allocation3]
    $region97: #{intent_classifier.1} parent=1 // pred_fallthru
      _
    // Predicated region
    $region98: #{intent_classifier.1} parent=1 // pred_check
      _
    $region99: #{intent_classifier.1} parent=1 // pred_check_branch
      %4726 = sbr.rel (0) target = $region101
    $region100: #{intent_classifier.1} parent=1 // pred_region
      %4727 = dma.done [#allocation3], 32
    $region101: #{intent_classifier.1} parent=1 // pred_fallthru
      _
    %4728 = vsyncpa [#allocation3], 1

</llo_original>
